<compile_context>
chip_gen: v6e
topology: v6e:2x2x1
jax: 0.10.0
libtpu: 0.0.40
codegen_flags: <defaults>
</compile_context>

<pallas_src>
import jax
import jax.numpy as jnp
from jax.experimental import pallas as pl
from jax.experimental.pallas import tpu as pltpu

LANE = 128      # feature dims are padded to lane multiples
NEG = -1e30     # bias of padded output lanes -> exp() underflows to exactly 0


def _round_up(x, m):
    return ((x + m - 1) // m) * m


def _sigmoid(x):
    # sigmoid(x) == 0.5 * tanh(0.5 * x) + 0.5  (one EUP op instead of exp+recip)
    return 0.5 * jnp.tanh(0.5 * x) + 0.5


def _pick_tile_t(T, B, max_steps=32, max_rows=256):
    """Largest tile_t | T with tile_t*B a sublane (8) multiple, VMEM/vreg bounded."""
    best = None
    for tt in range(1, T + 1):
        if T % tt or tt > max_steps or tt * B > max_rows:
            continue
        if (tt * B) % 8 == 0 or tt == T:     # full-extent block also satisfies (8,128)
            best = tt
    return best if best is not None else T   # fallback: single full-extent chunk


def make_decoder_kernel(num_layers, batch, hidden_pad, tile_t):
    B, H = batch, hidden_pad

    def kernel(*refs):
        nw = 3 * num_layers
        x_ref, h0_ref, c0_ref = refs[0], refs[1], refs[2]
        w_refs = refs[3:3 + nw]                         # [wx, wh, b] per layer
        wfc_ref, bfc_ref = refs[3 + nw], refs[4 + nw]
        out_ref, hn_ref, cn_ref = refs[5 + nw], refs[6 + nw], refs[7 + nw]
        gx_ref, seq_ref = refs[8 + nw], refs[9 + nw]    # VMEM scratch

        # LSTM state is carried in the grid-resident hn/cn output blocks
        # (constant index_map): initialized once, persists across chunks.
        @pl.when(pl.program_id(0) == 0)
        def _():
            hn_ref[...] = h0_ref[...]
            cn_ref[...] = c0_ref[...]

        for l in range(num_layers):
            wx = w_refs[3 * l][...]                     # (in_pad, 4H)
            wh = w_refs[3 * l + 1][...]                 # (H, 4H)
            bb = w_refs[3 * l + 2][...]                 # (1, 4H)

            # Batched per-chunk input projection: one tall MXU matmul; removes
            # the x-half of the FLOPs from the serial per-step chain.
            inp = x_ref[...] if l == 0 else seq_ref[...]
            gx_ref[...] = jnp.dot(inp.astype(wx.dtype), wx,
                                  preferred_element_type=jnp.float32) + bb

            # h/c stay in vregs for the whole chunk (no per-step ref round-trips).
            h = hn_ref[l]                               # (B, H)
            c = cn_ref[l]
            # Fully unrolled time loop (static offsets).  For much larger
            # tile_t, switch to lax.fori_loop with partial unroll if the
            # bundle dump shows vreg spills.
            for t in range(tile_t):
                g = gx_ref[pl.ds(t * B, B), :] + jnp.dot(
                    h.astype(wh.dtype), wh, preferred_element_type=jnp.float32)
                # PyTorch gate order i, f, g, o; slices are 128-lane aligned
                # because each gate block is padded to H_pad.
                i_g = _sigmoid(g[:, 0:H])
                f_g = _sigmoid(g[:, H:2 * H])
                g_g = jnp.tanh(g[:, 2 * H:3 * H])
                o_g = _sigmoid(g[:, 3 * H:4 * H])
                c = f_g * c + i_g * g_g
                h = o_g * jnp.tanh(c)
                # Store of h_t is off the recurrence critical path (the next
                # step depends only on the vreg copies of h/c).
                seq_ref[pl.ds(t * B, B), :] = h
            hn_ref[l] = h                               # one state write per chunk
            cn_ref[l] = c

        # FC + log_softmax batched over the whole chunk: one tall MXU matmul
        # and one lane-dense (tile_t*B, O_pad) store per grid iteration.
        logits = jnp.dot(seq_ref[...].astype(wfc_ref.dtype), wfc_ref[...],
                         preferred_element_type=jnp.float32) + bfc_ref[...]
        m = jnp.max(logits, axis=-1, keepdims=True)
        lse = m + jnp.log(jnp.sum(jnp.exp(logits - m), axis=-1, keepdims=True))
        out_ref[...] = logits - lse

    return kernel


def decoder_forward(inp, h0, c0, layer_params, wfc, bfc,
                    matmul_dtype=jnp.bfloat16, tile_t=None):
    """inp: (B, T, I) batch_first.  h0/c0: (L, B, H).  Returns (out, (hn, cn))."""
    B, T, I = inp.shape
    L, _, H = h0.shape
    O = wfc.shape[1]

    I_pad = _round_up(I, LANE)
    H_pad = _round_up(H, LANE)
    O_pad = _round_up(O, LANE)

    if tile_t is None:
        tile_t = _pick_tile_t(T, B)
    assert T % tile_t == 0
    # (8,128) rule for the chunked x/out blocks: sublane multiple or full extent.
    assert (tile_t * B) % 8 == 0 or tile_t == T

    # --- pack / pad weights (split W_x / W_h; per-gate lane-aligned padding) --
    packed = []
    for l, (wih, whh, b) in enumerate(layer_params):
        in_l = wih.shape[0]
        in_pad = I_pad if l == 0 else H_pad
        wx = jnp.zeros((in_pad, 4 * H_pad), jnp.float32)
        wh = jnp.zeros((H_pad, 4 * H_pad), jnp.float32)
        bb = jnp.zeros((1, 4 * H_pad), jnp.float32)
        for g in range(4):
            wx = wx.at[:in_l, g * H_pad:g * H_pad + H].set(wih[:, g * H:(g + 1) * H])
            wh = wh.at[:H, g * H_pad:g * H_pad + H].set(whh[:, g * H:(g + 1) * H])
            bb = bb.at[:, g * H_pad:g * H_pad + H].set(b[:, g * H:(g + 1) * H])
        packed.append((wx.astype(matmul_dtype), wh.astype(matmul_dtype), bb))

    wfc_p = jnp.zeros((H_pad, O_pad), jnp.float32).at[:H, :O].set(wfc)
    wfc_p = wfc_p.astype(matmul_dtype)
    bfc_p = jnp.full((1, O_pad), NEG, jnp.float32).at[:, :O].set(bfc)

    # --- activations: time-major flat (T*B, F), sublane-dense ----------------
    x_flat = jnp.transpose(inp, (1, 0, 2)).reshape(T * B, I)
    x_flat = jnp.pad(x_flat, ((0, 0), (0, I_pad - I)))
    h0_p = jnp.pad(h0, ((0, 0), (0, 0), (0, H_pad - H)))
    c0_p = jnp.pad(c0, ((0, 0), (0, 0), (0, H_pad - H)))

    rows = tile_t * B
    flat_w = []
    in_specs = [
        pl.BlockSpec((rows, I_pad), lambda g: (g, 0)),       # x chunk (dense DMA)
        pl.BlockSpec((L, B, H_pad), lambda g: (0, 0, 0)),    # h0 (resident)
        pl.BlockSpec((L, B, H_pad), lambda g: (0, 0, 0)),    # c0 (resident)
    ]
    for (wx, wh, bb) in packed:
        flat_w += [wx, wh, bb]
        in_specs += [pl.BlockSpec(wx.shape, lambda g: (0, 0)),
                     pl.BlockSpec(wh.shape, lambda g: (0, 0)),
                     pl.BlockSpec(bb.shape, lambda g: (0, 0))]
    flat_w += [wfc_p, bfc_p]
    in_specs += [pl.BlockSpec(wfc_p.shape, lambda g: (0, 0)),
                 pl.BlockSpec(bfc_p.shape, lambda g: (0, 0))]

    out_specs = (
        pl.BlockSpec((rows, O_pad), lambda g: (g, 0)),        # log-probs chunk
        pl.BlockSpec((L, B, H_pad), lambda g: (0, 0, 0)),     # hn (state carry)
        pl.BlockSpec((L, B, H_pad), lambda g: (0, 0, 0)),     # cn (state carry)
    )
    out_shape = (
        jax.ShapeDtypeStruct((T * B, O_pad), jnp.float32),
        jax.ShapeDtypeStruct((L, B, H_pad), jnp.float32),
        jax.ShapeDtypeStruct((L, B, H_pad), jnp.float32),
    )

    kernel = make_decoder_kernel(L, B, H_pad, tile_t)
    out_flat, hn_p, cn_p = pl.pallas_call(
        kernel,
        out_shape=out_shape,
        grid_spec=pltpu.PrefetchScalarGridSpec(
            num_scalar_prefetch=0,
            grid=(T // tile_t,),
            in_specs=in_specs,
            out_specs=out_specs,
            scratch_shapes=[
                pltpu.VMEM((rows, 4 * H_pad), jnp.float32),   # batched x-projection
                pltpu.VMEM((rows, H_pad), jnp.float32),       # layer output sequence
            ],
        ),
        compiler_params=pltpu.CompilerParams(
            dimension_semantics=("arbitrary",)),   # sequential time recurrence
    )(x_flat, h0_p, c0_p, *flat_w)

    out = out_flat.reshape(T, B, O_pad)[:, :, :O]
    out = jnp.transpose(out, (1, 0, 2))            # back to (B, T, O)
    return out, (hn_p[:, :, :H], cn_p[:, :, :H])


def ref_decoder(inp, h0, c0, layer_params, wfc, bfc):
    """Pure-JAX reference mirroring torch.nn.LSTM + Linear + log_softmax."""
    B, T, _ = inp.shape
    L, _, H = h0.shape
    hp = jax.lax.Precision.HIGHEST
    h = [h0[l] for l in range(L)]
    c = [c0[l] for l in range(L)]
    outs = []
    for t in range(T):
        x = inp[:, t, :]
        for l, (wih, whh, b) in enumerate(layer_params):
            gates = (jnp.dot(x, wih, precision=hp)
                     + jnp.dot(h[l], whh, precision=hp) + b)
            i_g = jax.nn.sigmoid(gates[:, :H])
            f_g = jax.nn.sigmoid(gates[:, H:2 * H])
            g_g = jnp.tanh(gates[:, 2 * H:3 * H])
            o_g = jax.nn.sigmoid(gates[:, 3 * H:])
            c[l] = f_g * c[l] + i_g * g_g
            h[l] = o_g * jnp.tanh(c[l])
            x = h[l]
        logits = jnp.dot(x, wfc, precision=hp) + bfc
        outs.append(jax.nn.log_softmax(logits, axis=-1))
    return jnp.stack(outs, axis=1), jnp.stack(h), jnp.stack(c)


if __name__ == "__main__":
    # Small shapes consistent with the module's forward.
    B, T = 2, 8
    input_size, hidden_size, output_size, num_layers = 32, 32, 16, 2

    key = jax.random.PRNGKey(0)
    keys = jax.random.split(key, 4 * num_layers + 8)
    k_iter = iter(keys)
    scale = hidden_size ** -0.5

    # LSTM params per layer (stored pre-transposed, biases merged: b_ih + b_hh).
    layer_params = []
    for l in range(num_layers):
        in_l = input_size if l == 0 else hidden_size
        wih = jax.random.uniform(next(k_iter), (in_l, 4 * hidden_size),
                                 jnp.float32, -scale, scale)
        whh = jax.random.uniform(next(k_iter), (hidden_size, 4 * hidden_size),
                                 jnp.float32, -scale, scale)
        b = (jax.random.uniform(next(k_iter), (1, 4 * hidden_size),
                                jnp.float32, -scale, scale)
             + jax.random.uniform(next(k_iter), (1, 4 * hidden_size),
                                  jnp.float32, -scale, scale))
        layer_params.append((wih, whh, b))

    wfc = jax.random.uniform(next(k_iter), (hidden_size, output_size),
                             jnp.float32, -scale, scale)
    bfc = jax.random.uniform(next(k_iter), (1, output_size),
                             jnp.float32, -scale, scale)

    inp = jax.random.normal(next(k_iter), (B, T, input_size), jnp.float32)
    h0 = jax.random.normal(next(k_iter), (num_layers, B, hidden_size),
                           jnp.float32)
    c0 = jax.random.normal(next(k_iter), (num_layers, B, hidden_size),
                           jnp.float32)

    out_r, hn_r, cn_r = ref_decoder(inp, h0, c0, layer_params, wfc, bfc)

    # f32 matmuls: tight check against the f32 reference (single chunk,
    # tile_t = T = 8 picked automatically, grid = (1,)).
    out, (hn, cn) = decoder_forward(inp, h0, c0, layer_params, wfc, bfc,
                                    matmul_dtype=jnp.float32)
    jax.block_until_ready((out, hn, cn))
    assert jnp.allclose(out, out_r, atol=1e-3, rtol=1e-3)
    assert jnp.allclose(hn, hn_r, atol=1e-3, rtol=1e-3)
    assert jnp.allclose(cn, cn_r, atol=1e-3, rtol=1e-3)

    # Multi-chunk path (tile_t=4, tile_t*B=8) exercises the grid-resident
    # hn/cn state carry across grid iterations.
    out2, (hn2, cn2) = decoder_forward(inp, h0, c0, layer_params, wfc, bfc,
                                       matmul_dtype=jnp.float32, tile_t=4)
    jax.block_until_ready((out2, hn2, cn2))
    assert jnp.allclose(out2, out_r, atol=1e-3, rtol=1e-3)
    assert jnp.allclose(hn2, hn_r, atol=1e-3, rtol=1e-3)
    assert jnp.allclose(cn2, cn_r, atol=1e-3, rtol=1e-3)

    # Default bf16 weights (MXU-native throughput, f32 accumulate/gate math):
    # looser tolerance vs the f32 reference.
    out3, (hn3, cn3) = decoder_forward(inp, h0, c0, layer_params, wfc, bfc)
    jax.block_until_ready((out3, hn3, cn3))
    assert jnp.allclose(out3, out_r, atol=2e-1, rtol=5e-2)
    assert jnp.allclose(hn3, hn_r, atol=2e-1, rtol=5e-2)
    assert jnp.allclose(cn3, cn_r, atol=2e-1, rtol=5e-2)

    print("KERNEL_OK")
</pallas_src>

<mosaic_0001>
module attributes {stable_mosaic.version = 11 : i64} {
  func.func @kernel(%arg0: i32, %arg1: memref<16x128xf32, #tpu.memory_space<vmem>>, %arg2: memref<2x2x128xf32, #tpu.memory_space<vmem>>, %arg3: memref<2x2x128xf32, #tpu.memory_space<vmem>>, %arg4: memref<128x512xf32, #tpu.memory_space<vmem>>, %arg5: memref<128x512xf32, #tpu.memory_space<vmem>>, %arg6: memref<1x512xf32, #tpu.memory_space<vmem>>, %arg7: memref<128x512xf32, #tpu.memory_space<vmem>>, %arg8: memref<128x512xf32, #tpu.memory_space<vmem>>, %arg9: memref<1x512xf32, #tpu.memory_space<vmem>>, %arg10: memref<128x128xf32, #tpu.memory_space<vmem>>, %arg11: memref<1x128xf32, #tpu.memory_space<vmem>>, %arg12: memref<16x128xf32, #tpu.memory_space<vmem>>, %arg13: memref<2x2x128xf32, #tpu.memory_space<vmem>>, %arg14: memref<2x2x128xf32, #tpu.memory_space<vmem>>, %arg15: memref<16x512xf32, #tpu.memory_space<vmem>>, %arg16: memref<16x128xf32, #tpu.memory_space<vmem>>) attributes {dimension_semantics = [#tpu.dimension_semantics<arbitrary>], iteration_bounds = array<i64: 1>, scalar_prefetch = 0 : i64, scratch_operands = 2 : i64, tpu.core_type = #tpu.core_type<tc>, window_params = [{transform_indices = @transform_0, window_bounds = array<i64: 16, 128>}, {pipeline_mode = #tpu.pipeline_mode<synchronous>, transform_indices = @transform_1, window_bounds = array<i64: 2, 2, 128>}, {pipeline_mode = #tpu.pipeline_mode<synchronous>, transform_indices = @transform_2, window_bounds = array<i64: 2, 2, 128>}, {pipeline_mode = #tpu.pipeline_mode<synchronous>, transform_indices = @transform_3, window_bounds = array<i64: 128, 512>}, {pipeline_mode = #tpu.pipeline_mode<synchronous>, transform_indices = @transform_4, window_bounds = array<i64: 128, 512>}, {pipeline_mode = #tpu.pipeline_mode<synchronous>, transform_indices = @transform_5, window_bounds = array<i64: 1, 512>}, {pipeline_mode = #tpu.pipeline_mode<synchronous>, transform_indices = @transform_6, window_bounds = array<i64: 128, 512>}, {pipeline_mode = #tpu.pipeline_mode<synchronous>, transform_indices = @transform_7, window_bounds = array<i64: 128, 512>}, {pipeline_mode = #tpu.pipeline_mode<synchronous>, transform_indices = @transform_8, window_bounds = array<i64: 1, 512>}, {pipeline_mode = #tpu.pipeline_mode<synchronous>, transform_indices = @transform_9, window_bounds = array<i64: 128, 128>}, {pipeline_mode = #tpu.pipeline_mode<synchronous>, transform_indices = @transform_10, window_bounds = array<i64: 1, 128>}, {transform_indices = @transform_11, window_bounds = array<i64: 16, 128>}, {pipeline_mode = #tpu.pipeline_mode<synchronous>, transform_indices = @transform_12, window_bounds = array<i64: 2, 2, 128>}, {pipeline_mode = #tpu.pipeline_mode<synchronous>, transform_indices = @transform_13, window_bounds = array<i64: 2, 2, 128>}]} {
    %c0_i32 = arith.constant 0 : i32
    %0 = arith.cmpi eq, %arg0, %c0_i32 : i32
    %1 = arith.extui %0 : i1 to i32
    %c0_i32_0 = arith.constant 0 : i32
    %2 = arith.cmpi ne, %1, %c0_i32_0 : i32
    scf.if %2 {
      %c0_272 = arith.constant 0 : index
      %c0_273 = arith.constant 0 : index
      %c0_274 = arith.constant 0 : index
      %617 = vector.load %arg2[%c0_272, %c0_273, %c0_274] : memref<2x2x128xf32, #tpu.memory_space<vmem>>, vector<2x2x128xf32>
      %c0_275 = arith.constant 0 : index
      %c0_276 = arith.constant 0 : index
      %c0_277 = arith.constant 0 : index
      %618 = vector.load %arg13[%c0_275, %c0_276, %c0_277] : memref<2x2x128xf32, #tpu.memory_space<vmem>>, vector<2x2x128xf32>
      tpu.vector_store %arg13[%c0_275, %c0_276, %c0_277], %617 {strides = array<i32>} : memref<2x2x128xf32, #tpu.memory_space<vmem>>, vector<2x2x128xf32>,
      %c0_278 = arith.constant 0 : index
      %c0_279 = arith.constant 0 : index
      %c0_280 = arith.constant 0 : index
      %619 = vector.load %arg3[%c0_278, %c0_279, %c0_280] : memref<2x2x128xf32, #tpu.memory_space<vmem>>, vector<2x2x128xf32>
      %c0_281 = arith.constant 0 : index
      %c0_282 = arith.constant 0 : index
      %c0_283 = arith.constant 0 : index
      %620 = vector.load %arg14[%c0_281, %c0_282, %c0_283] : memref<2x2x128xf32, #tpu.memory_space<vmem>>, vector<2x2x128xf32>
      tpu.vector_store %arg14[%c0_281, %c0_282, %c0_283], %619 {strides = array<i32>} : memref<2x2x128xf32, #tpu.memory_space<vmem>>, vector<2x2x128xf32>,
    } else {
    }
    %c0 = arith.constant 0 : index
    %c0_1 = arith.constant 0 : index
    %3 = vector.load %arg4[%c0, %c0_1] : memref<128x512xf32, #tpu.memory_space<vmem>>, vector<128x512xf32>
    %c0_2 = arith.constant 0 : index
    %c0_3 = arith.constant 0 : index
    %4 = vector.load %arg5[%c0_2, %c0_3] : memref<128x512xf32, #tpu.memory_space<vmem>>, vector<128x512xf32>
    %c0_4 = arith.constant 0 : index
    %c0_5 = arith.constant 0 : index
    %5 = vector.load %arg6[%c0_4, %c0_5] : memref<1x512xf32, #tpu.memory_space<vmem>>, vector<1x512xf32>
    %c0_6 = arith.constant 0 : index
    %c0_7 = arith.constant 0 : index
    %6 = vector.load %arg1[%c0_6, %c0_7] : memref<16x128xf32, #tpu.memory_space<vmem>>, vector<16x128xf32>
    %cst = arith.constant dense<0.000000e+00> : vector<16x512xf32>
    %7 = tpu.matmul %6, %3, %cst {dimension_numbers = #tpu.dot_dimension_numbers<[1], [0], [0], [1], [0, 0, 1, 1], [], []>} : vector<16x128xf32>, vector<128x512xf32>, vector<16x512xf32> -> vector<16x512xf32>
    %8 = vector.broadcast %5 : vector<1x512xf32> to vector<16x512xf32>
    %9 = arith.addf %7, %8 : vector<16x512xf32>
    %c0_8 = arith.constant 0 : index
    %c0_9 = arith.constant 0 : index
    %10 = vector.load %arg15[%c0_8, %c0_9] : memref<16x512xf32, #tpu.memory_space<vmem>>, vector<16x512xf32>
    tpu.vector_store %arg15[%c0_8, %c0_9], %9 {strides = array<i32>} : memref<16x512xf32, #tpu.memory_space<vmem>>, vector<16x512xf32>,
    %c0_10 = arith.constant 0 : index
    %c0_11 = arith.constant 0 : index
    %c0_12 = arith.constant 0 : index
    %11 = vector.load %arg13[%c0_10, %c0_11, %c0_12] : memref<2x2x128xf32, #tpu.memory_space<vmem>>, vector<1x2x128xf32>
    %12 = vector.shape_cast %11 : vector<1x2x128xf32> to vector<2x128xf32>
    %c0_13 = arith.constant 0 : index
    %c0_14 = arith.constant 0 : index
    %c0_15 = arith.constant 0 : index
    %13 = vector.load %arg14[%c0_13, %c0_14, %c0_15] : memref<2x2x128xf32, #tpu.memory_space<vmem>>, vector<1x2x128xf32>
    %14 = vector.shape_cast %13 : vector<1x2x128xf32> to vector<2x128xf32>
    %c0_16 = arith.constant 0 : index
    %c0_17 = arith.constant 0 : index
    %15 = vector.load %arg15[%c0_16, %c0_17] : memref<16x512xf32, #tpu.memory_space<vmem>>, vector<2x512xf32>
    %cst_18 = arith.constant dense<0.000000e+00> : vector<2x512xf32>
    %16 = tpu.matmul %12, %4, %cst_18 {dimension_numbers = #tpu.dot_dimension_numbers<[1], [0], [0], [1], [0, 0, 1, 1], [], []>} : vector<2x128xf32>, vector<128x512xf32>, vector<2x512xf32> -> vector<2x512xf32>
    %17 = arith.addf %15, %16 : vector<2x512xf32>
    %18 = vector.extract_strided_slice %17 {offsets = [0, 0], sizes = [2, 128], strides = [1, 1]} : vector<2x512xf32> to vector<2x128xf32>
    %cst_19 = arith.constant 5.000000e-01 : f32
    %19 = vector.broadcast %cst_19 : f32 to vector<2x128xf32>
    %20 = arith.mulf %19, %18 : vector<2x128xf32>
    %21 = math.tanh %20 : vector<2x128xf32>
    %cst_20 = arith.constant 5.000000e-01 : f32
    %22 = vector.broadcast %cst_20 : f32 to vector<2x128xf32>
    %23 = arith.mulf %22, %21 : vector<2x128xf32>
    %cst_21 = arith.constant 5.000000e-01 : f32
    %24 = vector.broadcast %cst_21 : f32 to vector<2x128xf32>
    %25 = arith.addf %23, %24 : vector<2x128xf32>
    %26 = vector.extract_strided_slice %17 {offsets = [0, 128], sizes = [2, 128], strides = [1, 1]} : vector<2x512xf32> to vector<2x128xf32>
    %cst_22 = arith.constant 5.000000e-01 : f32
    %27 = vector.broadcast %cst_22 : f32 to vector<2x128xf32>
    %28 = arith.mulf %27, %26 : vector<2x128xf32>
    %29 = math.tanh %28 : vector<2x128xf32>
    %cst_23 = arith.constant 5.000000e-01 : f32
    %30 = vector.broadcast %cst_23 : f32 to vector<2x128xf32>
    %31 = arith.mulf %30, %29 : vector<2x128xf32>
    %cst_24 = arith.constant 5.000000e-01 : f32
    %32 = vector.broadcast %cst_24 : f32 to vector<2x128xf32>
    %33 = arith.addf %31, %32 : vector<2x128xf32>
    %34 = vector.extract_strided_slice %17 {offsets = [0, 256], sizes = [2, 128], strides = [1, 1]} : vector<2x512xf32> to vector<2x128xf32>
    %35 = math.tanh %34 : vector<2x128xf32>
    %36 = vector.extract_strided_slice %17 {offsets = [0, 384], sizes = [2, 128], strides = [1, 1]} : vector<2x512xf32> to vector<2x128xf32>
    %cst_25 = arith.constant 5.000000e-01 : f32
    %37 = vector.broadcast %cst_25 : f32 to vector<2x128xf32>
    %38 = arith.mulf %37, %36 : vector<2x128xf32>
    %39 = math.tanh %38 : vector<2x128xf32>
    %cst_26 = arith.constant 5.000000e-01 : f32
    %40 = vector.broadcast %cst_26 : f32 to vector<2x128xf32>
    %41 = arith.mulf %40, %39 : vector<2x128xf32>
    %cst_27 = arith.constant 5.000000e-01 : f32
    %42 = vector.broadcast %cst_27 : f32 to vector<2x128xf32>
    %43 = arith.addf %41, %42 : vector<2x128xf32>
    %44 = arith.mulf %33, %14 : vector<2x128xf32>
    %45 = arith.mulf %25, %35 : vector<2x128xf32>
    %46 = arith.addf %44, %45 : vector<2x128xf32>
    %47 = math.tanh %46 : vector<2x128xf32>
    %48 = arith.mulf %43, %47 : vector<2x128xf32>
    %c0_28 = arith.constant 0 : index
    %c0_29 = arith.constant 0 : index
    %49 = vector.load %arg16[%c0_28, %c0_29] : memref<16x128xf32, #tpu.memory_space<vmem>>, vector<2x128xf32>
    tpu.vector_store %arg16[%c0_28, %c0_29], %48 {strides = array<i32>} : memref<16x128xf32, #tpu.memory_space<vmem>>, vector<2x128xf32>,
    %c2 = arith.constant 2 : index
    %c0_30 = arith.constant 0 : index
    %50 = vector.load %arg15[%c2, %c0_30] : memref<16x512xf32, #tpu.memory_space<vmem>>, vector<2x512xf32>
    %cst_31 = arith.constant dense<0.000000e+00> : vector<2x512xf32>
    %51 = tpu.matmul %48, %4, %cst_31 {dimension_numbers = #tpu.dot_dimension_numbers<[1], [0], [0], [1], [0, 0, 1, 1], [], []>} : vector<2x128xf32>, vector<128x512xf32>, vector<2x512xf32> -> vector<2x512xf32>
    %52 = arith.addf %50, %51 : vector<2x512xf32>
    %53 = vector.extract_strided_slice %52 {offsets = [0, 0], sizes = [2, 128], strides = [1, 1]} : vector<2x512xf32> to vector<2x128xf32>
    %cst_32 = arith.constant 5.000000e-01 : f32
    %54 = vector.broadcast %cst_32 : f32 to vector<2x128xf32>
    %55 = arith.mulf %54, %53 : vector<2x128xf32>
    %56 = math.tanh %55 : vector<2x128xf32>
    %cst_33 = arith.constant 5.000000e-01 : f32
    %57 = vector.broadcast %cst_33 : f32 to vector<2x128xf32>
    %58 = arith.mulf %57, %56 : vector<2x128xf32>
    %cst_34 = arith.constant 5.000000e-01 : f32
    %59 = vector.broadcast %cst_34 : f32 to vector<2x128xf32>
    %60 = arith.addf %58, %59 : vector<2x128xf32>
    %61 = vector.extract_strided_slice %52 {offsets = [0, 128], sizes = [2, 128], strides = [1, 1]} : vector<2x512xf32> to vector<2x128xf32>
    %cst_35 = arith.constant 5.000000e-01 : f32
    %62 = vector.broadcast %cst_35 : f32 to vector<2x128xf32>
    %63 = arith.mulf %62, %61 : vector<2x128xf32>
    %64 = math.tanh %63 : vector<2x128xf32>
    %cst_36 = arith.constant 5.000000e-01 : f32
    %65 = vector.broadcast %cst_36 : f32 to vector<2x128xf32>
    %66 = arith.mulf %65, %64 : vector<2x128xf32>
    %cst_37 = arith.constant 5.000000e-01 : f32
    %67 = vector.broadcast %cst_37 : f32 to vector<2x128xf32>
    %68 = arith.addf %66, %67 : vector<2x128xf32>
    %69 = vector.extract_strided_slice %52 {offsets = [0, 256], sizes = [2, 128], strides = [1, 1]} : vector<2x512xf32> to vector<2x128xf32>
    %70 = math.tanh %69 : vector<2x128xf32>
    %71 = vector.extract_strided_slice %52 {offsets = [0, 384], sizes = [2, 128], strides = [1, 1]} : vector<2x512xf32> to vector<2x128xf32>
    %cst_38 = arith.constant 5.000000e-01 : f32
    %72 = vector.broadcast %cst_38 : f32 to vector<2x128xf32>
    %73 = arith.mulf %72, %71 : vector<2x128xf32>
    %74 = math.tanh %73 : vector<2x128xf32>
    %cst_39 = arith.constant 5.000000e-01 : f32
    %75 = vector.broadcast %cst_39 : f32 to vector<2x128xf32>
    %76 = arith.mulf %75, %74 : vector<2x128xf32>
    %cst_40 = arith.constant 5.000000e-01 : f32
    %77 = vector.broadcast %cst_40 : f32 to vector<2x128xf32>
    %78 = arith.addf %76, %77 : vector<2x128xf32>
    %79 = arith.mulf %68, %46 : vector<2x128xf32>
    %80 = arith.mulf %60, %70 : vector<2x128xf32>
    %81 = arith.addf %79, %80 : vector<2x128xf32>
    %82 = math.tanh %81 : vector<2x128xf32>
    %83 = arith.mulf %78, %82 : vector<2x128xf32>
    %c2_41 = arith.constant 2 : index
    %c0_42 = arith.constant 0 : index
    %84 = vector.load %arg16[%c2_41, %c0_42] : memref<16x128xf32, #tpu.memory_space<vmem>>, vector<2x128xf32>
    tpu.vector_store %arg16[%c2_41, %c0_42], %83 {strides = array<i32>} : memref<16x128xf32, #tpu.memory_space<vmem>>, vector<2x128xf32>,
    %c4 = arith.constant 4 : index
    %c0_43 = arith.constant 0 : index
    %85 = vector.load %arg15[%c4, %c0_43] : memref<16x512xf32, #tpu.memory_space<vmem>>, vector<2x512xf32>
    %cst_44 = arith.constant dense<0.000000e+00> : vector<2x512xf32>
    %86 = tpu.matmul %83, %4, %cst_44 {dimension_numbers = #tpu.dot_dimension_numbers<[1], [0], [0], [1], [0, 0, 1, 1], [], []>} : vector<2x128xf32>, vector<128x512xf32>, vector<2x512xf32> -> vector<2x512xf32>
    %87 = arith.addf %85, %86 : vector<2x512xf32>
    %88 = vector.extract_strided_slice %87 {offsets = [0, 0], sizes = [2, 128], strides = [1, 1]} : vector<2x512xf32> to vector<2x128xf32>
    %cst_45 = arith.constant 5.000000e-01 : f32
    %89 = vector.broadcast %cst_45 : f32 to vector<2x128xf32>
    %90 = arith.mulf %89, %88 : vector<2x128xf32>
    %91 = math.tanh %90 : vector<2x128xf32>
    %cst_46 = arith.constant 5.000000e-01 : f32
    %92 = vector.broadcast %cst_46 : f32 to vector<2x128xf32>
    %93 = arith.mulf %92, %91 : vector<2x128xf32>
    %cst_47 = arith.constant 5.000000e-01 : f32
    %94 = vector.broadcast %cst_47 : f32 to vector<2x128xf32>
    %95 = arith.addf %93, %94 : vector<2x128xf32>
    %96 = vector.extract_strided_slice %87 {offsets = [0, 128], sizes = [2, 128], strides = [1, 1]} : vector<2x512xf32> to vector<2x128xf32>
    %cst_48 = arith.constant 5.000000e-01 : f32
    %97 = vector.broadcast %cst_48 : f32 to vector<2x128xf32>
    %98 = arith.mulf %97, %96 : vector<2x128xf32>
    %99 = math.tanh %98 : vector<2x128xf32>
    %cst_49 = arith.constant 5.000000e-01 : f32
    %100 = vector.broadcast %cst_49 : f32 to vector<2x128xf32>
    %101 = arith.mulf %100, %99 : vector<2x128xf32>
    %cst_50 = arith.constant 5.000000e-01 : f32
    %102 = vector.broadcast %cst_50 : f32 to vector<2x128xf32>
    %103 = arith.addf %101, %102 : vector<2x128xf32>
    %104 = vector.extract_strided_slice %87 {offsets = [0, 256], sizes = [2, 128], strides = [1, 1]} : vector<2x512xf32> to vector<2x128xf32>
    %105 = math.tanh %104 : vector<2x128xf32>
    %106 = vector.extract_strided_slice %87 {offsets = [0, 384], sizes = [2, 128], strides = [1, 1]} : vector<2x512xf32> to vector<2x128xf32>
    %cst_51 = arith.constant 5.000000e-01 : f32
    %107 = vector.broadcast %cst_51 : f32 to vector<2x128xf32>
    %108 = arith.mulf %107, %106 : vector<2x128xf32>
    %109 = math.tanh %108 : vector<2x128xf32>
    %cst_52 = arith.constant 5.000000e-01 : f32
    %110 = vector.broadcast %cst_52 : f32 to vector<2x128xf32>
    %111 = arith.mulf %110, %109 : vector<2x128xf32>
    %cst_53 = arith.constant 5.000000e-01 : f32
    %112 = vector.broadcast %cst_53 : f32 to vector<2x128xf32>
    %113 = arith.addf %111, %112 : vector<2x128xf32>
    %114 = arith.mulf %103, %81 : vector<2x128xf32>
    %115 = arith.mulf %95, %105 : vector<2x128xf32>
    %116 = arith.addf %114, %115 : vector<2x128xf32>
    %117 = math.tanh %116 : vector<2x128xf32>
    %118 = arith.mulf %113, %117 : vector<2x128xf32>
    %c4_54 = arith.constant 4 : index
    %c0_55 = arith.constant 0 : index
    %119 = vector.load %arg16[%c4_54, %c0_55] : memref<16x128xf32, #tpu.memory_space<vmem>>, vector<2x128xf32>
    tpu.vector_store %arg16[%c4_54, %c0_55], %118 {strides = array<i32>} : memref<16x128xf32, #tpu.memory_space<vmem>>, vector<2x128xf32>,
    %c6 = arith.constant 6 : index
    %c0_56 = arith.constant 0 : index
    %120 = vector.load %arg15[%c6, %c0_56] : memref<16x512xf32, #tpu.memory_space<vmem>>, vector<2x512xf32>
    %cst_57 = arith.constant dense<0.000000e+00> : vector<2x512xf32>
    %121 = tpu.matmul %118, %4, %cst_57 {dimension_numbers = #tpu.dot_dimension_numbers<[1], [0], [0], [1], [0, 0, 1, 1], [], []>} : vector<2x128xf32>, vector<128x512xf32>, vector<2x512xf32> -> vector<2x512xf32>
    %122 = arith.addf %120, %121 : vector<2x512xf32>
    %123 = vector.extract_strided_slice %122 {offsets = [0, 0], sizes = [2, 128], strides = [1, 1]} : vector<2x512xf32> to vector<2x128xf32>
    %cst_58 = arith.constant 5.000000e-01 : f32
    %124 = vector.broadcast %cst_58 : f32 to vector<2x128xf32>
    %125 = arith.mulf %124, %123 : vector<2x128xf32>
    %126 = math.tanh %125 : vector<2x128xf32>
    %cst_59 = arith.constant 5.000000e-01 : f32
    %127 = vector.broadcast %cst_59 : f32 to vector<2x128xf32>
    %128 = arith.mulf %127, %126 : vector<2x128xf32>
    %cst_60 = arith.constant 5.000000e-01 : f32
    %129 = vector.broadcast %cst_60 : f32 to vector<2x128xf32>
    %130 = arith.addf %128, %129 : vector<2x128xf32>
    %131 = vector.extract_strided_slice %122 {offsets = [0, 128], sizes = [2, 128], strides = [1, 1]} : vector<2x512xf32> to vector<2x128xf32>
    %cst_61 = arith.constant 5.000000e-01 : f32
    %132 = vector.broadcast %cst_61 : f32 to vector<2x128xf32>
    %133 = arith.mulf %132, %131 : vector<2x128xf32>
    %134 = math.tanh %133 : vector<2x128xf32>
    %cst_62 = arith.constant 5.000000e-01 : f32
    %135 = vector.broadcast %cst_62 : f32 to vector<2x128xf32>
    %136 = arith.mulf %135, %134 : vector<2x128xf32>
    %cst_63 = arith.constant 5.000000e-01 : f32
    %137 = vector.broadcast %cst_63 : f32 to vector<2x128xf32>
    %138 = arith.addf %136, %137 : vector<2x128xf32>
    %139 = vector.extract_strided_slice %122 {offsets = [0, 256], sizes = [2, 128], strides = [1, 1]} : vector<2x512xf32> to vector<2x128xf32>
    %140 = math.tanh %139 : vector<2x128xf32>
    %141 = vector.extract_strided_slice %122 {offsets = [0, 384], sizes = [2, 128], strides = [1, 1]} : vector<2x512xf32> to vector<2x128xf32>
    %cst_64 = arith.constant 5.000000e-01 : f32
    %142 = vector.broadcast %cst_64 : f32 to vector<2x128xf32>
    %143 = arith.mulf %142, %141 : vector<2x128xf32>
    %144 = math.tanh %143 : vector<2x128xf32>
    %cst_65 = arith.constant 5.000000e-01 : f32
    %145 = vector.broadcast %cst_65 : f32 to vector<2x128xf32>
    %146 = arith.mulf %145, %144 : vector<2x128xf32>
    %cst_66 = arith.constant 5.000000e-01 : f32
    %147 = vector.broadcast %cst_66 : f32 to vector<2x128xf32>
    %148 = arith.addf %146, %147 : vector<2x128xf32>
    %149 = arith.mulf %138, %116 : vector<2x128xf32>
    %150 = arith.mulf %130, %140 : vector<2x128xf32>
    %151 = arith.addf %149, %150 : vector<2x128xf32>
    %152 = math.tanh %151 : vector<2x128xf32>
    %153 = arith.mulf %148, %152 : vector<2x128xf32>
    %c6_67 = arith.constant 6 : index
    %c0_68 = arith.constant 0 : index
    %154 = vector.load %arg16[%c6_67, %c0_68] : memref<16x128xf32, #tpu.memory_space<vmem>>, vector<2x128xf32>
    tpu.vector_store %arg16[%c6_67, %c0_68], %153 {strides = array<i32>} : memref<16x128xf32, #tpu.memory_space<vmem>>, vector<2x128xf32>,
    %c8 = arith.constant 8 : index
    %c0_69 = arith.constant 0 : index
    %155 = vector.load %arg15[%c8, %c0_69] : memref<16x512xf32, #tpu.memory_space<vmem>>, vector<2x512xf32>
    %cst_70 = arith.constant dense<0.000000e+00> : vector<2x512xf32>
    %156 = tpu.matmul %153, %4, %cst_70 {dimension_numbers = #tpu.dot_dimension_numbers<[1], [0], [0], [1], [0, 0, 1, 1], [], []>} : vector<2x128xf32>, vector<128x512xf32>, vector<2x512xf32> -> vector<2x512xf32>
    %157 = arith.addf %155, %156 : vector<2x512xf32>
    %158 = vector.extract_strided_slice %157 {offsets = [0, 0], sizes = [2, 128], strides = [1, 1]} : vector<2x512xf32> to vector<2x128xf32>
    %cst_71 = arith.constant 5.000000e-01 : f32
    %159 = vector.broadcast %cst_71 : f32 to vector<2x128xf32>
    %160 = arith.mulf %159, %158 : vector<2x128xf32>
    %161 = math.tanh %160 : vector<2x128xf32>
    %cst_72 = arith.constant 5.000000e-01 : f32
    %162 = vector.broadcast %cst_72 : f32 to vector<2x128xf32>
    %163 = arith.mulf %162, %161 : vector<2x128xf32>
    %cst_73 = arith.constant 5.000000e-01 : f32
    %164 = vector.broadcast %cst_73 : f32 to vector<2x128xf32>
    %165 = arith.addf %163, %164 : vector<2x128xf32>
    %166 = vector.extract_strided_slice %157 {offsets = [0, 128], sizes = [2, 128], strides = [1, 1]} : vector<2x512xf32> to vector<2x128xf32>
    %cst_74 = arith.constant 5.000000e-01 : f32
    %167 = vector.broadcast %cst_74 : f32 to vector<2x128xf32>
    %168 = arith.mulf %167, %166 : vector<2x128xf32>
    %169 = math.tanh %168 : vector<2x128xf32>
    %cst_75 = arith.constant 5.000000e-01 : f32
    %170 = vector.broadcast %cst_75 : f32 to vector<2x128xf32>
    %171 = arith.mulf %170, %169 : vector<2x128xf32>
    %cst_76 = arith.constant 5.000000e-01 : f32
    %172 = vector.broadcast %cst_76 : f32 to vector<2x128xf32>
    %173 = arith.addf %171, %172 : vector<2x128xf32>
    %174 = vector.extract_strided_slice %157 {offsets = [0, 256], sizes = [2, 128], strides = [1, 1]} : vector<2x512xf32> to vector<2x128xf32>
    %175 = math.tanh %174 : vector<2x128xf32>
    %176 = vector.extract_strided_slice %157 {offsets = [0, 384], sizes = [2, 128], strides = [1, 1]} : vector<2x512xf32> to vector<2x128xf32>
    %cst_77 = arith.constant 5.000000e-01 : f32
    %177 = vector.broadcast %cst_77 : f32 to vector<2x128xf32>
    %178 = arith.mulf %177, %176 : vector<2x128xf32>
    %179 = math.tanh %178 : vector<2x128xf32>
    %cst_78 = arith.constant 5.000000e-01 : f32
    %180 = vector.broadcast %cst_78 : f32 to vector<2x128xf32>
    %181 = arith.mulf %180, %179 : vector<2x128xf32>
    %cst_79 = arith.constant 5.000000e-01 : f32
    %182 = vector.broadcast %cst_79 : f32 to vector<2x128xf32>
    %183 = arith.addf %181, %182 : vector<2x128xf32>
    %184 = arith.mulf %173, %151 : vector<2x128xf32>
    %185 = arith.mulf %165, %175 : vector<2x128xf32>
    %186 = arith.addf %184, %185 : vector<2x128xf32>
    %187 = math.tanh %186 : vector<2x128xf32>
    %188 = arith.mulf %183, %187 : vector<2x128xf32>
    %c8_80 = arith.constant 8 : index
    %c0_81 = arith.constant 0 : index
    %189 = vector.load %arg16[%c8_80, %c0_81] : memref<16x128xf32, #tpu.memory_space<vmem>>, vector<2x128xf32>
    tpu.vector_store %arg16[%c8_80, %c0_81], %188 {strides = array<i32>} : memref<16x128xf32, #tpu.memory_space<vmem>>, vector<2x128xf32>,
    %c10 = arith.constant 10 : index
    %c0_82 = arith.constant 0 : index
    %190 = vector.load %arg15[%c10, %c0_82] : memref<16x512xf32, #tpu.memory_space<vmem>>, vector<2x512xf32>
    %cst_83 = arith.constant dense<0.000000e+00> : vector<2x512xf32>
    %191 = tpu.matmul %188, %4, %cst_83 {dimension_numbers = #tpu.dot_dimension_numbers<[1], [0], [0], [1], [0, 0, 1, 1], [], []>} : vector<2x128xf32>, vector<128x512xf32>, vector<2x512xf32> -> vector<2x512xf32>
    %192 = arith.addf %190, %191 : vector<2x512xf32>
    %193 = vector.extract_strided_slice %192 {offsets = [0, 0], sizes = [2, 128], strides = [1, 1]} : vector<2x512xf32> to vector<2x128xf32>
    %cst_84 = arith.constant 5.000000e-01 : f32
    %194 = vector.broadcast %cst_84 : f32 to vector<2x128xf32>
    %195 = arith.mulf %194, %193 : vector<2x128xf32>
    %196 = math.tanh %195 : vector<2x128xf32>
    %cst_85 = arith.constant 5.000000e-01 : f32
    %197 = vector.broadcast %cst_85 : f32 to vector<2x128xf32>
    %198 = arith.mulf %197, %196 : vector<2x128xf32>
    %cst_86 = arith.constant 5.000000e-01 : f32
    %199 = vector.broadcast %cst_86 : f32 to vector<2x128xf32>
    %200 = arith.addf %198, %199 : vector<2x128xf32>
    %201 = vector.extract_strided_slice %192 {offsets = [0, 128], sizes = [2, 128], strides = [1, 1]} : vector<2x512xf32> to vector<2x128xf32>
    %cst_87 = arith.constant 5.000000e-01 : f32
    %202 = vector.broadcast %cst_87 : f32 to vector<2x128xf32>
    %203 = arith.mulf %202, %201 : vector<2x128xf32>
    %204 = math.tanh %203 : vector<2x128xf32>
    %cst_88 = arith.constant 5.000000e-01 : f32
    %205 = vector.broadcast %cst_88 : f32 to vector<2x128xf32>
    %206 = arith.mulf %205, %204 : vector<2x128xf32>
    %cst_89 = arith.constant 5.000000e-01 : f32
    %207 = vector.broadcast %cst_89 : f32 to vector<2x128xf32>
    %208 = arith.addf %206, %207 : vector<2x128xf32>
    %209 = vector.extract_strided_slice %192 {offsets = [0, 256], sizes = [2, 128], strides = [1, 1]} : vector<2x512xf32> to vector<2x128xf32>
    %210 = math.tanh %209 : vector<2x128xf32>
    %211 = vector.extract_strided_slice %192 {offsets = [0, 384], sizes = [2, 128], strides = [1, 1]} : vector<2x512xf32> to vector<2x128xf32>
    %cst_90 = arith.constant 5.000000e-01 : f32
    %212 = vector.broadcast %cst_90 : f32 to vector<2x128xf32>
    %213 = arith.mulf %212, %211 : vector<2x128xf32>
    %214 = math.tanh %213 : vector<2x128xf32>
    %cst_91 = arith.constant 5.000000e-01 : f32
    %215 = vector.broadcast %cst_91 : f32 to vector<2x128xf32>
    %216 = arith.mulf %215, %214 : vector<2x128xf32>
    %cst_92 = arith.constant 5.000000e-01 : f32
    %217 = vector.broadcast %cst_92 : f32 to vector<2x128xf32>
    %218 = arith.addf %216, %217 : vector<2x128xf32>
    %219 = arith.mulf %208, %186 : vector<2x128xf32>
    %220 = arith.mulf %200, %210 : vector<2x128xf32>
    %221 = arith.addf %219, %220 : vector<2x128xf32>
    %222 = math.tanh %221 : vector<2x128xf32>
    %223 = arith.mulf %218, %222 : vector<2x128xf32>
    %c10_93 = arith.constant 10 : index
    %c0_94 = arith.constant 0 : index
    %224 = vector.load %arg16[%c10_93, %c0_94] : memref<16x128xf32, #tpu.memory_space<vmem>>, vector<2x128xf32>
    tpu.vector_store %arg16[%c10_93, %c0_94], %223 {strides = array<i32>} : memref<16x128xf32, #tpu.memory_space<vmem>>, vector<2x128xf32>,
    %c12 = arith.constant 12 : index
    %c0_95 = arith.constant 0 : index
    %225 = vector.load %arg15[%c12, %c0_95] : memref<16x512xf32, #tpu.memory_space<vmem>>, vector<2x512xf32>
    %cst_96 = arith.constant dense<0.000000e+00> : vector<2x512xf32>
    %226 = tpu.matmul %223, %4, %cst_96 {dimension_numbers = #tpu.dot_dimension_numbers<[1], [0], [0], [1], [0, 0, 1, 1], [], []>} : vector<2x128xf32>, vector<128x512xf32>, vector<2x512xf32> -> vector<2x512xf32>
    %227 = arith.addf %225, %226 : vector<2x512xf32>
    %228 = vector.extract_strided_slice %227 {offsets = [0, 0], sizes = [2, 128], strides = [1, 1]} : vector<2x512xf32> to vector<2x128xf32>
    %cst_97 = arith.constant 5.000000e-01 : f32
    %229 = vector.broadcast %cst_97 : f32 to vector<2x128xf32>
    %230 = arith.mulf %229, %228 : vector<2x128xf32>
    %231 = math.tanh %230 : vector<2x128xf32>
    %cst_98 = arith.constant 5.000000e-01 : f32
    %232 = vector.broadcast %cst_98 : f32 to vector<2x128xf32>
    %233 = arith.mulf %232, %231 : vector<2x128xf32>
    %cst_99 = arith.constant 5.000000e-01 : f32
    %234 = vector.broadcast %cst_99 : f32 to vector<2x128xf32>
    %235 = arith.addf %233, %234 : vector<2x128xf32>
    %236 = vector.extract_strided_slice %227 {offsets = [0, 128], sizes = [2, 128], strides = [1, 1]} : vector<2x512xf32> to vector<2x128xf32>
    %cst_100 = arith.constant 5.000000e-01 : f32
    %237 = vector.broadcast %cst_100 : f32 to vector<2x128xf32>
    %238 = arith.mulf %237, %236 : vector<2x128xf32>
    %239 = math.tanh %238 : vector<2x128xf32>
    %cst_101 = arith.constant 5.000000e-01 : f32
    %240 = vector.broadcast %cst_101 : f32 to vector<2x128xf32>
    %241 = arith.mulf %240, %239 : vector<2x128xf32>
    %cst_102 = arith.constant 5.000000e-01 : f32
    %242 = vector.broadcast %cst_102 : f32 to vector<2x128xf32>
    %243 = arith.addf %241, %242 : vector<2x128xf32>
    %244 = vector.extract_strided_slice %227 {offsets = [0, 256], sizes = [2, 128], strides = [1, 1]} : vector<2x512xf32> to vector<2x128xf32>
    %245 = math.tanh %244 : vector<2x128xf32>
    %246 = vector.extract_strided_slice %227 {offsets = [0, 384], sizes = [2, 128], strides = [1, 1]} : vector<2x512xf32> to vector<2x128xf32>
    %cst_103 = arith.constant 5.000000e-01 : f32
    %247 = vector.broadcast %cst_103 : f32 to vector<2x128xf32>
    %248 = arith.mulf %247, %246 : vector<2x128xf32>
    %249 = math.tanh %248 : vector<2x128xf32>
    %cst_104 = arith.constant 5.000000e-01 : f32
    %250 = vector.broadcast %cst_104 : f32 to vector<2x128xf32>
    %251 = arith.mulf %250, %249 : vector<2x128xf32>
    %cst_105 = arith.constant 5.000000e-01 : f32
    %252 = vector.broadcast %cst_105 : f32 to vector<2x128xf32>
    %253 = arith.addf %251, %252 : vector<2x128xf32>
    %254 = arith.mulf %243, %221 : vector<2x128xf32>
    %255 = arith.mulf %235, %245 : vector<2x128xf32>
    %256 = arith.addf %254, %255 : vector<2x128xf32>
    %257 = math.tanh %256 : vector<2x128xf32>
    %258 = arith.mulf %253, %257 : vector<2x128xf32>
    %c12_106 = arith.constant 12 : index
    %c0_107 = arith.constant 0 : index
    %259 = vector.load %arg16[%c12_106, %c0_107] : memref<16x128xf32, #tpu.memory_space<vmem>>, vector<2x128xf32>
    tpu.vector_store %arg16[%c12_106, %c0_107], %258 {strides = array<i32>} : memref<16x128xf32, #tpu.memory_space<vmem>>, vector<2x128xf32>,
    %c14 = arith.constant 14 : index
    %c0_108 = arith.constant 0 : index
    %260 = vector.load %arg15[%c14, %c0_108] : memref<16x512xf32, #tpu.memory_space<vmem>>, vector<2x512xf32>
    %cst_109 = arith.constant dense<0.000000e+00> : vector<2x512xf32>
    %261 = tpu.matmul %258, %4, %cst_109 {dimension_numbers = #tpu.dot_dimension_numbers<[1], [0], [0], [1], [0, 0, 1, 1], [], []>} : vector<2x128xf32>, vector<128x512xf32>, vector<2x512xf32> -> vector<2x512xf32>
    %262 = arith.addf %260, %261 : vector<2x512xf32>
    %263 = vector.extract_strided_slice %262 {offsets = [0, 0], sizes = [2, 128], strides = [1, 1]} : vector<2x512xf32> to vector<2x128xf32>
    %cst_110 = arith.constant 5.000000e-01 : f32
    %264 = vector.broadcast %cst_110 : f32 to vector<2x128xf32>
    %265 = arith.mulf %264, %263 : vector<2x128xf32>
    %266 = math.tanh %265 : vector<2x128xf32>
    %cst_111 = arith.constant 5.000000e-01 : f32
    %267 = vector.broadcast %cst_111 : f32 to vector<2x128xf32>
    %268 = arith.mulf %267, %266 : vector<2x128xf32>
    %cst_112 = arith.constant 5.000000e-01 : f32
    %269 = vector.broadcast %cst_112 : f32 to vector<2x128xf32>
    %270 = arith.addf %268, %269 : vector<2x128xf32>
    %271 = vector.extract_strided_slice %262 {offsets = [0, 128], sizes = [2, 128], strides = [1, 1]} : vector<2x512xf32> to vector<2x128xf32>
    %cst_113 = arith.constant 5.000000e-01 : f32
    %272 = vector.broadcast %cst_113 : f32 to vector<2x128xf32>
    %273 = arith.mulf %272, %271 : vector<2x128xf32>
    %274 = math.tanh %273 : vector<2x128xf32>
    %cst_114 = arith.constant 5.000000e-01 : f32
    %275 = vector.broadcast %cst_114 : f32 to vector<2x128xf32>
    %276 = arith.mulf %275, %274 : vector<2x128xf32>
    %cst_115 = arith.constant 5.000000e-01 : f32
    %277 = vector.broadcast %cst_115 : f32 to vector<2x128xf32>
    %278 = arith.addf %276, %277 : vector<2x128xf32>
    %279 = vector.extract_strided_slice %262 {offsets = [0, 256], sizes = [2, 128], strides = [1, 1]} : vector<2x512xf32> to vector<2x128xf32>
    %280 = math.tanh %279 : vector<2x128xf32>
    %281 = vector.extract_strided_slice %262 {offsets = [0, 384], sizes = [2, 128], strides = [1, 1]} : vector<2x512xf32> to vector<2x128xf32>
    %cst_116 = arith.constant 5.000000e-01 : f32
    %282 = vector.broadcast %cst_116 : f32 to vector<2x128xf32>
    %283 = arith.mulf %282, %281 : vector<2x128xf32>
    %284 = math.tanh %283 : vector<2x128xf32>
    %cst_117 = arith.constant 5.000000e-01 : f32
    %285 = vector.broadcast %cst_117 : f32 to vector<2x128xf32>
    %286 = arith.mulf %285, %284 : vector<2x128xf32>
    %cst_118 = arith.constant 5.000000e-01 : f32
    %287 = vector.broadcast %cst_118 : f32 to vector<2x128xf32>
    %288 = arith.addf %286, %287 : vector<2x128xf32>
    %289 = arith.mulf %278, %256 : vector<2x128xf32>
    %290 = arith.mulf %270, %280 : vector<2x128xf32>
    %291 = arith.addf %289, %290 : vector<2x128xf32>
    %292 = math.tanh %291 : vector<2x128xf32>
    %293 = arith.mulf %288, %292 : vector<2x128xf32>
    %c14_119 = arith.constant 14 : index
    %c0_120 = arith.constant 0 : index
    %294 = vector.load %arg16[%c14_119, %c0_120] : memref<16x128xf32, #tpu.memory_space<vmem>>, vector<2x128xf32>
    tpu.vector_store %arg16[%c14_119, %c0_120], %293 {strides = array<i32>} : memref<16x128xf32, #tpu.memory_space<vmem>>, vector<2x128xf32>,
    %c0_121 = arith.constant 0 : index
    %c0_122 = arith.constant 0 : index
    %c0_123 = arith.constant 0 : index
    %295 = vector.load %arg13[%c0_121, %c0_122, %c0_123] : memref<2x2x128xf32, #tpu.memory_space<vmem>>, vector<1x2x128xf32>
    %296 = vector.shape_cast %295 : vector<1x2x128xf32> to vector<2x128xf32>
    %297 = vector.shape_cast %293 : vector<2x128xf32> to vector<1x2x128xf32>
    tpu.vector_store %arg13[%c0_121, %c0_122, %c0_123], %297 {strides = array<i32>} : memref<2x2x128xf32, #tpu.memory_space<vmem>>, vector<1x2x128xf32>,
    %c0_124 = arith.constant 0 : index
    %c0_125 = arith.constant 0 : index
    %c0_126 = arith.constant 0 : index
    %298 = vector.load %arg14[%c0_124, %c0_125, %c0_126] : memref<2x2x128xf32, #tpu.memory_space<vmem>>, vector<1x2x128xf32>
    %299 = vector.shape_cast %298 : vector<1x2x128xf32> to vector<2x128xf32>
    %300 = vector.shape_cast %291 : vector<2x128xf32> to vector<1x2x128xf32>
    tpu.vector_store %arg14[%c0_124, %c0_125, %c0_126], %300 {strides = array<i32>} : memref<2x2x128xf32, #tpu.memory_space<vmem>>, vector<1x2x128xf32>,
    %c0_127 = arith.constant 0 : index
    %c0_128 = arith.constant 0 : index
    %301 = vector.load %arg7[%c0_127, %c0_128] : memref<128x512xf32, #tpu.memory_space<vmem>>, vector<128x512xf32>
    %c0_129 = arith.constant 0 : index
    %c0_130 = arith.constant 0 : index
    %302 = vector.load %arg8[%c0_129, %c0_130] : memref<128x512xf32, #tpu.memory_space<vmem>>, vector<128x512xf32>
    %c0_131 = arith.constant 0 : index
    %c0_132 = arith.constant 0 : index
    %303 = vector.load %arg9[%c0_131, %c0_132] : memref<1x512xf32, #tpu.memory_space<vmem>>, vector<1x512xf32>
    %c0_133 = arith.constant 0 : index
    %c0_134 = arith.constant 0 : index
    %304 = vector.load %arg16[%c0_133, %c0_134] : memref<16x128xf32, #tpu.memory_space<vmem>>, vector<16x128xf32>
    %cst_135 = arith.constant dense<0.000000e+00> : vector<16x512xf32>
    %305 = tpu.matmul %304, %301, %cst_135 {dimension_numbers = #tpu.dot_dimension_numbers<[1], [0], [0], [1], [0, 0, 1, 1], [], []>} : vector<16x128xf32>, vector<128x512xf32>, vector<16x512xf32> -> vector<16x512xf32>
    %306 = vector.broadcast %303 : vector<1x512xf32> to vector<16x512xf32>
    %307 = arith.addf %305, %306 : vector<16x512xf32>
    %c0_136 = arith.constant 0 : index
    %c0_137 = arith.constant 0 : index
    %308 = vector.load %arg15[%c0_136, %c0_137] : memref<16x512xf32, #tpu.memory_space<vmem>>, vector<16x512xf32>
    tpu.vector_store %arg15[%c0_136, %c0_137], %307 {strides = array<i32>} : memref<16x512xf32, #tpu.memory_space<vmem>>, vector<16x512xf32>,
    %c1 = arith.constant 1 : index
    %c0_138 = arith.constant 0 : index
    %c0_139 = arith.constant 0 : index
    %309 = vector.load %arg13[%c1, %c0_138, %c0_139] : memref<2x2x128xf32, #tpu.memory_space<vmem>>, vector<1x2x128xf32>
    %310 = vector.shape_cast %309 : vector<1x2x128xf32> to vector<2x128xf32>
    %c1_140 = arith.constant 1 : index
    %c0_141 = arith.constant 0 : index
    %c0_142 = arith.constant 0 : index
    %311 = vector.load %arg14[%c1_140, %c0_141, %c0_142] : memref<2x2x128xf32, #tpu.memory_space<vmem>>, vector<1x2x128xf32>
    %312 = vector.shape_cast %311 : vector<1x2x128xf32> to vector<2x128xf32>
    %c0_143 = arith.constant 0 : index
    %c0_144 = arith.constant 0 : index
    %313 = vector.load %arg15[%c0_143, %c0_144] : memref<16x512xf32, #tpu.memory_space<vmem>>, vector<2x512xf32>
    %cst_145 = arith.constant dense<0.000000e+00> : vector<2x512xf32>
    %314 = tpu.matmul %310, %302, %cst_145 {dimension_numbers = #tpu.dot_dimension_numbers<[1], [0], [0], [1], [0, 0, 1, 1], [], []>} : vector<2x128xf32>, vector<128x512xf32>, vector<2x512xf32> -> vector<2x512xf32>
    %315 = arith.addf %313, %314 : vector<2x512xf32>
    %316 = vector.extract_strided_slice %315 {offsets = [0, 0], sizes = [2, 128], strides = [1, 1]} : vector<2x512xf32> to vector<2x128xf32>
    %cst_146 = arith.constant 5.000000e-01 : f32
    %317 = vector.broadcast %cst_146 : f32 to vector<2x128xf32>
    %318 = arith.mulf %317, %316 : vector<2x128xf32>
    %319 = math.tanh %318 : vector<2x128xf32>
    %cst_147 = arith.constant 5.000000e-01 : f32
    %320 = vector.broadcast %cst_147 : f32 to vector<2x128xf32>
    %321 = arith.mulf %320, %319 : vector<2x128xf32>
    %cst_148 = arith.constant 5.000000e-01 : f32
    %322 = vector.broadcast %cst_148 : f32 to vector<2x128xf32>
    %323 = arith.addf %321, %322 : vector<2x128xf32>
    %324 = vector.extract_strided_slice %315 {offsets = [0, 128], sizes = [2, 128], strides = [1, 1]} : vector<2x512xf32> to vector<2x128xf32>
    %cst_149 = arith.constant 5.000000e-01 : f32
    %325 = vector.broadcast %cst_149 : f32 to vector<2x128xf32>
    %326 = arith.mulf %325, %324 : vector<2x128xf32>
    %327 = math.tanh %326 : vector<2x128xf32>
    %cst_150 = arith.constant 5.000000e-01 : f32
    %328 = vector.broadcast %cst_150 : f32 to vector<2x128xf32>
    %329 = arith.mulf %328, %327 : vector<2x128xf32>
    %cst_151 = arith.constant 5.000000e-01 : f32
    %330 = vector.broadcast %cst_151 : f32 to vector<2x128xf32>
    %331 = arith.addf %329, %330 : vector<2x128xf32>
    %332 = vector.extract_strided_slice %315 {offsets = [0, 256], sizes = [2, 128], strides = [1, 1]} : vector<2x512xf32> to vector<2x128xf32>
    %333 = math.tanh %332 : vector<2x128xf32>
    %334 = vector.extract_strided_slice %315 {offsets = [0, 384], sizes = [2, 128], strides = [1, 1]} : vector<2x512xf32> to vector<2x128xf32>
    %cst_152 = arith.constant 5.000000e-01 : f32
    %335 = vector.broadcast %cst_152 : f32 to vector<2x128xf32>
    %336 = arith.mulf %335, %334 : vector<2x128xf32>
    %337 = math.tanh %336 : vector<2x128xf32>
    %cst_153 = arith.constant 5.000000e-01 : f32
    %338 = vector.broadcast %cst_153 : f32 to vector<2x128xf32>
    %339 = arith.mulf %338, %337 : vector<2x128xf32>
    %cst_154 = arith.constant 5.000000e-01 : f32
    %340 = vector.broadcast %cst_154 : f32 to vector<2x128xf32>
    %341 = arith.addf %339, %340 : vector<2x128xf32>
    %342 = arith.mulf %331, %312 : vector<2x128xf32>
    %343 = arith.mulf %323, %333 : vector<2x128xf32>
    %344 = arith.addf %342, %343 : vector<2x128xf32>
    %345 = math.tanh %344 : vector<2x128xf32>
    %346 = arith.mulf %341, %345 : vector<2x128xf32>
    %c0_155 = arith.constant 0 : index
    %c0_156 = arith.constant 0 : index
    %347 = vector.load %arg16[%c0_155, %c0_156] : memref<16x128xf32, #tpu.memory_space<vmem>>, vector<2x128xf32>
    tpu.vector_store %arg16[%c0_155, %c0_156], %346 {strides = array<i32>} : memref<16x128xf32, #tpu.memory_space<vmem>>, vector<2x128xf32>,
    %c2_157 = arith.constant 2 : index
    %c0_158 = arith.constant 0 : index
    %348 = vector.load %arg15[%c2_157, %c0_158] : memref<16x512xf32, #tpu.memory_space<vmem>>, vector<2x512xf32>
    %cst_159 = arith.constant dense<0.000000e+00> : vector<2x512xf32>
    %349 = tpu.matmul %346, %302, %cst_159 {dimension_numbers = #tpu.dot_dimension_numbers<[1], [0], [0], [1], [0, 0, 1, 1], [], []>} : vector<2x128xf32>, vector<128x512xf32>, vector<2x512xf32> -> vector<2x512xf32>
    %350 = arith.addf %348, %349 : vector<2x512xf32>
    %351 = vector.extract_strided_slice %350 {offsets = [0, 0], sizes = [2, 128], strides = [1, 1]} : vector<2x512xf32> to vector<2x128xf32>
    %cst_160 = arith.constant 5.000000e-01 : f32
    %352 = vector.broadcast %cst_160 : f32 to vector<2x128xf32>
    %353 = arith.mulf %352, %351 : vector<2x128xf32>
    %354 = math.tanh %353 : vector<2x128xf32>
    %cst_161 = arith.constant 5.000000e-01 : f32
    %355 = vector.broadcast %cst_161 : f32 to vector<2x128xf32>
    %356 = arith.mulf %355, %354 : vector<2x128xf32>
    %cst_162 = arith.constant 5.000000e-01 : f32
    %357 = vector.broadcast %cst_162 : f32 to vector<2x128xf32>
    %358 = arith.addf %356, %357 : vector<2x128xf32>
    %359 = vector.extract_strided_slice %350 {offsets = [0, 128], sizes = [2, 128], strides = [1, 1]} : vector<2x512xf32> to vector<2x128xf32>
    %cst_163 = arith.constant 5.000000e-01 : f32
    %360 = vector.broadcast %cst_163 : f32 to vector<2x128xf32>
    %361 = arith.mulf %360, %359 : vector<2x128xf32>
    %362 = math.tanh %361 : vector<2x128xf32>
    %cst_164 = arith.constant 5.000000e-01 : f32
    %363 = vector.broadcast %cst_164 : f32 to vector<2x128xf32>
    %364 = arith.mulf %363, %362 : vector<2x128xf32>
    %cst_165 = arith.constant 5.000000e-01 : f32
    %365 = vector.broadcast %cst_165 : f32 to vector<2x128xf32>
    %366 = arith.addf %364, %365 : vector<2x128xf32>
    %367 = vector.extract_strided_slice %350 {offsets = [0, 256], sizes = [2, 128], strides = [1, 1]} : vector<2x512xf32> to vector<2x128xf32>
    %368 = math.tanh %367 : vector<2x128xf32>
    %369 = vector.extract_strided_slice %350 {offsets = [0, 384], sizes = [2, 128], strides = [1, 1]} : vector<2x512xf32> to vector<2x128xf32>
    %cst_166 = arith.constant 5.000000e-01 : f32
    %370 = vector.broadcast %cst_166 : f32 to vector<2x128xf32>
    %371 = arith.mulf %370, %369 : vector<2x128xf32>
    %372 = math.tanh %371 : vector<2x128xf32>
    %cst_167 = arith.constant 5.000000e-01 : f32
    %373 = vector.broadcast %cst_167 : f32 to vector<2x128xf32>
    %374 = arith.mulf %373, %372 : vector<2x128xf32>
    %cst_168 = arith.constant 5.000000e-01 : f32
    %375 = vector.broadcast %cst_168 : f32 to vector<2x128xf32>
    %376 = arith.addf %374, %375 : vector<2x128xf32>
    %377 = arith.mulf %366, %344 : vector<2x128xf32>
    %378 = arith.mulf %358, %368 : vector<2x128xf32>
    %379 = arith.addf %377, %378 : vector<2x128xf32>
    %380 = math.tanh %379 : vector<2x128xf32>
    %381 = arith.mulf %376, %380 : vector<2x128xf32>
    %c2_169 = arith.constant 2 : index
    %c0_170 = arith.constant 0 : index
    %382 = vector.load %arg16[%c2_169, %c0_170] : memref<16x128xf32, #tpu.memory_space<vmem>>, vector<2x128xf32>
    tpu.vector_store %arg16[%c2_169, %c0_170], %381 {strides = array<i32>} : memref<16x128xf32, #tpu.memory_space<vmem>>, vector<2x128xf32>,
    %c4_171 = arith.constant 4 : index
    %c0_172 = arith.constant 0 : index
    %383 = vector.load %arg15[%c4_171, %c0_172] : memref<16x512xf32, #tpu.memory_space<vmem>>, vector<2x512xf32>
    %cst_173 = arith.constant dense<0.000000e+00> : vector<2x512xf32>
    %384 = tpu.matmul %381, %302, %cst_173 {dimension_numbers = #tpu.dot_dimension_numbers<[1], [0], [0], [1], [0, 0, 1, 1], [], []>} : vector<2x128xf32>, vector<128x512xf32>, vector<2x512xf32> -> vector<2x512xf32>
    %385 = arith.addf %383, %384 : vector<2x512xf32>
    %386 = vector.extract_strided_slice %385 {offsets = [0, 0], sizes = [2, 128], strides = [1, 1]} : vector<2x512xf32> to vector<2x128xf32>
    %cst_174 = arith.constant 5.000000e-01 : f32
    %387 = vector.broadcast %cst_174 : f32 to vector<2x128xf32>
    %388 = arith.mulf %387, %386 : vector<2x128xf32>
    %389 = math.tanh %388 : vector<2x128xf32>
    %cst_175 = arith.constant 5.000000e-01 : f32
    %390 = vector.broadcast %cst_175 : f32 to vector<2x128xf32>
    %391 = arith.mulf %390, %389 : vector<2x128xf32>
    %cst_176 = arith.constant 5.000000e-01 : f32
    %392 = vector.broadcast %cst_176 : f32 to vector<2x128xf32>
    %393 = arith.addf %391, %392 : vector<2x128xf32>
    %394 = vector.extract_strided_slice %385 {offsets = [0, 128], sizes = [2, 128], strides = [1, 1]} : vector<2x512xf32> to vector<2x128xf32>
    %cst_177 = arith.constant 5.000000e-01 : f32
    %395 = vector.broadcast %cst_177 : f32 to vector<2x128xf32>
    %396 = arith.mulf %395, %394 : vector<2x128xf32>
    %397 = math.tanh %396 : vector<2x128xf32>
    %cst_178 = arith.constant 5.000000e-01 : f32
    %398 = vector.broadcast %cst_178 : f32 to vector<2x128xf32>
    %399 = arith.mulf %398, %397 : vector<2x128xf32>
    %cst_179 = arith.constant 5.000000e-01 : f32
    %400 = vector.broadcast %cst_179 : f32 to vector<2x128xf32>
    %401 = arith.addf %399, %400 : vector<2x128xf32>
    %402 = vector.extract_strided_slice %385 {offsets = [0, 256], sizes = [2, 128], strides = [1, 1]} : vector<2x512xf32> to vector<2x128xf32>
    %403 = math.tanh %402 : vector<2x128xf32>
    %404 = vector.extract_strided_slice %385 {offsets = [0, 384], sizes = [2, 128], strides = [1, 1]} : vector<2x512xf32> to vector<2x128xf32>
    %cst_180 = arith.constant 5.000000e-01 : f32
    %405 = vector.broadcast %cst_180 : f32 to vector<2x128xf32>
    %406 = arith.mulf %405, %404 : vector<2x128xf32>
    %407 = math.tanh %406 : vector<2x128xf32>
    %cst_181 = arith.constant 5.000000e-01 : f32
    %408 = vector.broadcast %cst_181 : f32 to vector<2x128xf32>
    %409 = arith.mulf %408, %407 : vector<2x128xf32>
    %cst_182 = arith.constant 5.000000e-01 : f32
    %410 = vector.broadcast %cst_182 : f32 to vector<2x128xf32>
    %411 = arith.addf %409, %410 : vector<2x128xf32>
    %412 = arith.mulf %401, %379 : vector<2x128xf32>
    %413 = arith.mulf %393, %403 : vector<2x128xf32>
    %414 = arith.addf %412, %413 : vector<2x128xf32>
    %415 = math.tanh %414 : vector<2x128xf32>
    %416 = arith.mulf %411, %415 : vector<2x128xf32>
    %c4_183 = arith.constant 4 : index
    %c0_184 = arith.constant 0 : index
    %417 = vector.load %arg16[%c4_183, %c0_184] : memref<16x128xf32, #tpu.memory_space<vmem>>, vector<2x128xf32>
    tpu.vector_store %arg16[%c4_183, %c0_184], %416 {strides = array<i32>} : memref<16x128xf32, #tpu.memory_space<vmem>>, vector<2x128xf32>,
    %c6_185 = arith.constant 6 : index
    %c0_186 = arith.constant 0 : index
    %418 = vector.load %arg15[%c6_185, %c0_186] : memref<16x512xf32, #tpu.memory_space<vmem>>, vector<2x512xf32>
    %cst_187 = arith.constant dense<0.000000e+00> : vector<2x512xf32>
    %419 = tpu.matmul %416, %302, %cst_187 {dimension_numbers = #tpu.dot_dimension_numbers<[1], [0], [0], [1], [0, 0, 1, 1], [], []>} : vector<2x128xf32>, vector<128x512xf32>, vector<2x512xf32> -> vector<2x512xf32>
    %420 = arith.addf %418, %419 : vector<2x512xf32>
    %421 = vector.extract_strided_slice %420 {offsets = [0, 0], sizes = [2, 128], strides = [1, 1]} : vector<2x512xf32> to vector<2x128xf32>
    %cst_188 = arith.constant 5.000000e-01 : f32
    %422 = vector.broadcast %cst_188 : f32 to vector<2x128xf32>
    %423 = arith.mulf %422, %421 : vector<2x128xf32>
    %424 = math.tanh %423 : vector<2x128xf32>
    %cst_189 = arith.constant 5.000000e-01 : f32
    %425 = vector.broadcast %cst_189 : f32 to vector<2x128xf32>
    %426 = arith.mulf %425, %424 : vector<2x128xf32>
    %cst_190 = arith.constant 5.000000e-01 : f32
    %427 = vector.broadcast %cst_190 : f32 to vector<2x128xf32>
    %428 = arith.addf %426, %427 : vector<2x128xf32>
    %429 = vector.extract_strided_slice %420 {offsets = [0, 128], sizes = [2, 128], strides = [1, 1]} : vector<2x512xf32> to vector<2x128xf32>
    %cst_191 = arith.constant 5.000000e-01 : f32
    %430 = vector.broadcast %cst_191 : f32 to vector<2x128xf32>
    %431 = arith.mulf %430, %429 : vector<2x128xf32>
    %432 = math.tanh %431 : vector<2x128xf32>
    %cst_192 = arith.constant 5.000000e-01 : f32
    %433 = vector.broadcast %cst_192 : f32 to vector<2x128xf32>
    %434 = arith.mulf %433, %432 : vector<2x128xf32>
    %cst_193 = arith.constant 5.000000e-01 : f32
    %435 = vector.broadcast %cst_193 : f32 to vector<2x128xf32>
    %436 = arith.addf %434, %435 : vector<2x128xf32>
    %437 = vector.extract_strided_slice %420 {offsets = [0, 256], sizes = [2, 128], strides = [1, 1]} : vector<2x512xf32> to vector<2x128xf32>
    %438 = math.tanh %437 : vector<2x128xf32>
    %439 = vector.extract_strided_slice %420 {offsets = [0, 384], sizes = [2, 128], strides = [1, 1]} : vector<2x512xf32> to vector<2x128xf32>
    %cst_194 = arith.constant 5.000000e-01 : f32
    %440 = vector.broadcast %cst_194 : f32 to vector<2x128xf32>
    %441 = arith.mulf %440, %439 : vector<2x128xf32>
    %442 = math.tanh %441 : vector<2x128xf32>
    %cst_195 = arith.constant 5.000000e-01 : f32
    %443 = vector.broadcast %cst_195 : f32 to vector<2x128xf32>
    %444 = arith.mulf %443, %442 : vector<2x128xf32>
    %cst_196 = arith.constant 5.000000e-01 : f32
    %445 = vector.broadcast %cst_196 : f32 to vector<2x128xf32>
    %446 = arith.addf %444, %445 : vector<2x128xf32>
    %447 = arith.mulf %436, %414 : vector<2x128xf32>
    %448 = arith.mulf %428, %438 : vector<2x128xf32>
    %449 = arith.addf %447, %448 : vector<2x128xf32>
    %450 = math.tanh %449 : vector<2x128xf32>
    %451 = arith.mulf %446, %450 : vector<2x128xf32>
    %c6_197 = arith.constant 6 : index
    %c0_198 = arith.constant 0 : index
    %452 = vector.load %arg16[%c6_197, %c0_198] : memref<16x128xf32, #tpu.memory_space<vmem>>, vector<2x128xf32>
    tpu.vector_store %arg16[%c6_197, %c0_198], %451 {strides = array<i32>} : memref<16x128xf32, #tpu.memory_space<vmem>>, vector<2x128xf32>,
    %c8_199 = arith.constant 8 : index
    %c0_200 = arith.constant 0 : index
    %453 = vector.load %arg15[%c8_199, %c0_200] : memref<16x512xf32, #tpu.memory_space<vmem>>, vector<2x512xf32>
    %cst_201 = arith.constant dense<0.000000e+00> : vector<2x512xf32>
    %454 = tpu.matmul %451, %302, %cst_201 {dimension_numbers = #tpu.dot_dimension_numbers<[1], [0], [0], [1], [0, 0, 1, 1], [], []>} : vector<2x128xf32>, vector<128x512xf32>, vector<2x512xf32> -> vector<2x512xf32>
    %455 = arith.addf %453, %454 : vector<2x512xf32>
    %456 = vector.extract_strided_slice %455 {offsets = [0, 0], sizes = [2, 128], strides = [1, 1]} : vector<2x512xf32> to vector<2x128xf32>
    %cst_202 = arith.constant 5.000000e-01 : f32
    %457 = vector.broadcast %cst_202 : f32 to vector<2x128xf32>
    %458 = arith.mulf %457, %456 : vector<2x128xf32>
    %459 = math.tanh %458 : vector<2x128xf32>
    %cst_203 = arith.constant 5.000000e-01 : f32
    %460 = vector.broadcast %cst_203 : f32 to vector<2x128xf32>
    %461 = arith.mulf %460, %459 : vector<2x128xf32>
    %cst_204 = arith.constant 5.000000e-01 : f32
    %462 = vector.broadcast %cst_204 : f32 to vector<2x128xf32>
    %463 = arith.addf %461, %462 : vector<2x128xf32>
    %464 = vector.extract_strided_slice %455 {offsets = [0, 128], sizes = [2, 128], strides = [1, 1]} : vector<2x512xf32> to vector<2x128xf32>
    %cst_205 = arith.constant 5.000000e-01 : f32
    %465 = vector.broadcast %cst_205 : f32 to vector<2x128xf32>
    %466 = arith.mulf %465, %464 : vector<2x128xf32>
    %467 = math.tanh %466 : vector<2x128xf32>
    %cst_206 = arith.constant 5.000000e-01 : f32
    %468 = vector.broadcast %cst_206 : f32 to vector<2x128xf32>
    %469 = arith.mulf %468, %467 : vector<2x128xf32>
    %cst_207 = arith.constant 5.000000e-01 : f32
    %470 = vector.broadcast %cst_207 : f32 to vector<2x128xf32>
    %471 = arith.addf %469, %470 : vector<2x128xf32>
    %472 = vector.extract_strided_slice %455 {offsets = [0, 256], sizes = [2, 128], strides = [1, 1]} : vector<2x512xf32> to vector<2x128xf32>
    %473 = math.tanh %472 : vector<2x128xf32>
    %474 = vector.extract_strided_slice %455 {offsets = [0, 384], sizes = [2, 128], strides = [1, 1]} : vector<2x512xf32> to vector<2x128xf32>
    %cst_208 = arith.constant 5.000000e-01 : f32
    %475 = vector.broadcast %cst_208 : f32 to vector<2x128xf32>
    %476 = arith.mulf %475, %474 : vector<2x128xf32>
    %477 = math.tanh %476 : vector<2x128xf32>
    %cst_209 = arith.constant 5.000000e-01 : f32
    %478 = vector.broadcast %cst_209 : f32 to vector<2x128xf32>
    %479 = arith.mulf %478, %477 : vector<2x128xf32>
    %cst_210 = arith.constant 5.000000e-01 : f32
    %480 = vector.broadcast %cst_210 : f32 to vector<2x128xf32>
    %481 = arith.addf %479, %480 : vector<2x128xf32>
    %482 = arith.mulf %471, %449 : vector<2x128xf32>
    %483 = arith.mulf %463, %473 : vector<2x128xf32>
    %484 = arith.addf %482, %483 : vector<2x128xf32>
    %485 = math.tanh %484 : vector<2x128xf32>
    %486 = arith.mulf %481, %485 : vector<2x128xf32>
    %c8_211 = arith.constant 8 : index
    %c0_212 = arith.constant 0 : index
    %487 = vector.load %arg16[%c8_211, %c0_212] : memref<16x128xf32, #tpu.memory_space<vmem>>, vector<2x128xf32>
    tpu.vector_store %arg16[%c8_211, %c0_212], %486 {strides = array<i32>} : memref<16x128xf32, #tpu.memory_space<vmem>>, vector<2x128xf32>,
    %c10_213 = arith.constant 10 : index
    %c0_214 = arith.constant 0 : index
    %488 = vector.load %arg15[%c10_213, %c0_214] : memref<16x512xf32, #tpu.memory_space<vmem>>, vector<2x512xf32>
    %cst_215 = arith.constant dense<0.000000e+00> : vector<2x512xf32>
    %489 = tpu.matmul %486, %302, %cst_215 {dimension_numbers = #tpu.dot_dimension_numbers<[1], [0], [0], [1], [0, 0, 1, 1], [], []>} : vector<2x128xf32>, vector<128x512xf32>, vector<2x512xf32> -> vector<2x512xf32>
    %490 = arith.addf %488, %489 : vector<2x512xf32>
    %491 = vector.extract_strided_slice %490 {offsets = [0, 0], sizes = [2, 128], strides = [1, 1]} : vector<2x512xf32> to vector<2x128xf32>
    %cst_216 = arith.constant 5.000000e-01 : f32
    %492 = vector.broadcast %cst_216 : f32 to vector<2x128xf32>
    %493 = arith.mulf %492, %491 : vector<2x128xf32>
    %494 = math.tanh %493 : vector<2x128xf32>
    %cst_217 = arith.constant 5.000000e-01 : f32
    %495 = vector.broadcast %cst_217 : f32 to vector<2x128xf32>
    %496 = arith.mulf %495, %494 : vector<2x128xf32>
    %cst_218 = arith.constant 5.000000e-01 : f32
    %497 = vector.broadcast %cst_218 : f32 to vector<2x128xf32>
    %498 = arith.addf %496, %497 : vector<2x128xf32>
    %499 = vector.extract_strided_slice %490 {offsets = [0, 128], sizes = [2, 128], strides = [1, 1]} : vector<2x512xf32> to vector<2x128xf32>
    %cst_219 = arith.constant 5.000000e-01 : f32
    %500 = vector.broadcast %cst_219 : f32 to vector<2x128xf32>
    %501 = arith.mulf %500, %499 : vector<2x128xf32>
    %502 = math.tanh %501 : vector<2x128xf32>
    %cst_220 = arith.constant 5.000000e-01 : f32
    %503 = vector.broadcast %cst_220 : f32 to vector<2x128xf32>
    %504 = arith.mulf %503, %502 : vector<2x128xf32>
    %cst_221 = arith.constant 5.000000e-01 : f32
    %505 = vector.broadcast %cst_221 : f32 to vector<2x128xf32>
    %506 = arith.addf %504, %505 : vector<2x128xf32>
    %507 = vector.extract_strided_slice %490 {offsets = [0, 256], sizes = [2, 128], strides = [1, 1]} : vector<2x512xf32> to vector<2x128xf32>
    %508 = math.tanh %507 : vector<2x128xf32>
    %509 = vector.extract_strided_slice %490 {offsets = [0, 384], sizes = [2, 128], strides = [1, 1]} : vector<2x512xf32> to vector<2x128xf32>
    %cst_222 = arith.constant 5.000000e-01 : f32
    %510 = vector.broadcast %cst_222 : f32 to vector<2x128xf32>
    %511 = arith.mulf %510, %509 : vector<2x128xf32>
    %512 = math.tanh %511 : vector<2x128xf32>
    %cst_223 = arith.constant 5.000000e-01 : f32
    %513 = vector.broadcast %cst_223 : f32 to vector<2x128xf32>
    %514 = arith.mulf %513, %512 : vector<2x128xf32>
    %cst_224 = arith.constant 5.000000e-01 : f32
    %515 = vector.broadcast %cst_224 : f32 to vector<2x128xf32>
    %516 = arith.addf %514, %515 : vector<2x128xf32>
    %517 = arith.mulf %506, %484 : vector<2x128xf32>
    %518 = arith.mulf %498, %508 : vector<2x128xf32>
    %519 = arith.addf %517, %518 : vector<2x128xf32>
    %520 = math.tanh %519 : vector<2x128xf32>
    %521 = arith.mulf %516, %520 : vector<2x128xf32>
    %c10_225 = arith.constant 10 : index
    %c0_226 = arith.constant 0 : index
    %522 = vector.load %arg16[%c10_225, %c0_226] : memref<16x128xf32, #tpu.memory_space<vmem>>, vector<2x128xf32>
    tpu.vector_store %arg16[%c10_225, %c0_226], %521 {strides = array<i32>} : memref<16x128xf32, #tpu.memory_space<vmem>>, vector<2x128xf32>,
    %c12_227 = arith.constant 12 : index
    %c0_228 = arith.constant 0 : index
    %523 = vector.load %arg15[%c12_227, %c0_228] : memref<16x512xf32, #tpu.memory_space<vmem>>, vector<2x512xf32>
    %cst_229 = arith.constant dense<0.000000e+00> : vector<2x512xf32>
    %524 = tpu.matmul %521, %302, %cst_229 {dimension_numbers = #tpu.dot_dimension_numbers<[1], [0], [0], [1], [0, 0, 1, 1], [], []>} : vector<2x128xf32>, vector<128x512xf32>, vector<2x512xf32> -> vector<2x512xf32>
    %525 = arith.addf %523, %524 : vector<2x512xf32>
    %526 = vector.extract_strided_slice %525 {offsets = [0, 0], sizes = [2, 128], strides = [1, 1]} : vector<2x512xf32> to vector<2x128xf32>
    %cst_230 = arith.constant 5.000000e-01 : f32
    %527 = vector.broadcast %cst_230 : f32 to vector<2x128xf32>
    %528 = arith.mulf %527, %526 : vector<2x128xf32>
    %529 = math.tanh %528 : vector<2x128xf32>
    %cst_231 = arith.constant 5.000000e-01 : f32
    %530 = vector.broadcast %cst_231 : f32 to vector<2x128xf32>
    %531 = arith.mulf %530, %529 : vector<2x128xf32>
    %cst_232 = arith.constant 5.000000e-01 : f32
    %532 = vector.broadcast %cst_232 : f32 to vector<2x128xf32>
    %533 = arith.addf %531, %532 : vector<2x128xf32>
    %534 = vector.extract_strided_slice %525 {offsets = [0, 128], sizes = [2, 128], strides = [1, 1]} : vector<2x512xf32> to vector<2x128xf32>
    %cst_233 = arith.constant 5.000000e-01 : f32
    %535 = vector.broadcast %cst_233 : f32 to vector<2x128xf32>
    %536 = arith.mulf %535, %534 : vector<2x128xf32>
    %537 = math.tanh %536 : vector<2x128xf32>
    %cst_234 = arith.constant 5.000000e-01 : f32
    %538 = vector.broadcast %cst_234 : f32 to vector<2x128xf32>
    %539 = arith.mulf %538, %537 : vector<2x128xf32>
    %cst_235 = arith.constant 5.000000e-01 : f32
    %540 = vector.broadcast %cst_235 : f32 to vector<2x128xf32>
    %541 = arith.addf %539, %540 : vector<2x128xf32>
    %542 = vector.extract_strided_slice %525 {offsets = [0, 256], sizes = [2, 128], strides = [1, 1]} : vector<2x512xf32> to vector<2x128xf32>
    %543 = math.tanh %542 : vector<2x128xf32>
    %544 = vector.extract_strided_slice %525 {offsets = [0, 384], sizes = [2, 128], strides = [1, 1]} : vector<2x512xf32> to vector<2x128xf32>
    %cst_236 = arith.constant 5.000000e-01 : f32
    %545 = vector.broadcast %cst_236 : f32 to vector<2x128xf32>
    %546 = arith.mulf %545, %544 : vector<2x128xf32>
    %547 = math.tanh %546 : vector<2x128xf32>
    %cst_237 = arith.constant 5.000000e-01 : f32
    %548 = vector.broadcast %cst_237 : f32 to vector<2x128xf32>
    %549 = arith.mulf %548, %547 : vector<2x128xf32>
    %cst_238 = arith.constant 5.000000e-01 : f32
    %550 = vector.broadcast %cst_238 : f32 to vector<2x128xf32>
    %551 = arith.addf %549, %550 : vector<2x128xf32>
    %552 = arith.mulf %541, %519 : vector<2x128xf32>
    %553 = arith.mulf %533, %543 : vector<2x128xf32>
    %554 = arith.addf %552, %553 : vector<2x128xf32>
    %555 = math.tanh %554 : vector<2x128xf32>
    %556 = arith.mulf %551, %555 : vector<2x128xf32>
    %c12_239 = arith.constant 12 : index
    %c0_240 = arith.constant 0 : index
    %557 = vector.load %arg16[%c12_239, %c0_240] : memref<16x128xf32, #tpu.memory_space<vmem>>, vector<2x128xf32>
    tpu.vector_store %arg16[%c12_239, %c0_240], %556 {strides = array<i32>} : memref<16x128xf32, #tpu.memory_space<vmem>>, vector<2x128xf32>,
    %c14_241 = arith.constant 14 : index
    %c0_242 = arith.constant 0 : index
    %558 = vector.load %arg15[%c14_241, %c0_242] : memref<16x512xf32, #tpu.memory_space<vmem>>, vector<2x512xf32>
    %cst_243 = arith.constant dense<0.000000e+00> : vector<2x512xf32>
    %559 = tpu.matmul %556, %302, %cst_243 {dimension_numbers = #tpu.dot_dimension_numbers<[1], [0], [0], [1], [0, 0, 1, 1], [], []>} : vector<2x128xf32>, vector<128x512xf32>, vector<2x512xf32> -> vector<2x512xf32>
    %560 = arith.addf %558, %559 : vector<2x512xf32>
    %561 = vector.extract_strided_slice %560 {offsets = [0, 0], sizes = [2, 128], strides = [1, 1]} : vector<2x512xf32> to vector<2x128xf32>
    %cst_244 = arith.constant 5.000000e-01 : f32
    %562 = vector.broadcast %cst_244 : f32 to vector<2x128xf32>
    %563 = arith.mulf %562, %561 : vector<2x128xf32>
    %564 = math.tanh %563 : vector<2x128xf32>
    %cst_245 = arith.constant 5.000000e-01 : f32
    %565 = vector.broadcast %cst_245 : f32 to vector<2x128xf32>
    %566 = arith.mulf %565, %564 : vector<2x128xf32>
    %cst_246 = arith.constant 5.000000e-01 : f32
    %567 = vector.broadcast %cst_246 : f32 to vector<2x128xf32>
    %568 = arith.addf %566, %567 : vector<2x128xf32>
    %569 = vector.extract_strided_slice %560 {offsets = [0, 128], sizes = [2, 128], strides = [1, 1]} : vector<2x512xf32> to vector<2x128xf32>
    %cst_247 = arith.constant 5.000000e-01 : f32
    %570 = vector.broadcast %cst_247 : f32 to vector<2x128xf32>
    %571 = arith.mulf %570, %569 : vector<2x128xf32>
    %572 = math.tanh %571 : vector<2x128xf32>
    %cst_248 = arith.constant 5.000000e-01 : f32
    %573 = vector.broadcast %cst_248 : f32 to vector<2x128xf32>
    %574 = arith.mulf %573, %572 : vector<2x128xf32>
    %cst_249 = arith.constant 5.000000e-01 : f32
    %575 = vector.broadcast %cst_249 : f32 to vector<2x128xf32>
    %576 = arith.addf %574, %575 : vector<2x128xf32>
    %577 = vector.extract_strided_slice %560 {offsets = [0, 256], sizes = [2, 128], strides = [1, 1]} : vector<2x512xf32> to vector<2x128xf32>
    %578 = math.tanh %577 : vector<2x128xf32>
    %579 = vector.extract_strided_slice %560 {offsets = [0, 384], sizes = [2, 128], strides = [1, 1]} : vector<2x512xf32> to vector<2x128xf32>
    %cst_250 = arith.constant 5.000000e-01 : f32
    %580 = vector.broadcast %cst_250 : f32 to vector<2x128xf32>
    %581 = arith.mulf %580, %579 : vector<2x128xf32>
    %582 = math.tanh %581 : vector<2x128xf32>
    %cst_251 = arith.constant 5.000000e-01 : f32
    %583 = vector.broadcast %cst_251 : f32 to vector<2x128xf32>
    %584 = arith.mulf %583, %582 : vector<2x128xf32>
    %cst_252 = arith.constant 5.000000e-01 : f32
    %585 = vector.broadcast %cst_252 : f32 to vector<2x128xf32>
    %586 = arith.addf %584, %585 : vector<2x128xf32>
    %587 = arith.mulf %576, %554 : vector<2x128xf32>
    %588 = arith.mulf %568, %578 : vector<2x128xf32>
    %589 = arith.addf %587, %588 : vector<2x128xf32>
    %590 = math.tanh %589 : vector<2x128xf32>
    %591 = arith.mulf %586, %590 : vector<2x128xf32>
    %c14_253 = arith.constant 14 : index
    %c0_254 = arith.constant 0 : index
    %592 = vector.load %arg16[%c14_253, %c0_254] : memref<16x128xf32, #tpu.memory_space<vmem>>, vector<2x128xf32>
    tpu.vector_store %arg16[%c14_253, %c0_254], %591 {strides = array<i32>} : memref<16x128xf32, #tpu.memory_space<vmem>>, vector<2x128xf32>,
    %c1_255 = arith.constant 1 : index
    %c0_256 = arith.constant 0 : index
    %c0_257 = arith.constant 0 : index
    %593 = vector.load %arg13[%c1_255, %c0_256, %c0_257] : memref<2x2x128xf32, #tpu.memory_space<vmem>>, vector<1x2x128xf32>
    %594 = vector.shape_cast %593 : vector<1x2x128xf32> to vector<2x128xf32>
    %595 = vector.shape_cast %591 : vector<2x128xf32> to vector<1x2x128xf32>
    tpu.vector_store %arg13[%c1_255, %c0_256, %c0_257], %595 {strides = array<i32>} : memref<2x2x128xf32, #tpu.memory_space<vmem>>, vector<1x2x128xf32>,
    %c1_258 = arith.constant 1 : index
    %c0_259 = arith.constant 0 : index
    %c0_260 = arith.constant 0 : index
    %596 = vector.load %arg14[%c1_258, %c0_259, %c0_260] : memref<2x2x128xf32, #tpu.memory_space<vmem>>, vector<1x2x128xf32>
    %597 = vector.shape_cast %596 : vector<1x2x128xf32> to vector<2x128xf32>
    %598 = vector.shape_cast %589 : vector<2x128xf32> to vector<1x2x128xf32>
    tpu.vector_store %arg14[%c1_258, %c0_259, %c0_260], %598 {strides = array<i32>} : memref<2x2x128xf32, #tpu.memory_space<vmem>>, vector<1x2x128xf32>,
    %c0_261 = arith.constant 0 : index
    %c0_262 = arith.constant 0 : index
    %599 = vector.load %arg16[%c0_261, %c0_262] : memref<16x128xf32, #tpu.memory_space<vmem>>, vector<16x128xf32>
    %c0_263 = arith.constant 0 : index
    %c0_264 = arith.constant 0 : index
    %600 = vector.load %arg10[%c0_263, %c0_264] : memref<128x128xf32, #tpu.memory_space<vmem>>, vector<128x128xf32>
    %cst_265 = arith.constant dense<0.000000e+00> : vector<16x128xf32>
    %601 = tpu.matmul %599, %600, %cst_265 {dimension_numbers = #tpu.dot_dimension_numbers<[1], [0], [0], [1], [0, 0, 1, 1], [], []>} : vector<16x128xf32>, vector<128x128xf32>, vector<16x128xf32> -> vector<16x128xf32>
    %c0_266 = arith.constant 0 : index
    %c0_267 = arith.constant 0 : index
    %602 = vector.load %arg11[%c0_266, %c0_267] : memref<1x128xf32, #tpu.memory_space<vmem>>, vector<1x128xf32>
    %603 = vector.broadcast %602 : vector<1x128xf32> to vector<16x128xf32>
    %604 = arith.addf %601, %603 : vector<16x128xf32>
    %cst_268 = arith.constant dense<0xFF800000> : vector<16xf32>
    %605 = vector.multi_reduction <maximumf>, %604, %cst_268 [1] : vector<16x128xf32> to vector<16xf32>
    %606 = vector.shape_cast %605 : vector<16xf32> to vector<16x1xf32>
    %607 = vector.broadcast %606 : vector<16x1xf32> to vector<16x128xf32>
    %608 = arith.subf %604, %607 : vector<16x128xf32>
    %609 = math.exp %608 : vector<16x128xf32>
    %cst_269 = arith.constant dense<0.000000e+00> : vector<16xf32>
    %610 = vector.multi_reduction <add>, %609, %cst_269 [1] : vector<16x128xf32> to vector<16xf32>
    %611 = vector.shape_cast %610 : vector<16xf32> to vector<16x1xf32>
    %612 = math.log %611 : vector<16x1xf32>
    %613 = arith.addf %606, %612 : vector<16x1xf32>
    %614 = vector.broadcast %613 : vector<16x1xf32> to vector<16x128xf32>
    %615 = arith.subf %604, %614 : vector<16x128xf32>
    %c0_270 = arith.constant 0 : index
    %c0_271 = arith.constant 0 : index
    %616 = vector.load %arg12[%c0_270, %c0_271] : memref<16x128xf32, #tpu.memory_space<vmem>>, vector<16x128xf32>
    tpu.vector_store %arg12[%c0_270, %c0_271], %615 {strides = array<i32>} : memref<16x128xf32, #tpu.memory_space<vmem>>, vector<16x128xf32>,
    return
  }
  func.func @transform_0(%arg0: i32) -> (i32, i32) {
    %c0_i32 = arith.constant 0 : i32
    %c0_i32_0 = arith.constant 0 : i32
    return %arg0, %c0_i32 : i32, i32
  }
  func.func @transform_1(%arg0: i32) -> (i32, i32, i32) {
    %c0_i32 = arith.constant 0 : i32
    %c0_i32_0 = arith.constant 0 : i32
    %c0_i32_1 = arith.constant 0 : i32
    %c0_i32_2 = arith.constant 0 : i32
    return %c0_i32, %c0_i32_0, %c0_i32_1 : i32, i32, i32
  }
  func.func @transform_2(%arg0: i32) -> (i32, i32, i32) {
    %c0_i32 = arith.constant 0 : i32
    %c0_i32_0 = arith.constant 0 : i32
    %c0_i32_1 = arith.constant 0 : i32
    %c0_i32_2 = arith.constant 0 : i32
    return %c0_i32, %c0_i32_0, %c0_i32_1 : i32, i32, i32
  }
  func.func @transform_3(%arg0: i32) -> (i32, i32) {
    %c0_i32 = arith.constant 0 : i32
    %c0_i32_0 = arith.constant 0 : i32
    %c0_i32_1 = arith.constant 0 : i32
    return %c0_i32, %c0_i32_0 : i32, i32
  }
  func.func @transform_4(%arg0: i32) -> (i32, i32) {
    %c0_i32 = arith.constant 0 : i32
    %c0_i32_0 = arith.constant 0 : i32
    %c0_i32_1 = arith.constant 0 : i32
    return %c0_i32, %c0_i32_0 : i32, i32
  }
  func.func @transform_5(%arg0: i32) -> (i32, i32) {
    %c0_i32 = arith.constant 0 : i32
    %c0_i32_0 = arith.constant 0 : i32
    %c0_i32_1 = arith.constant 0 : i32
    return %c0_i32, %c0_i32_0 : i32, i32
  }
  func.func @transform_6(%arg0: i32) -> (i32, i32) {
    %c0_i32 = arith.constant 0 : i32
    %c0_i32_0 = arith.constant 0 : i32
    %c0_i32_1 = arith.constant 0 : i32
    return %c0_i32, %c0_i32_0 : i32, i32
  }
  func.func @transform_7(%arg0: i32) -> (i32, i32) {
    %c0_i32 = arith.constant 0 : i32
    %c0_i32_0 = arith.constant 0 : i32
    %c0_i32_1 = arith.constant 0 : i32
    return %c0_i32, %c0_i32_0 : i32, i32
  }
  func.func @transform_8(%arg0: i32) -> (i32, i32) {
    %c0_i32 = arith.constant 0 : i32
    %c0_i32_0 = arith.constant 0 : i32
    %c0_i32_1 = arith.constant 0 : i32
    return %c0_i32, %c0_i32_0 : i32, i32
  }
  func.func @transform_9(%arg0: i32) -> (i32, i32) {
    %c0_i32 = arith.constant 0 : i32
    %c0_i32_0 = arith.constant 0 : i32
    %c0_i32_1 = arith.constant 0 : i32
    return %c0_i32, %c0_i32_0 : i32, i32
  }
  func.func @transform_10(%arg0: i32) -> (i32, i32) {
    %c0_i32 = arith.constant 0 : i32
    %c0_i32_0 = arith.constant 0 : i32
    %c0_i32_1 = arith.constant 0 : i32
    return %c0_i32, %c0_i32_0 : i32, i32
  }
  func.func @transform_11(%arg0: i32) -> (i32, i32) {
    %c0_i32 = arith.constant 0 : i32
    %c0_i32_0 = arith.constant 0 : i32
    return %arg0, %c0_i32 : i32, i32
  }
  func.func @transform_12(%arg0: i32) -> (i32, i32, i32) {
    %c0_i32 = arith.constant 0 : i32
    %c0_i32_0 = arith.constant 0 : i32
    %c0_i32_1 = arith.constant 0 : i32
    %c0_i32_2 = arith.constant 0 : i32
    return %c0_i32, %c0_i32_0, %c0_i32_1 : i32, i32, i32
  }
  func.func @transform_13(%arg0: i32) -> (i32, i32, i32) {
    %c0_i32 = arith.constant 0 : i32
    %c0_i32_0 = arith.constant 0 : i32
    %c0_i32_1 = arith.constant 0 : i32
    %c0_i32_2 = arith.constant 0 : i32
    return %c0_i32, %c0_i32_0, %c0_i32_1 : i32, i32, i32
  }
}

</mosaic_0001>

<llo_original>
// kernel: tpu_custom_call.1
$region0: #{tpu_custom_call.1}
  #allocation0 [shape = 'u32[]', space=smem, size = 0x4, offset = 0x4, fixed_abs, tag = 'smem constant byte address 0x4 - core index']
  #allocation1 [shape = 'u32[144,128]{1,0:T(1,128)}', space=vmem, size = 0x12000, scoped, tag = 'internal scratch']
  #allocation2 [shape = 'f32[16,512]{1,0:T(8,128)}', space=vmem, size = 0x8000, scoped, tag = 'scratch operand']
  #allocation3 [shape = 'f32[16,128]{1,0:T(8,128)}', space=vmem, size = 0x2000, scoped, tag = 'scratch operand']
  %s0 = inlined_call_operand.hbm [shape: f32[16,128], index: 0, kind: input, shape index: {}]
  %s1 = inlined_call_operand.hbm [shape: f32[2,2,128], index: 1, kind: input, shape index: {}]
  %s2 = inlined_call_operand.hbm [shape: f32[2,2,128], index: 2, kind: input, shape index: {}]
  %s3 = inlined_call_operand.hbm [shape: f32[128,512], index: 3, kind: input, shape index: {}]
  %s4 = inlined_call_operand.hbm [shape: f32[128,512], index: 4, kind: input, shape index: {}]
  %s5 = inlined_call_operand.vmem [shape: f32[1,512], index: 5, kind: input, shape index: {}]
  %s6 = inlined_call_operand.hbm [shape: f32[128,512], index: 6, kind: input, shape index: {}]
  %s7 = inlined_call_operand.hbm [shape: f32[128,512], index: 7, kind: input, shape index: {}]
  %s8 = inlined_call_operand.vmem [shape: f32[1,512], index: 8, kind: input, shape index: {}]
  %s9 = inlined_call_operand.hbm [shape: f32[128,128], index: 9, kind: input, shape index: {}]
  %s10 = inlined_call_operand.vmem [shape: f32[1,128], index: 10, kind: input, shape index: {}]
  %s11 = inlined_call_operand.hbm [shape: f32[16,128], index: 11, kind: output, shape index: {0}]
  %s12 = inlined_call_operand.hbm [shape: f32[2,2,128], index: 12, kind: output, shape index: {1}]
  %s13 = inlined_call_operand.hbm [shape: f32[2,2,128], index: 13, kind: output, shape index: {2}]
  %14 = xla_tuple %s11, %s12, %s13
  %s15 = sld [smem:[#allocation0]]
  $region106: #{tpu_custom_call.1} parent=0
    _
  %s17 = ssub.s32 1, %s15
  %s18 = scalar_select 0, %s17, %s15
  $region1: #{tpu_custom_call.1} parent=0
    #allocation4 [shape = 'u8[8192]{0}', space=vmem, size = 0x2000, scoped, tag = 'input window, operand 0, single buffered']
    #allocation5 [shape = 's32[1]{0}', space=sflag, size = 0x4, scoped, tag = 'scoped memory for tpu_custom_call.1']
    #allocation6 [shape = 's32[1]{0}', space=sflag, size = 0x4, scoped, tag = 'scoped memory for tpu_custom_call.1']
    #allocation7 [shape = 'u8[2048]{0}', space=vmem, size = 0x800, scoped, tag = 'input window, operand 1, single buffered']
    #allocation8 [shape = 's32[1]{0}', space=sflag, size = 0x4, scoped, tag = 'scoped memory for tpu_custom_call.1']
    #allocation9 [shape = 'u8[2048]{0}', space=vmem, size = 0x800, scoped, tag = 'input window, operand 2, single buffered']
    #allocation10 [shape = 'u8[262144]{0}', space=vmem, size = 0x40000, scoped, tag = 'input window, operand 3, single buffered']
    #allocation11 [shape = 's32[1]{0}', space=sflag, size = 0x4, scoped, tag = 'scoped memory for tpu_custom_call.1']
    #allocation12 [shape = 'u8[262144]{0}', space=vmem, size = 0x40000, scoped, tag = 'input window, operand 4, single buffered']
    #allocation13 [shape = 'u8[262144]{0}', space=vmem, size = 0x40000, scoped, tag = 'input window, operand 6, single buffered']
    #allocation14 [shape = 's32[1]{0}', space=sflag, size = 0x4, scoped, tag = 'scoped memory for tpu_custom_call.1']
    #allocation15 [shape = 'u8[262144]{0}', space=vmem, size = 0x40000, scoped, tag = 'input window, operand 7, single buffered']
    #allocation16 [shape = 'u8[65536]{0}', space=vmem, size = 0x10000, scoped, tag = 'input window, operand 9, single buffered']
    #allocation17 [shape = 's32[1]{0}', space=sflag, size = 0x4, scoped, tag = 'scoped memory for tpu_custom_call.1']
    #allocation18 [shape = 'u8[8192]{0}', space=vmem, size = 0x2000, scoped, tag = 'output window, operand 0, single buffered']
    #allocation19 [shape = 'u8[2048]{0}', space=vmem, size = 0x800, scoped, tag = 'output window, operand 1, single buffered']
    #allocation20 [shape = 's32[1]{0}', space=sflag, size = 0x4, scoped, tag = 'scoped memory for tpu_custom_call.1']
    #allocation21 [shape = 'u8[2048]{0}', space=vmem, size = 0x800, scoped, tag = 'output window, operand 2, single buffered']
    %19 = vsyncpa [#allocation5], 0
    %20 = vsyncpa [#allocation8], 0
    %21 = vsyncpa [#allocation11], 0
    %22 = vsyncpa [#allocation14], 0
    %23 = vsyncpa [#allocation17], 0
    %24 = vsyncpa [#allocation6], 0
    %25 = vsyncpa [#allocation20], 0
    // Predicated region
    $region2: #{tpu_custom_call.1} parent=1 // pred_check
      _
    $region3: #{tpu_custom_call.1} parent=1 // pred_check_branch
      %27 = sbr.rel (0) target = $region5
    $region4: #{tpu_custom_call.1} parent=1 // pred_region
      %s29 = ssub.s32 256, 256
      %30 = vsyncadd [#allocation5], %s29
      %s31 = sshll.u32 [#allocation4], 4
      %s32 = int_to_ptr.vmem [resolvable:$true] %s31
      %37 = dma.hbm_to_vmem [thread:$0]  %s0, 256, %s32, [#allocation5], 128, 128, 8
    $region5: #{tpu_custom_call.1} parent=1 // pred_fallthru
      _
    // Predicated region
    $region6: #{tpu_custom_call.1} parent=1 // pred_check
      _
    $region7: #{tpu_custom_call.1} parent=1 // pred_check_branch
      %39 = sbr.rel (0) target = $region9
    $region8: #{tpu_custom_call.1} parent=1 // pred_region
      %s41 = ssub.s32 64, 64
      %42 = vsyncadd [#allocation8], %s41
      %s43 = sshll.u32 [#allocation7], 4
      %s44 = int_to_ptr.vmem [resolvable:$true] %s43
      %49 = dma.hbm_to_vmem [thread:$0]  %s1, 64, %s44, [#allocation8], 32, 32, 2
    $region9: #{tpu_custom_call.1} parent=1 // pred_fallthru
      _
    // Predicated region
    $region10: #{tpu_custom_call.1} parent=1 // pred_check
      _
    $region11: #{tpu_custom_call.1} parent=1 // pred_check_branch
      %51 = sbr.rel (0) target = $region13
    $region12: #{tpu_custom_call.1} parent=1 // pred_region
      %s53 = ssub.s32 64, 64
      %54 = vsyncadd [#allocation8], %s53
      %s55 = sshll.u32 [#allocation9], 4
      %s56 = int_to_ptr.vmem [resolvable:$true] %s55
      %61 = dma.hbm_to_vmem [thread:$0]  %s2, 64, %s56, [#allocation8], 32, 32, 2
    $region13: #{tpu_custom_call.1} parent=1 // pred_fallthru
      _
    // Predicated region
    $region14: #{tpu_custom_call.1} parent=1 // pred_check
      _
    $region15: #{tpu_custom_call.1} parent=1 // pred_check_branch
      %63 = sbr.rel (0) target = $region17
    $region16: #{tpu_custom_call.1} parent=1 // pred_region
      %s65 = ssub.s32 8192, 8192
      %66 = vsyncadd [#allocation11], %s65
      %s67 = sshll.u32 [#allocation10], 4
      %s68 = int_to_ptr.vmem [resolvable:$true] %s67
      %73 = dma.hbm_to_vmem [thread:$0]  %s3, 8192, %s68, [#allocation11], 512, 512, 32
    $region17: #{tpu_custom_call.1} parent=1 // pred_fallthru
      _
    // Predicated region
    $region18: #{tpu_custom_call.1} parent=1 // pred_check
      _
    $region19: #{tpu_custom_call.1} parent=1 // pred_check_branch
      %75 = sbr.rel (0) target = $region21
    $region20: #{tpu_custom_call.1} parent=1 // pred_region
      %s77 = ssub.s32 8192, 8192
      %78 = vsyncadd [#allocation11], %s77
      %s79 = sshll.u32 [#allocation12], 4
      %s80 = int_to_ptr.vmem [resolvable:$true] %s79
      %85 = dma.hbm_to_vmem [thread:$0]  %s4, 8192, %s80, [#allocation11], 512, 512, 32
    $region21: #{tpu_custom_call.1} parent=1 // pred_fallthru
      _
    // Predicated region
    $region22: #{tpu_custom_call.1} parent=1 // pred_check
      _
    $region23: #{tpu_custom_call.1} parent=1 // pred_check_branch
      %87 = sbr.rel (0) target = $region25
    $region24: #{tpu_custom_call.1} parent=1 // pred_region
      _
    $region25: #{tpu_custom_call.1} parent=1 // pred_fallthru
      _
    // Predicated region
    $region26: #{tpu_custom_call.1} parent=1 // pred_check
      _
    $region27: #{tpu_custom_call.1} parent=1 // pred_check_branch
      %89 = sbr.rel (0) target = $region29
    $region28: #{tpu_custom_call.1} parent=1 // pred_region
      %s91 = ssub.s32 8192, 8192
      %92 = vsyncadd [#allocation14], %s91
      %s93 = sshll.u32 [#allocation13], 4
      %s94 = int_to_ptr.vmem [resolvable:$true] %s93
      %99 = dma.hbm_to_vmem [thread:$0]  %s6, 8192, %s94, [#allocation14], 512, 512, 32
    $region29: #{tpu_custom_call.1} parent=1 // pred_fallthru
      _
    // Predicated region
    $region30: #{tpu_custom_call.1} parent=1 // pred_check
      _
    $region31: #{tpu_custom_call.1} parent=1 // pred_check_branch
      %101 = sbr.rel (0) target = $region33
    $region32: #{tpu_custom_call.1} parent=1 // pred_region
      %s103 = ssub.s32 8192, 8192
      %104 = vsyncadd [#allocation14], %s103
      %s105 = sshll.u32 [#allocation15], 4
      %s106 = int_to_ptr.vmem [resolvable:$true] %s105
      %111 = dma.hbm_to_vmem [thread:$0]  %s7, 8192, %s106, [#allocation14], 512, 512, 32
    $region33: #{tpu_custom_call.1} parent=1 // pred_fallthru
      _
    // Predicated region
    $region34: #{tpu_custom_call.1} parent=1 // pred_check
      _
    $region35: #{tpu_custom_call.1} parent=1 // pred_check_branch
      %113 = sbr.rel (0) target = $region37
    $region36: #{tpu_custom_call.1} parent=1 // pred_region
      _
    $region37: #{tpu_custom_call.1} parent=1 // pred_fallthru
      _
    // Predicated region
    $region38: #{tpu_custom_call.1} parent=1 // pred_check
      _
    $region39: #{tpu_custom_call.1} parent=1 // pred_check_branch
      %115 = sbr.rel (0) target = $region41
    $region40: #{tpu_custom_call.1} parent=1 // pred_region
      %s117 = ssub.s32 2048, 2048
      %118 = vsyncadd [#allocation17], %s117
      %s119 = sshll.u32 [#allocation16], 4
      %s120 = int_to_ptr.vmem [resolvable:$true] %s119
      %125 = dma.hbm_to_vmem [thread:$0]  %s9, 2048, %s120, [#allocation17], 128, 128, 8
    $region41: #{tpu_custom_call.1} parent=1 // pred_fallthru
      _
    // Predicated region
    $region42: #{tpu_custom_call.1} parent=1 // pred_check
      _
    $region43: #{tpu_custom_call.1} parent=1 // pred_check_branch
      %127 = sbr.rel (0) target = $region45
    $region44: #{tpu_custom_call.1} parent=1 // pred_region
      _
    $region45: #{tpu_custom_call.1} parent=1 // pred_fallthru
      _
    // Predicated region
    $region46: #{tpu_custom_call.1} parent=1 // pred_check
      _
    $region47: #{tpu_custom_call.1} parent=1 // pred_check_branch
      %129 = sbr.rel (0) target = $region49
    $region48: #{tpu_custom_call.1} parent=1 // pred_region
      %130 = dma.done [#allocation5], 256
    $region49: #{tpu_custom_call.1} parent=1 // pred_fallthru
      _
    // Predicated region
    $region50: #{tpu_custom_call.1} parent=1 // pred_check
      _
    $region51: #{tpu_custom_call.1} parent=1 // pred_check_branch
      %132 = sbr.rel (0) target = $region53
    $region52: #{tpu_custom_call.1} parent=1 // pred_region
      %133 = dma.done [#allocation8], 64
    $region53: #{tpu_custom_call.1} parent=1 // pred_fallthru
      _
    // Predicated region
    $region54: #{tpu_custom_call.1} parent=1 // pred_check
      _
    $region55: #{tpu_custom_call.1} parent=1 // pred_check_branch
      %135 = sbr.rel (0) target = $region57
    $region56: #{tpu_custom_call.1} parent=1 // pred_region
      %136 = dma.done [#allocation8], 64
    $region57: #{tpu_custom_call.1} parent=1 // pred_fallthru
      _
    // Predicated region
    $region58: #{tpu_custom_call.1} parent=1 // pred_check
      _
    $region59: #{tpu_custom_call.1} parent=1 // pred_check_branch
      %138 = sbr.rel (0) target = $region61
    $region60: #{tpu_custom_call.1} parent=1 // pred_region
      %139 = dma.done [#allocation11], 8192
    $region61: #{tpu_custom_call.1} parent=1 // pred_fallthru
      _
    // Predicated region
    $region62: #{tpu_custom_call.1} parent=1 // pred_check
      _
    $region63: #{tpu_custom_call.1} parent=1 // pred_check_branch
      %141 = sbr.rel (0) target = $region65
    $region64: #{tpu_custom_call.1} parent=1 // pred_region
      %142 = dma.done [#allocation11], 8192
    $region65: #{tpu_custom_call.1} parent=1 // pred_fallthru
      _
    // Predicated region
    $region66: #{tpu_custom_call.1} parent=1 // pred_check
      _
    $region67: #{tpu_custom_call.1} parent=1 // pred_check_branch
      %144 = sbr.rel (0) target = $region69
    $region68: #{tpu_custom_call.1} parent=1 // pred_region
      %145 = dma.done [#allocation14], 8192
    $region69: #{tpu_custom_call.1} parent=1 // pred_fallthru
      _
    // Predicated region
    $region70: #{tpu_custom_call.1} parent=1 // pred_check
      _
    $region71: #{tpu_custom_call.1} parent=1 // pred_check_branch
      %147 = sbr.rel (0) target = $region73
    $region72: #{tpu_custom_call.1} parent=1 // pred_region
      %148 = dma.done [#allocation14], 8192
    $region73: #{tpu_custom_call.1} parent=1 // pred_fallthru
      _
    // Predicated region
    $region74: #{tpu_custom_call.1} parent=1 // pred_check
      _
    $region75: #{tpu_custom_call.1} parent=1 // pred_check_branch
      %150 = sbr.rel (0) target = $region77
    $region76: #{tpu_custom_call.1} parent=1 // pred_region
      %151 = dma.done [#allocation17], 2048
    $region77: #{tpu_custom_call.1} parent=1 // pred_fallthru
      _
    %p152 = scmp.eq.s32.totalorder 0, 0
    // Predicated region
    $region78: #{tpu_custom_call.1} parent=1 // pred_check
      %p153 = pneg %p152
    $region79: #{tpu_custom_call.1} parent=1 // pred_check_branch
      %155 = sbr.rel (%p153) target = $region81
    $region80: #{tpu_custom_call.1} parent=1 // pred_region
      %v156 = vld [vmem:[#allocation7] sm:$0x3]
      %v157 = vld [vmem:[#allocation7 + $0x2] sm:$0x3]
      %158 = vst [vmem:[#allocation19] sm:$0x3] %v156
      %159 = vst [vmem:[#allocation19 + $0x2] sm:$0x3] %v157
      %v160 = vld [vmem:[#allocation9] sm:$0x3]
      %v161 = vld [vmem:[#allocation9 + $0x2] sm:$0x3]
      %162 = vst [vmem:[#allocation21] sm:$0x3] %v160
      %163 = vst [vmem:[#allocation21 + $0x2] sm:$0x3] %v161
    $region81: #{tpu_custom_call.1} parent=1 // pred_fallthru
      _
    %v164 = vld [vmem:[#allocation10] sm:$0xff]
    %v165 = vld [vmem:[#allocation10 + $0x8] sm:$0xff]
    %v166 = vld [vmem:[#allocation10 + $0x10] sm:$0xff]
    %v167 = vld [vmem:[#allocation10 + $0x18] sm:$0xff]
    %v168 = vld [vmem:[#allocation10 + $0x20] sm:$0xff]
    %v169 = vld [vmem:[#allocation10 + $0x28] sm:$0xff]
    %v170 = vld [vmem:[#allocation10 + $0x30] sm:$0xff]
    %v171 = vld [vmem:[#allocation10 + $0x38] sm:$0xff]
    %v172 = vld [vmem:[#allocation10 + $0x40] sm:$0xff]
    %v173 = vld [vmem:[#allocation10 + $0x48] sm:$0xff]
    %v174 = vld [vmem:[#allocation10 + $0x50] sm:$0xff]
    %v175 = vld [vmem:[#allocation10 + $0x58] sm:$0xff]
    %v176 = vld [vmem:[#allocation10 + $0x60] sm:$0xff]
    %v177 = vld [vmem:[#allocation10 + $0x68] sm:$0xff]
    %v178 = vld [vmem:[#allocation10 + $0x70] sm:$0xff]
    %v179 = vld [vmem:[#allocation10 + $0x78] sm:$0xff]
    %v180 = vld [vmem:[#allocation10 + $0x80] sm:$0xff]
    %v181 = vld [vmem:[#allocation10 + $0x88] sm:$0xff]
    %v182 = vld [vmem:[#allocation10 + $0x90] sm:$0xff]
    %v183 = vld [vmem:[#allocation10 + $0x98] sm:$0xff]
    %v184 = vld [vmem:[#allocation10 + $0xa0] sm:$0xff]
    %v185 = vld [vmem:[#allocation10 + $0xa8] sm:$0xff]
    %v186 = vld [vmem:[#allocation10 + $0xb0] sm:$0xff]
    %v187 = vld [vmem:[#allocation10 + $0xb8] sm:$0xff]
    %v188 = vld [vmem:[#allocation10 + $0xc0] sm:$0xff]
    %v189 = vld [vmem:[#allocation10 + $0xc8] sm:$0xff]
    %v190 = vld [vmem:[#allocation10 + $0xd0] sm:$0xff]
    %v191 = vld [vmem:[#allocation10 + $0xd8] sm:$0xff]
    %v192 = vld [vmem:[#allocation10 + $0xe0] sm:$0xff]
    %v193 = vld [vmem:[#allocation10 + $0xe8] sm:$0xff]
    %v194 = vld [vmem:[#allocation10 + $0xf0] sm:$0xff]
    %v195 = vld [vmem:[#allocation10 + $0xf8] sm:$0xff]
    %v196 = vld [vmem:[#allocation10 + $0x100] sm:$0xff]
    %v197 = vld [vmem:[#allocation10 + $0x108] sm:$0xff]
    %v198 = vld [vmem:[#allocation10 + $0x110] sm:$0xff]
    %v199 = vld [vmem:[#allocation10 + $0x118] sm:$0xff]
    %v200 = vld [vmem:[#allocation10 + $0x120] sm:$0xff]
    %v201 = vld [vmem:[#allocation10 + $0x128] sm:$0xff]
    %v202 = vld [vmem:[#allocation10 + $0x130] sm:$0xff]
    %v203 = vld [vmem:[#allocation10 + $0x138] sm:$0xff]
    %v204 = vld [vmem:[#allocation10 + $0x140] sm:$0xff]
    %v205 = vld [vmem:[#allocation10 + $0x148] sm:$0xff]
    %v206 = vld [vmem:[#allocation10 + $0x150] sm:$0xff]
    %v207 = vld [vmem:[#allocation10 + $0x158] sm:$0xff]
    %v208 = vld [vmem:[#allocation10 + $0x160] sm:$0xff]
    %v209 = vld [vmem:[#allocation10 + $0x168] sm:$0xff]
    %v210 = vld [vmem:[#allocation10 + $0x170] sm:$0xff]
    %v211 = vld [vmem:[#allocation10 + $0x178] sm:$0xff]
    %v212 = vld [vmem:[#allocation10 + $0x180] sm:$0xff]
    %v213 = vld [vmem:[#allocation10 + $0x188] sm:$0xff]
    %v214 = vld [vmem:[#allocation10 + $0x190] sm:$0xff]
    %v215 = vld [vmem:[#allocation10 + $0x198] sm:$0xff]
    %v216 = vld [vmem:[#allocation10 + $0x1a0] sm:$0xff]
    %v217 = vld [vmem:[#allocation10 + $0x1a8] sm:$0xff]
    %v218 = vld [vmem:[#allocation10 + $0x1b0] sm:$0xff]
    %v219 = vld [vmem:[#allocation10 + $0x1b8] sm:$0xff]
    %v220 = vld [vmem:[#allocation10 + $0x1c0] sm:$0xff]
    %v221 = vld [vmem:[#allocation10 + $0x1c8] sm:$0xff]
    %v222 = vld [vmem:[#allocation10 + $0x1d0] sm:$0xff]
    %v223 = vld [vmem:[#allocation10 + $0x1d8] sm:$0xff]
    %v224 = vld [vmem:[#allocation10 + $0x1e0] sm:$0xff]
    %v225 = vld [vmem:[#allocation10 + $0x1e8] sm:$0xff]
    %v226 = vld [vmem:[#allocation10 + $0x1f0] sm:$0xff]
    %v227 = vld [vmem:[#allocation10 + $0x1f8] sm:$0xff]
    %v228 = vld [vmem:[#allocation12] sm:$0xff]
    %v229 = vld [vmem:[#allocation12 + $0x8] sm:$0xff]
    %v230 = vld [vmem:[#allocation12 + $0x10] sm:$0xff]
    %v231 = vld [vmem:[#allocation12 + $0x18] sm:$0xff]
    %v232 = vld [vmem:[#allocation12 + $0x20] sm:$0xff]
    %v233 = vld [vmem:[#allocation12 + $0x28] sm:$0xff]
    %v234 = vld [vmem:[#allocation12 + $0x30] sm:$0xff]
    %v235 = vld [vmem:[#allocation12 + $0x38] sm:$0xff]
    %v236 = vld [vmem:[#allocation12 + $0x40] sm:$0xff]
    %v237 = vld [vmem:[#allocation12 + $0x48] sm:$0xff]
    %v238 = vld [vmem:[#allocation12 + $0x50] sm:$0xff]
    %v239 = vld [vmem:[#allocation12 + $0x58] sm:$0xff]
    %v240 = vld [vmem:[#allocation12 + $0x60] sm:$0xff]
    %v241 = vld [vmem:[#allocation12 + $0x68] sm:$0xff]
    %v242 = vld [vmem:[#allocation12 + $0x70] sm:$0xff]
    %v243 = vld [vmem:[#allocation12 + $0x78] sm:$0xff]
    %v244 = vld [vmem:[#allocation12 + $0x80] sm:$0xff]
    %v245 = vld [vmem:[#allocation12 + $0x88] sm:$0xff]
    %v246 = vld [vmem:[#allocation12 + $0x90] sm:$0xff]
    %v247 = vld [vmem:[#allocation12 + $0x98] sm:$0xff]
    %v248 = vld [vmem:[#allocation12 + $0xa0] sm:$0xff]
    %v249 = vld [vmem:[#allocation12 + $0xa8] sm:$0xff]
    %v250 = vld [vmem:[#allocation12 + $0xb0] sm:$0xff]
    %v251 = vld [vmem:[#allocation12 + $0xb8] sm:$0xff]
    %v252 = vld [vmem:[#allocation12 + $0xc0] sm:$0xff]
    %v253 = vld [vmem:[#allocation12 + $0xc8] sm:$0xff]
    %v254 = vld [vmem:[#allocation12 + $0xd0] sm:$0xff]
    %v255 = vld [vmem:[#allocation12 + $0xd8] sm:$0xff]
    %v256 = vld [vmem:[#allocation12 + $0xe0] sm:$0xff]
    %v257 = vld [vmem:[#allocation12 + $0xe8] sm:$0xff]
    %v258 = vld [vmem:[#allocation12 + $0xf0] sm:$0xff]
    %v259 = vld [vmem:[#allocation12 + $0xf8] sm:$0xff]
    %v260 = vld [vmem:[#allocation12 + $0x100] sm:$0xff]
    %v261 = vld [vmem:[#allocation12 + $0x108] sm:$0xff]
    %v262 = vld [vmem:[#allocation12 + $0x110] sm:$0xff]
    %v263 = vld [vmem:[#allocation12 + $0x118] sm:$0xff]
    %v264 = vld [vmem:[#allocation12 + $0x120] sm:$0xff]
    %v265 = vld [vmem:[#allocation12 + $0x128] sm:$0xff]
    %v266 = vld [vmem:[#allocation12 + $0x130] sm:$0xff]
    %v267 = vld [vmem:[#allocation12 + $0x138] sm:$0xff]
    %v268 = vld [vmem:[#allocation12 + $0x140] sm:$0xff]
    %v269 = vld [vmem:[#allocation12 + $0x148] sm:$0xff]
    %v270 = vld [vmem:[#allocation12 + $0x150] sm:$0xff]
    %v271 = vld [vmem:[#allocation12 + $0x158] sm:$0xff]
    %v272 = vld [vmem:[#allocation12 + $0x160] sm:$0xff]
    %v273 = vld [vmem:[#allocation12 + $0x168] sm:$0xff]
    %v274 = vld [vmem:[#allocation12 + $0x170] sm:$0xff]
    %v275 = vld [vmem:[#allocation12 + $0x178] sm:$0xff]
    %v276 = vld [vmem:[#allocation12 + $0x180] sm:$0xff]
    %v277 = vld [vmem:[#allocation12 + $0x188] sm:$0xff]
    %v278 = vld [vmem:[#allocation12 + $0x190] sm:$0xff]
    %v279 = vld [vmem:[#allocation12 + $0x198] sm:$0xff]
    %v280 = vld [vmem:[#allocation12 + $0x1a0] sm:$0xff]
    %v281 = vld [vmem:[#allocation12 + $0x1a8] sm:$0xff]
    %v282 = vld [vmem:[#allocation12 + $0x1b0] sm:$0xff]
    %v283 = vld [vmem:[#allocation12 + $0x1b8] sm:$0xff]
    %v284 = vld [vmem:[#allocation12 + $0x1c0] sm:$0xff]
    %v285 = vld [vmem:[#allocation12 + $0x1c8] sm:$0xff]
    %v286 = vld [vmem:[#allocation12 + $0x1d0] sm:$0xff]
    %v287 = vld [vmem:[#allocation12 + $0x1d8] sm:$0xff]
    %v288 = vld [vmem:[#allocation12 + $0x1e0] sm:$0xff]
    %v289 = vld [vmem:[#allocation12 + $0x1e8] sm:$0xff]
    %v290 = vld [vmem:[#allocation12 + $0x1f0] sm:$0xff]
    %v291 = vld [vmem:[#allocation12 + $0x1f8] sm:$0xff]
    %v292 = vld [vmem:[%s5] sm:$0xf]
    %v293 = vld [vmem:[#allocation4] sm:$0xff]
    %v294 = vld [vmem:[#allocation4 + $0x8] sm:$0xff]
    %v296 = vlaneseq
    %v297 = vshrl.u32 %v296, 7
    %v298 = vsub.s32 0, %v297
    %v299 = vrot.slane %v292, %v298
    %v300 = vlaneseq
    %v301 = vshrl.u32 %v300, 7
    %v302 = vsub.s32 1, %v301
    %v303 = vrot.slane %v292, %v302
    %v304 = vlaneseq
    %v305 = vshrl.u32 %v304, 7
    %v306 = vsub.s32 2, %v305
    %v307 = vrot.slane %v292, %v306
    %v308 = vlaneseq
    %v309 = vshrl.u32 %v308, 7
    %v310 = vsub.s32 3, %v309
    %v311 = vrot.slane %v292, %v310
    %316 = vmatprep.subr.mxu0 %v225
    %317 = vmatpush1.msra.mxu0 %v224
    %318 = vmatprep.subr.mxu0 %v221
    %319 = vmatpush1.msra.mxu0 %v220
    %320 = vmatprep.subr.mxu0 %v217
    %321 = vmatpush1.msra.mxu0 %v216
    %322 = vmatprep.subr.mxu0 %v213
    %323 = vmatpush1.msra.mxu0 %v212
    %324 = vmatprep.subr.mxu0 %v209
    %325 = vmatpush1.msra.mxu0 %v208
    %326 = vmatprep.subr.mxu0 %v205
    %327 = vmatpush1.msra.mxu0 %v204
    %328 = vmatprep.subr.mxu0 %v201
    %329 = vmatpush1.msra.mxu0 %v200
    %330 = vmatprep.subr.mxu0 %v197
    %331 = vmatpush1.msra.mxu0 %v196
    %332 = vmatprep.subr.mxu0 %v193
    %333 = vmatpush1.msra.mxu0 %v192
    %334 = vmatprep.subr.mxu0 %v189
    %335 = vmatpush1.msra.mxu0 %v188
    %336 = vmatprep.subr.mxu0 %v185
    %337 = vmatpush1.msra.mxu0 %v184
    %338 = vmatprep.subr.mxu0 %v181
    %339 = vmatpush1.msra.mxu0 %v180
    %340 = vmatprep.subr.mxu0 %v177
    %341 = vmatpush1.msra.mxu0 %v176
    %342 = vmatprep.subr.mxu0 %v173
    %343 = vmatpush1.msra.mxu0 %v172
    %344 = vmatprep.subr.mxu0 %v169
    %345 = vmatpush1.msra.mxu0 %v168
    %346 = vmatprep.subr.mxu0 %v165
    %347 = vmatpush1.msra.mxu0 %v164
    %348 = vmatprep.subr.mxu0 0.0
    %349 = vmatpush2.msra.mxu0 0.0
    %350 = vmatprep.subr.mxu0 0.0
    %351 = vmatpush2.msra.mxu0 0.0
    %352 = vmatprep.subr.mxu0 0.0
    %353 = vmatpush2.msra.mxu0 0.0
    %354 = vmatprep.subr.mxu0 0.0
    %355 = vmatpush2.msra.mxu0 0.0
    %356 = vmatprep.subr.mxu0 0.0
    %357 = vmatpush2.msra.mxu0 0.0
    %358 = vmatprep.subr.mxu0 0.0
    %359 = vmatpush2.msra.mxu0 0.0
    %360 = vmatprep.subr.mxu0 0.0
    %361 = vmatpush2.msra.mxu0 0.0
    %362 = vmatprep.subr.mxu0 0.0
    %363 = vmatpush2.msra.mxu0 0.0
    %364 = vmatprep.subr.mxu0 0.0
    %365 = vmatpush2.msra.mxu0 0.0
    %366 = vmatprep.subr.mxu0 0.0
    %367 = vmatpush2.msra.mxu0 0.0
    %368 = vmatprep.subr.mxu0 0.0
    %369 = vmatpush2.msra.mxu0 0.0
    %370 = vmatprep.subr.mxu0 0.0
    %371 = vmatpush2.msra.mxu0 0.0
    %372 = vmatprep.subr.mxu0 0.0
    %373 = vmatpush2.msra.mxu0 0.0
    %374 = vmatprep.subr.mxu0 0.0
    %375 = vmatpush2.msra.mxu0 0.0
    %376 = vmatprep.subr.mxu0 0.0
    %377 = vmatpush2.msra.mxu0 0.0
    %378 = vmatprep.subr.mxu0 0.0
    %379 = vmatpush2.msra.mxu0 0.0
    %380 = vmatprep.mubr.f32.mxu0 0.0
    %381 = vmatmul.mubr.f32.gmra.mxu0 %v293
    %v382 = vpop.f32.mrf.mxu0
    %v383 = vadd.f32 %v299, %v382
    %v384 = vpop.f32.mrf.mxu0
    %v385 = vadd.f32 %v303, %v384
    %386 = vmatprep.mubr.f32.mxu0 0.0
    %387 = vmatmul.mubr.f32.gmra.mxu0 %v294
    %v388 = vpop.f32.mrf.mxu0
    %v389 = vadd.f32 %v299, %v388
    %v390 = vpop.f32.mrf.mxu0
    %v391 = vadd.f32 %v303, %v390
    %392 = vdwg.mxu0
    %393 = vmatprep.subr.mxu0 %v227
    %394 = vmatpush1.msra.mxu0 %v226
    %395 = vmatprep.subr.mxu0 %v223
    %396 = vmatpush1.msra.mxu0 %v222
    %397 = vmatprep.subr.mxu0 %v219
    %398 = vmatpush1.msra.mxu0 %v218
    %399 = vmatprep.subr.mxu0 %v215
    %400 = vmatpush1.msra.mxu0 %v214
    %401 = vmatprep.subr.mxu0 %v211
    %402 = vmatpush1.msra.mxu0 %v210
    %403 = vmatprep.subr.mxu0 %v207
    %404 = vmatpush1.msra.mxu0 %v206
    %405 = vmatprep.subr.mxu0 %v203
    %406 = vmatpush1.msra.mxu0 %v202
    %407 = vmatprep.subr.mxu0 %v199
    %408 = vmatpush1.msra.mxu0 %v198
    %409 = vmatprep.subr.mxu0 %v195
    %410 = vmatpush1.msra.mxu0 %v194
    %411 = vmatprep.subr.mxu0 %v191
    %412 = vmatpush1.msra.mxu0 %v190
    %413 = vmatprep.subr.mxu0 %v187
    %414 = vmatpush1.msra.mxu0 %v186
    %415 = vmatprep.subr.mxu0 %v183
    %416 = vmatpush1.msra.mxu0 %v182
    %417 = vmatprep.subr.mxu0 %v179
    %418 = vmatpush1.msra.mxu0 %v178
    %419 = vmatprep.subr.mxu0 %v175
    %420 = vmatpush1.msra.mxu0 %v174
    %421 = vmatprep.subr.mxu0 %v171
    %422 = vmatpush1.msra.mxu0 %v170
    %423 = vmatprep.subr.mxu0 %v167
    %424 = vmatpush1.msra.mxu0 %v166
    %425 = vmatprep.subr.mxu0 0.0
    %426 = vmatpush2.msra.mxu0 0.0
    %427 = vmatprep.subr.mxu0 0.0
    %428 = vmatpush2.msra.mxu0 0.0
    %429 = vmatprep.subr.mxu0 0.0
    %430 = vmatpush2.msra.mxu0 0.0
    %431 = vmatprep.subr.mxu0 0.0
    %432 = vmatpush2.msra.mxu0 0.0
    %433 = vmatprep.subr.mxu0 0.0
    %434 = vmatpush2.msra.mxu0 0.0
    %435 = vmatprep.subr.mxu0 0.0
    %436 = vmatpush2.msra.mxu0 0.0
    %437 = vmatprep.subr.mxu0 0.0
    %438 = vmatpush2.msra.mxu0 0.0
    %439 = vmatprep.subr.mxu0 0.0
    %440 = vmatpush2.msra.mxu0 0.0
    %441 = vmatprep.subr.mxu0 0.0
    %442 = vmatpush2.msra.mxu0 0.0
    %443 = vmatprep.subr.mxu0 0.0
    %444 = vmatpush2.msra.mxu0 0.0
    %445 = vmatprep.subr.mxu0 0.0
    %446 = vmatpush2.msra.mxu0 0.0
    %447 = vmatprep.subr.mxu0 0.0
    %448 = vmatpush2.msra.mxu0 0.0
    %449 = vmatprep.subr.mxu0 0.0
    %450 = vmatpush2.msra.mxu0 0.0
    %451 = vmatprep.subr.mxu0 0.0
    %452 = vmatpush2.msra.mxu0 0.0
    %453 = vmatprep.subr.mxu0 0.0
    %454 = vmatpush2.msra.mxu0 0.0
    %455 = vmatprep.subr.mxu0 0.0
    %456 = vmatpush2.msra.mxu0 0.0
    %457 = vmatprep.mubr.f32.mxu0 0.0
    %458 = vmatmul.mubr.f32.gmra.mxu0 %v293
    %v459 = vpop.f32.mrf.mxu0
    %v460 = vadd.f32 %v307, %v459
    %v461 = vpop.f32.mrf.mxu0
    %v462 = vadd.f32 %v311, %v461
    %463 = vmatprep.mubr.f32.mxu0 0.0
    %464 = vmatmul.mubr.f32.gmra.mxu0 %v294
    %v465 = vpop.f32.mrf.mxu0
    %v466 = vadd.f32 %v307, %v465
    %v467 = vpop.f32.mrf.mxu0
    %v468 = vadd.f32 %v311, %v467
    %469 = vdwg.mxu0
    %470 = vst [vmem:[#allocation2] sm:$0xff] %v383
    %471 = vst [vmem:[#allocation2 + $0x8] sm:$0xff] %v385
    %472 = vst [vmem:[#allocation2 + $0x10] sm:$0xff] %v460
    %473 = vst [vmem:[#allocation2 + $0x18] sm:$0xff] %v462
    %474 = vst [vmem:[#allocation2 + $0x20] sm:$0xff] %v389
    %475 = vst [vmem:[#allocation2 + $0x28] sm:$0xff] %v391
    %476 = vst [vmem:[#allocation2 + $0x30] sm:$0xff] %v466
    %477 = vst [vmem:[#allocation2 + $0x38] sm:$0xff] %v468
    %v478 = vld [vmem:[#allocation19] sm:$0x3]
    %v479 = vld [vmem:[#allocation21] sm:$0x3]
    %v480 = vld [vmem:[#allocation2] sm:$0x3]
    %v481 = vld [vmem:[#allocation2 + $0x8] sm:$0x3]
    %v482 = vld [vmem:[#allocation2 + $0x10] sm:$0x3]
    %v483 = vld [vmem:[#allocation2 + $0x18] sm:$0x3]
    %484 = vmatprep.subr.mxu0 %v289
    %485 = vmatpush1.msra.mxu0 %v288
    %486 = vmatprep.subr.mxu0 %v285
    %487 = vmatpush1.msra.mxu0 %v284
    %488 = vmatprep.subr.mxu0 %v281
    %489 = vmatpush1.msra.mxu0 %v280
    %490 = vmatprep.subr.mxu0 %v277
    %491 = vmatpush1.msra.mxu0 %v276
    %492 = vmatprep.subr.mxu0 %v273
    %493 = vmatpush1.msra.mxu0 %v272
    %494 = vmatprep.subr.mxu0 %v269
    %495 = vmatpush1.msra.mxu0 %v268
    %496 = vmatprep.subr.mxu0 %v265
    %497 = vmatpush1.msra.mxu0 %v264
    %498 = vmatprep.subr.mxu0 %v261
    %499 = vmatpush1.msra.mxu0 %v260
    %500 = vmatprep.subr.mxu0 %v257
    %501 = vmatpush1.msra.mxu0 %v256
    %502 = vmatprep.subr.mxu0 %v253
    %503 = vmatpush1.msra.mxu0 %v252
    %504 = vmatprep.subr.mxu0 %v249
    %505 = vmatpush1.msra.mxu0 %v248
    %506 = vmatprep.subr.mxu0 %v245
    %507 = vmatpush1.msra.mxu0 %v244
    %508 = vmatprep.subr.mxu0 %v241
    %509 = vmatpush1.msra.mxu0 %v240
    %510 = vmatprep.subr.mxu0 %v237
    %511 = vmatpush1.msra.mxu0 %v236
    %512 = vmatprep.subr.mxu0 %v233
    %513 = vmatpush1.msra.mxu0 %v232
    %514 = vmatprep.subr.mxu0 %v229
    %515 = vmatpush1.msra.mxu0 %v228
    %516 = vmatprep.subr.mxu0 0.0
    %517 = vmatpush2.msra.mxu0 0.0
    %518 = vmatprep.subr.mxu0 0.0
    %519 = vmatpush2.msra.mxu0 0.0
    %520 = vmatprep.subr.mxu0 0.0
    %521 = vmatpush2.msra.mxu0 0.0
    %522 = vmatprep.subr.mxu0 0.0
    %523 = vmatpush2.msra.mxu0 0.0
    %524 = vmatprep.subr.mxu0 0.0
    %525 = vmatpush2.msra.mxu0 0.0
    %526 = vmatprep.subr.mxu0 0.0
    %527 = vmatpush2.msra.mxu0 0.0
    %528 = vmatprep.subr.mxu0 0.0
    %529 = vmatpush2.msra.mxu0 0.0
    %530 = vmatprep.subr.mxu0 0.0
    %531 = vmatpush2.msra.mxu0 0.0
    %532 = vmatprep.subr.mxu0 0.0
    %533 = vmatpush2.msra.mxu0 0.0
    %534 = vmatprep.subr.mxu0 0.0
    %535 = vmatpush2.msra.mxu0 0.0
    %536 = vmatprep.subr.mxu0 0.0
    %537 = vmatpush2.msra.mxu0 0.0
    %538 = vmatprep.subr.mxu0 0.0
    %539 = vmatpush2.msra.mxu0 0.0
    %540 = vmatprep.subr.mxu0 0.0
    %541 = vmatpush2.msra.mxu0 0.0
    %542 = vmatprep.subr.mxu0 0.0
    %543 = vmatpush2.msra.mxu0 0.0
    %544 = vmatprep.subr.mxu0 0.0
    %545 = vmatpush2.msra.mxu0 0.0
    %546 = vmatprep.subr.mxu0 0.0
    %547 = vmatpush2.msra.mxu0 0.0
    %548 = vmatprep.mubr.f32.mxu0 0.0
    %549 = vmatmul.mubr.f32.gmra.mxu0 %v478
    %v550 = vpop.f32.mrf.mxu0
    %v551 = vadd.f32 0.0, %v550
    %v552 = vpop.f32.mrf.mxu0
    %v553 = vadd.f32 0.0, %v552
    %554 = vdwg.mxu0
    %555 = vmatprep.subr.mxu0 %v291
    %556 = vmatpush1.msra.mxu0 %v290
    %557 = vmatprep.subr.mxu0 %v287
    %558 = vmatpush1.msra.mxu0 %v286
    %559 = vmatprep.subr.mxu0 %v283
    %560 = vmatpush1.msra.mxu0 %v282
    %561 = vmatprep.subr.mxu0 %v279
    %562 = vmatpush1.msra.mxu0 %v278
    %563 = vmatprep.subr.mxu0 %v275
    %564 = vmatpush1.msra.mxu0 %v274
    %565 = vmatprep.subr.mxu0 %v271
    %566 = vmatpush1.msra.mxu0 %v270
    %567 = vmatprep.subr.mxu0 %v267
    %568 = vmatpush1.msra.mxu0 %v266
    %569 = vmatprep.subr.mxu0 %v263
    %570 = vmatpush1.msra.mxu0 %v262
    %571 = vmatprep.subr.mxu0 %v259
    %572 = vmatpush1.msra.mxu0 %v258
    %573 = vmatprep.subr.mxu0 %v255
    %574 = vmatpush1.msra.mxu0 %v254
    %575 = vmatprep.subr.mxu0 %v251
    %576 = vmatpush1.msra.mxu0 %v250
    %577 = vmatprep.subr.mxu0 %v247
    %578 = vmatpush1.msra.mxu0 %v246
    %579 = vmatprep.subr.mxu0 %v243
    %580 = vmatpush1.msra.mxu0 %v242
    %581 = vmatprep.subr.mxu0 %v239
    %582 = vmatpush1.msra.mxu0 %v238
    %583 = vmatprep.subr.mxu0 %v235
    %584 = vmatpush1.msra.mxu0 %v234
    %585 = vmatprep.subr.mxu0 %v231
    %586 = vmatpush1.msra.mxu0 %v230
    %587 = vmatprep.subr.mxu0 0.0
    %588 = vmatpush2.msra.mxu0 0.0
    %589 = vmatprep.subr.mxu0 0.0
    %590 = vmatpush2.msra.mxu0 0.0
    %591 = vmatprep.subr.mxu0 0.0
    %592 = vmatpush2.msra.mxu0 0.0
    %593 = vmatprep.subr.mxu0 0.0
    %594 = vmatpush2.msra.mxu0 0.0
    %595 = vmatprep.subr.mxu0 0.0
    %596 = vmatpush2.msra.mxu0 0.0
    %597 = vmatprep.subr.mxu0 0.0
    %598 = vmatpush2.msra.mxu0 0.0
    %599 = vmatprep.subr.mxu0 0.0
    %600 = vmatpush2.msra.mxu0 0.0
    %601 = vmatprep.subr.mxu0 0.0
    %602 = vmatpush2.msra.mxu0 0.0
    %603 = vmatprep.subr.mxu0 0.0
    %604 = vmatpush2.msra.mxu0 0.0
    %605 = vmatprep.subr.mxu0 0.0
    %606 = vmatpush2.msra.mxu0 0.0
    %607 = vmatprep.subr.mxu0 0.0
    %608 = vmatpush2.msra.mxu0 0.0
    %609 = vmatprep.subr.mxu0 0.0
    %610 = vmatpush2.msra.mxu0 0.0
    %611 = vmatprep.subr.mxu0 0.0
    %612 = vmatpush2.msra.mxu0 0.0
    %613 = vmatprep.subr.mxu0 0.0
    %614 = vmatpush2.msra.mxu0 0.0
    %615 = vmatprep.subr.mxu0 0.0
    %616 = vmatpush2.msra.mxu0 0.0
    %617 = vmatprep.subr.mxu0 0.0
    %618 = vmatpush2.msra.mxu0 0.0
    %619 = vmatprep.mubr.f32.mxu0 0.0
    %620 = vmatmul.mubr.f32.gmra.mxu0 %v478
    %v621 = vpop.f32.mrf.mxu0
    %v622 = vadd.f32 0.0, %v621
    %v623 = vpop.f32.mrf.mxu0
    %v624 = vadd.f32 0.0, %v623
    %625 = vdwg.mxu0
    %v626 = vadd.f32 %v480, %v551
    %v627 = vadd.f32 %v481, %v553
    %v628 = vadd.f32 %v482, %v622
    %v629 = vadd.f32 %v483, %v624
    %v630 = vmul.f32 %v626, 0.5
    %v631 = vtanh.pop %v630
    %v632 = vmul.f32 %v631, 0.5
    %v633 = vadd.f32 %v632, 0.5
    %v634 = vmul.f32 %v627, 0.5
    %v635 = vtanh.pop %v634
    %v636 = vmul.f32 %v635, 0.5
    %v637 = vadd.f32 %v636, 0.5
    %v638 = vtanh.pop %v628
    %v639 = vmul.f32 %v629, 0.5
    %v640 = vtanh.pop %v639
    %v641 = vmul.f32 %v640, 0.5
    %v642 = vadd.f32 %v641, 0.5
    %v643 = vmul.f32 %v637, %v479
    %v644 = vmul.f32 %v633, %v638
    %v645 = vadd.f32 %v643, %v644
    %v646 = vtanh.pop %v645
    %v647 = vmul.f32 %v642, %v646
    %648 = vst [vmem:[#allocation3] sm:$0x3] %v647
    %v649 = vld [vmem:[#allocation2] sm:$0xc]
    %v650 = vld [vmem:[#allocation2 + $0x8] sm:$0xc]
    %v651 = vld [vmem:[#allocation2 + $0x10] sm:$0xc]
    %v652 = vld [vmem:[#allocation2 + $0x18] sm:$0xc]
    %653 = vmatprep.subr.mxu0 %v289
    %654 = vmatpush1.msra.mxu0 %v288
    %655 = vmatprep.subr.mxu0 %v285
    %656 = vmatpush1.msra.mxu0 %v284
    %657 = vmatprep.subr.mxu0 %v281
    %658 = vmatpush1.msra.mxu0 %v280
    %659 = vmatprep.subr.mxu0 %v277
    %660 = vmatpush1.msra.mxu0 %v276
    %661 = vmatprep.subr.mxu0 %v273
    %662 = vmatpush1.msra.mxu0 %v272
    %663 = vmatprep.subr.mxu0 %v269
    %664 = vmatpush1.msra.mxu0 %v268
    %665 = vmatprep.subr.mxu0 %v265
    %666 = vmatpush1.msra.mxu0 %v264
    %667 = vmatprep.subr.mxu0 %v261
    %668 = vmatpush1.msra.mxu0 %v260
    %669 = vmatprep.subr.mxu0 %v257
    %670 = vmatpush1.msra.mxu0 %v256
    %671 = vmatprep.subr.mxu0 %v253
    %672 = vmatpush1.msra.mxu0 %v252
    %673 = vmatprep.subr.mxu0 %v249
    %674 = vmatpush1.msra.mxu0 %v248
    %675 = vmatprep.subr.mxu0 %v245
    %676 = vmatpush1.msra.mxu0 %v244
    %677 = vmatprep.subr.mxu0 %v241
    %678 = vmatpush1.msra.mxu0 %v240
    %679 = vmatprep.subr.mxu0 %v237
    %680 = vmatpush1.msra.mxu0 %v236
    %681 = vmatprep.subr.mxu0 %v233
    %682 = vmatpush1.msra.mxu0 %v232
    %683 = vmatprep.subr.mxu0 %v229
    %684 = vmatpush1.msra.mxu0 %v228
    %685 = vmatprep.subr.mxu0 0.0
    %686 = vmatpush2.msra.mxu0 0.0
    %687 = vmatprep.subr.mxu0 0.0
    %688 = vmatpush2.msra.mxu0 0.0
    %689 = vmatprep.subr.mxu0 0.0
    %690 = vmatpush2.msra.mxu0 0.0
    %691 = vmatprep.subr.mxu0 0.0
    %692 = vmatpush2.msra.mxu0 0.0
    %693 = vmatprep.subr.mxu0 0.0
    %694 = vmatpush2.msra.mxu0 0.0
    %695 = vmatprep.subr.mxu0 0.0
    %696 = vmatpush2.msra.mxu0 0.0
    %697 = vmatprep.subr.mxu0 0.0
    %698 = vmatpush2.msra.mxu0 0.0
    %699 = vmatprep.subr.mxu0 0.0
    %700 = vmatpush2.msra.mxu0 0.0
    %701 = vmatprep.subr.mxu0 0.0
    %702 = vmatpush2.msra.mxu0 0.0
    %703 = vmatprep.subr.mxu0 0.0
    %704 = vmatpush2.msra.mxu0 0.0
    %705 = vmatprep.subr.mxu0 0.0
    %706 = vmatpush2.msra.mxu0 0.0
    %707 = vmatprep.subr.mxu0 0.0
    %708 = vmatpush2.msra.mxu0 0.0
    %709 = vmatprep.subr.mxu0 0.0
    %710 = vmatpush2.msra.mxu0 0.0
    %711 = vmatprep.subr.mxu0 0.0
    %712 = vmatpush2.msra.mxu0 0.0
    %713 = vmatprep.subr.mxu0 0.0
    %714 = vmatpush2.msra.mxu0 0.0
    %715 = vmatprep.subr.mxu0 0.0
    %716 = vmatpush2.msra.mxu0 0.0
    %717 = vmatprep.mubr.f32.mxu0 0.0
    %718 = vmatmul.mubr.f32.gmra.mxu0 %v647
    %v719 = vpop.f32.mrf.mxu0
    %v720 = vadd.f32 0.0, %v719
    %v721 = vpop.f32.mrf.mxu0
    %v722 = vadd.f32 0.0, %v721
    %723 = vdwg.mxu0
    %724 = vmatprep.subr.mxu0 %v291
    %725 = vmatpush1.msra.mxu0 %v290
    %726 = vmatprep.subr.mxu0 %v287
    %727 = vmatpush1.msra.mxu0 %v286
    %728 = vmatprep.subr.mxu0 %v283
    %729 = vmatpush1.msra.mxu0 %v282
    %730 = vmatprep.subr.mxu0 %v279
    %731 = vmatpush1.msra.mxu0 %v278
    %732 = vmatprep.subr.mxu0 %v275
    %733 = vmatpush1.msra.mxu0 %v274
    %734 = vmatprep.subr.mxu0 %v271
    %735 = vmatpush1.msra.mxu0 %v270
    %736 = vmatprep.subr.mxu0 %v267
    %737 = vmatpush1.msra.mxu0 %v266
    %738 = vmatprep.subr.mxu0 %v263
    %739 = vmatpush1.msra.mxu0 %v262
    %740 = vmatprep.subr.mxu0 %v259
    %741 = vmatpush1.msra.mxu0 %v258
    %742 = vmatprep.subr.mxu0 %v255
    %743 = vmatpush1.msra.mxu0 %v254
    %744 = vmatprep.subr.mxu0 %v251
    %745 = vmatpush1.msra.mxu0 %v250
    %746 = vmatprep.subr.mxu0 %v247
    %747 = vmatpush1.msra.mxu0 %v246
    %748 = vmatprep.subr.mxu0 %v243
    %749 = vmatpush1.msra.mxu0 %v242
    %750 = vmatprep.subr.mxu0 %v239
    %751 = vmatpush1.msra.mxu0 %v238
    %752 = vmatprep.subr.mxu0 %v235
    %753 = vmatpush1.msra.mxu0 %v234
    %754 = vmatprep.subr.mxu0 %v231
    %755 = vmatpush1.msra.mxu0 %v230
    %756 = vmatprep.subr.mxu0 0.0
    %757 = vmatpush2.msra.mxu0 0.0
    %758 = vmatprep.subr.mxu0 0.0
    %759 = vmatpush2.msra.mxu0 0.0
    %760 = vmatprep.subr.mxu0 0.0
    %761 = vmatpush2.msra.mxu0 0.0
    %762 = vmatprep.subr.mxu0 0.0
    %763 = vmatpush2.msra.mxu0 0.0
    %764 = vmatprep.subr.mxu0 0.0
    %765 = vmatpush2.msra.mxu0 0.0
    %766 = vmatprep.subr.mxu0 0.0
    %767 = vmatpush2.msra.mxu0 0.0
    %768 = vmatprep.subr.mxu0 0.0
    %769 = vmatpush2.msra.mxu0 0.0
    %770 = vmatprep.subr.mxu0 0.0
    %771 = vmatpush2.msra.mxu0 0.0
    %772 = vmatprep.subr.mxu0 0.0
    %773 = vmatpush2.msra.mxu0 0.0
    %774 = vmatprep.subr.mxu0 0.0
    %775 = vmatpush2.msra.mxu0 0.0
    %776 = vmatprep.subr.mxu0 0.0
    %777 = vmatpush2.msra.mxu0 0.0
    %778 = vmatprep.subr.mxu0 0.0
    %779 = vmatpush2.msra.mxu0 0.0
    %780 = vmatprep.subr.mxu0 0.0
    %781 = vmatpush2.msra.mxu0 0.0
    %782 = vmatprep.subr.mxu0 0.0
    %783 = vmatpush2.msra.mxu0 0.0
    %784 = vmatprep.subr.mxu0 0.0
    %785 = vmatpush2.msra.mxu0 0.0
    %786 = vmatprep.subr.mxu0 0.0
    %787 = vmatpush2.msra.mxu0 0.0
    %788 = vmatprep.mubr.f32.mxu0 0.0
    %789 = vmatmul.mubr.f32.gmra.mxu0 %v647
    %v790 = vpop.f32.mrf.mxu0
    %v791 = vadd.f32 0.0, %v790
    %v792 = vpop.f32.mrf.mxu0
    %v793 = vadd.f32 0.0, %v792
    %794 = vdwg.mxu0
    %v799 = vrot.slane %v720, 6
    %v800 = vrot.slane %v722, 6
    %v801 = vrot.slane %v791, 6
    %v802 = vrot.slane %v793, 6
    %v807 = vadd.f32 %v649, %v799
    %v808 = vadd.f32 %v650, %v800
    %v809 = vadd.f32 %v651, %v801
    %v810 = vadd.f32 %v652, %v802
    %v811 = vmul.f32 %v807, 0.5
    %v812 = vtanh.pop %v811
    %v813 = vmul.f32 %v812, 0.5
    %v814 = vadd.f32 %v813, 0.5
    %v815 = vmul.f32 %v808, 0.5
    %v816 = vtanh.pop %v815
    %v817 = vmul.f32 %v816, 0.5
    %v818 = vadd.f32 %v817, 0.5
    %v819 = vtanh.pop %v809
    %v820 = vmul.f32 %v810, 0.5
    %v821 = vtanh.pop %v820
    %v822 = vmul.f32 %v821, 0.5
    %v823 = vadd.f32 %v822, 0.5
    %v825 = vrot.slane %v645, 6
    %v827 = vmul.f32 %v818, %v825
    %v828 = vmul.f32 %v814, %v819
    %v829 = vadd.f32 %v827, %v828
    %v830 = vtanh.pop %v829
    %v831 = vmul.f32 %v823, %v830
    %832 = vst [vmem:[#allocation3] sm:$0xc] %v831
    %v833 = vld [vmem:[#allocation2] sm:$0x30]
    %v834 = vld [vmem:[#allocation2 + $0x8] sm:$0x30]
    %v835 = vld [vmem:[#allocation2 + $0x10] sm:$0x30]
    %v836 = vld [vmem:[#allocation2 + $0x18] sm:$0x30]
    %v838 = vrot.slane %v831, 2
    %840 = vmatprep.subr.mxu0 %v289
    %841 = vmatpush1.msra.mxu0 %v288
    %842 = vmatprep.subr.mxu0 %v285
    %843 = vmatpush1.msra.mxu0 %v284
    %844 = vmatprep.subr.mxu0 %v281
    %845 = vmatpush1.msra.mxu0 %v280
    %846 = vmatprep.subr.mxu0 %v277
    %847 = vmatpush1.msra.mxu0 %v276
    %848 = vmatprep.subr.mxu0 %v273
    %849 = vmatpush1.msra.mxu0 %v272
    %850 = vmatprep.subr.mxu0 %v269
    %851 = vmatpush1.msra.mxu0 %v268
    %852 = vmatprep.subr.mxu0 %v265
    %853 = vmatpush1.msra.mxu0 %v264
    %854 = vmatprep.subr.mxu0 %v261
    %855 = vmatpush1.msra.mxu0 %v260
    %856 = vmatprep.subr.mxu0 %v257
    %857 = vmatpush1.msra.mxu0 %v256
    %858 = vmatprep.subr.mxu0 %v253
    %859 = vmatpush1.msra.mxu0 %v252
    %860 = vmatprep.subr.mxu0 %v249
    %861 = vmatpush1.msra.mxu0 %v248
    %862 = vmatprep.subr.mxu0 %v245
    %863 = vmatpush1.msra.mxu0 %v244
    %864 = vmatprep.subr.mxu0 %v241
    %865 = vmatpush1.msra.mxu0 %v240
    %866 = vmatprep.subr.mxu0 %v237
    %867 = vmatpush1.msra.mxu0 %v236
    %868 = vmatprep.subr.mxu0 %v233
    %869 = vmatpush1.msra.mxu0 %v232
    %870 = vmatprep.subr.mxu0 %v229
    %871 = vmatpush1.msra.mxu0 %v228
    %872 = vmatprep.subr.mxu0 0.0
    %873 = vmatpush2.msra.mxu0 0.0
    %874 = vmatprep.subr.mxu0 0.0
    %875 = vmatpush2.msra.mxu0 0.0
    %876 = vmatprep.subr.mxu0 0.0
    %877 = vmatpush2.msra.mxu0 0.0
    %878 = vmatprep.subr.mxu0 0.0
    %879 = vmatpush2.msra.mxu0 0.0
    %880 = vmatprep.subr.mxu0 0.0
    %881 = vmatpush2.msra.mxu0 0.0
    %882 = vmatprep.subr.mxu0 0.0
    %883 = vmatpush2.msra.mxu0 0.0
    %884 = vmatprep.subr.mxu0 0.0
    %885 = vmatpush2.msra.mxu0 0.0
    %886 = vmatprep.subr.mxu0 0.0
    %887 = vmatpush2.msra.mxu0 0.0
    %888 = vmatprep.subr.mxu0 0.0
    %889 = vmatpush2.msra.mxu0 0.0
    %890 = vmatprep.subr.mxu0 0.0
    %891 = vmatpush2.msra.mxu0 0.0
    %892 = vmatprep.subr.mxu0 0.0
    %893 = vmatpush2.msra.mxu0 0.0
    %894 = vmatprep.subr.mxu0 0.0
    %895 = vmatpush2.msra.mxu0 0.0
    %896 = vmatprep.subr.mxu0 0.0
    %897 = vmatpush2.msra.mxu0 0.0
    %898 = vmatprep.subr.mxu0 0.0
    %899 = vmatpush2.msra.mxu0 0.0
    %900 = vmatprep.subr.mxu0 0.0
    %901 = vmatpush2.msra.mxu0 0.0
    %902 = vmatprep.subr.mxu0 0.0
    %903 = vmatpush2.msra.mxu0 0.0
    %904 = vmatprep.mubr.f32.mxu0 0.0
    %905 = vmatmul.mubr.f32.gmra.mxu0 %v838
    %v906 = vpop.f32.mrf.mxu0
    %v907 = vadd.f32 0.0, %v906
    %v908 = vpop.f32.mrf.mxu0
    %v909 = vadd.f32 0.0, %v908
    %910 = vdwg.mxu0
    %911 = vmatprep.subr.mxu0 %v291
    %912 = vmatpush1.msra.mxu0 %v290
    %913 = vmatprep.subr.mxu0 %v287
    %914 = vmatpush1.msra.mxu0 %v286
    %915 = vmatprep.subr.mxu0 %v283
    %916 = vmatpush1.msra.mxu0 %v282
    %917 = vmatprep.subr.mxu0 %v279
    %918 = vmatpush1.msra.mxu0 %v278
    %919 = vmatprep.subr.mxu0 %v275
    %920 = vmatpush1.msra.mxu0 %v274
    %921 = vmatprep.subr.mxu0 %v271
    %922 = vmatpush1.msra.mxu0 %v270
    %923 = vmatprep.subr.mxu0 %v267
    %924 = vmatpush1.msra.mxu0 %v266
    %925 = vmatprep.subr.mxu0 %v263
    %926 = vmatpush1.msra.mxu0 %v262
    %927 = vmatprep.subr.mxu0 %v259
    %928 = vmatpush1.msra.mxu0 %v258
    %929 = vmatprep.subr.mxu0 %v255
    %930 = vmatpush1.msra.mxu0 %v254
    %931 = vmatprep.subr.mxu0 %v251
    %932 = vmatpush1.msra.mxu0 %v250
    %933 = vmatprep.subr.mxu0 %v247
    %934 = vmatpush1.msra.mxu0 %v246
    %935 = vmatprep.subr.mxu0 %v243
    %936 = vmatpush1.msra.mxu0 %v242
    %937 = vmatprep.subr.mxu0 %v239
    %938 = vmatpush1.msra.mxu0 %v238
    %939 = vmatprep.subr.mxu0 %v235
    %940 = vmatpush1.msra.mxu0 %v234
    %941 = vmatprep.subr.mxu0 %v231
    %942 = vmatpush1.msra.mxu0 %v230
    %943 = vmatprep.subr.mxu0 0.0
    %944 = vmatpush2.msra.mxu0 0.0
    %945 = vmatprep.subr.mxu0 0.0
    %946 = vmatpush2.msra.mxu0 0.0
    %947 = vmatprep.subr.mxu0 0.0
    %948 = vmatpush2.msra.mxu0 0.0
    %949 = vmatprep.subr.mxu0 0.0
    %950 = vmatpush2.msra.mxu0 0.0
    %951 = vmatprep.subr.mxu0 0.0
    %952 = vmatpush2.msra.mxu0 0.0
    %953 = vmatprep.subr.mxu0 0.0
    %954 = vmatpush2.msra.mxu0 0.0
    %955 = vmatprep.subr.mxu0 0.0
    %956 = vmatpush2.msra.mxu0 0.0
    %957 = vmatprep.subr.mxu0 0.0
    %958 = vmatpush2.msra.mxu0 0.0
    %959 = vmatprep.subr.mxu0 0.0
    %960 = vmatpush2.msra.mxu0 0.0
    %961 = vmatprep.subr.mxu0 0.0
    %962 = vmatpush2.msra.mxu0 0.0
    %963 = vmatprep.subr.mxu0 0.0
    %964 = vmatpush2.msra.mxu0 0.0
    %965 = vmatprep.subr.mxu0 0.0
    %966 = vmatpush2.msra.mxu0 0.0
    %967 = vmatprep.subr.mxu0 0.0
    %968 = vmatpush2.msra.mxu0 0.0
    %969 = vmatprep.subr.mxu0 0.0
    %970 = vmatpush2.msra.mxu0 0.0
    %971 = vmatprep.subr.mxu0 0.0
    %972 = vmatpush2.msra.mxu0 0.0
    %973 = vmatprep.subr.mxu0 0.0
    %974 = vmatpush2.msra.mxu0 0.0
    %975 = vmatprep.mubr.f32.mxu0 0.0
    %976 = vmatmul.mubr.f32.gmra.mxu0 %v838
    %v977 = vpop.f32.mrf.mxu0
    %v978 = vadd.f32 0.0, %v977
    %v979 = vpop.f32.mrf.mxu0
    %v980 = vadd.f32 0.0, %v979
    %981 = vdwg.mxu0
    %v986 = vrot.slane %v907, 4
    %v987 = vrot.slane %v909, 4
    %v988 = vrot.slane %v978, 4
    %v989 = vrot.slane %v980, 4
    %v994 = vadd.f32 %v833, %v986
    %v995 = vadd.f32 %v834, %v987
    %v996 = vadd.f32 %v835, %v988
    %v997 = vadd.f32 %v836, %v989
    %v998 = vmul.f32 %v994, 0.5
    %v999 = vtanh.pop %v998
    %v1000 = vmul.f32 %v999, 0.5
    %v1001 = vadd.f32 %v1000, 0.5
    %v1002 = vmul.f32 %v995, 0.5
    %v1003 = vtanh.pop %v1002
    %v1004 = vmul.f32 %v1003, 0.5
    %v1005 = vadd.f32 %v1004, 0.5
    %v1006 = vtanh.pop %v996
    %v1007 = vmul.f32 %v997, 0.5
    %v1008 = vtanh.pop %v1007
    %v1009 = vmul.f32 %v1008, 0.5
    %v1010 = vadd.f32 %v1009, 0.5
    %v1012 = vrot.slane %v829, 6
    %v1014 = vmul.f32 %v1005, %v1012
    %v1015 = vmul.f32 %v1001, %v1006
    %v1016 = vadd.f32 %v1014, %v1015
    %v1017 = vtanh.pop %v1016
    %v1018 = vmul.f32 %v1010, %v1017
    %1019 = vst [vmem:[#allocation3] sm:$0x30] %v1018
    %v1020 = vld [vmem:[#allocation2] sm:$0xc0]
    %v1021 = vld [vmem:[#allocation2 + $0x8] sm:$0xc0]
    %v1022 = vld [vmem:[#allocation2 + $0x10] sm:$0xc0]
    %v1023 = vld [vmem:[#allocation2 + $0x18] sm:$0xc0]
    %v1025 = vrot.slane %v1018, 4
    %1027 = vmatprep.subr.mxu0 %v289
    %1028 = vmatpush1.msra.mxu0 %v288
    %1029 = vmatprep.subr.mxu0 %v285
    %1030 = vmatpush1.msra.mxu0 %v284
    %1031 = vmatprep.subr.mxu0 %v281
    %1032 = vmatpush1.msra.mxu0 %v280
    %1033 = vmatprep.subr.mxu0 %v277
    %1034 = vmatpush1.msra.mxu0 %v276
    %1035 = vmatprep.subr.mxu0 %v273
    %1036 = vmatpush1.msra.mxu0 %v272
    %1037 = vmatprep.subr.mxu0 %v269
    %1038 = vmatpush1.msra.mxu0 %v268
    %1039 = vmatprep.subr.mxu0 %v265
    %1040 = vmatpush1.msra.mxu0 %v264
    %1041 = vmatprep.subr.mxu0 %v261
    %1042 = vmatpush1.msra.mxu0 %v260
    %1043 = vmatprep.subr.mxu0 %v257
    %1044 = vmatpush1.msra.mxu0 %v256
    %1045 = vmatprep.subr.mxu0 %v253
    %1046 = vmatpush1.msra.mxu0 %v252
    %1047 = vmatprep.subr.mxu0 %v249
    %1048 = vmatpush1.msra.mxu0 %v248
    %1049 = vmatprep.subr.mxu0 %v245
    %1050 = vmatpush1.msra.mxu0 %v244
    %1051 = vmatprep.subr.mxu0 %v241
    %1052 = vmatpush1.msra.mxu0 %v240
    %1053 = vmatprep.subr.mxu0 %v237
    %1054 = vmatpush1.msra.mxu0 %v236
    %1055 = vmatprep.subr.mxu0 %v233
    %1056 = vmatpush1.msra.mxu0 %v232
    %1057 = vmatprep.subr.mxu0 %v229
    %1058 = vmatpush1.msra.mxu0 %v228
    %1059 = vmatprep.subr.mxu0 0.0
    %1060 = vmatpush2.msra.mxu0 0.0
    %1061 = vmatprep.subr.mxu0 0.0
    %1062 = vmatpush2.msra.mxu0 0.0
    %1063 = vmatprep.subr.mxu0 0.0
    %1064 = vmatpush2.msra.mxu0 0.0
    %1065 = vmatprep.subr.mxu0 0.0
    %1066 = vmatpush2.msra.mxu0 0.0
    %1067 = vmatprep.subr.mxu0 0.0
    %1068 = vmatpush2.msra.mxu0 0.0
    %1069 = vmatprep.subr.mxu0 0.0
    %1070 = vmatpush2.msra.mxu0 0.0
    %1071 = vmatprep.subr.mxu0 0.0
    %1072 = vmatpush2.msra.mxu0 0.0
    %1073 = vmatprep.subr.mxu0 0.0
    %1074 = vmatpush2.msra.mxu0 0.0
    %1075 = vmatprep.subr.mxu0 0.0
    %1076 = vmatpush2.msra.mxu0 0.0
    %1077 = vmatprep.subr.mxu0 0.0
    %1078 = vmatpush2.msra.mxu0 0.0
    %1079 = vmatprep.subr.mxu0 0.0
    %1080 = vmatpush2.msra.mxu0 0.0
    %1081 = vmatprep.subr.mxu0 0.0
    %1082 = vmatpush2.msra.mxu0 0.0
    %1083 = vmatprep.subr.mxu0 0.0
    %1084 = vmatpush2.msra.mxu0 0.0
    %1085 = vmatprep.subr.mxu0 0.0
    %1086 = vmatpush2.msra.mxu0 0.0
    %1087 = vmatprep.subr.mxu0 0.0
    %1088 = vmatpush2.msra.mxu0 0.0
    %1089 = vmatprep.subr.mxu0 0.0
    %1090 = vmatpush2.msra.mxu0 0.0
    %1091 = vmatprep.mubr.f32.mxu0 0.0
    %1092 = vmatmul.mubr.f32.gmra.mxu0 %v1025
    %v1093 = vpop.f32.mrf.mxu0
    %v1094 = vadd.f32 0.0, %v1093
    %v1095 = vpop.f32.mrf.mxu0
    %v1096 = vadd.f32 0.0, %v1095
    %1097 = vdwg.mxu0
    %1098 = vmatprep.subr.mxu0 %v291
    %1099 = vmatpush1.msra.mxu0 %v290
    %1100 = vmatprep.subr.mxu0 %v287
    %1101 = vmatpush1.msra.mxu0 %v286
    %1102 = vmatprep.subr.mxu0 %v283
    %1103 = vmatpush1.msra.mxu0 %v282
    %1104 = vmatprep.subr.mxu0 %v279
    %1105 = vmatpush1.msra.mxu0 %v278
    %1106 = vmatprep.subr.mxu0 %v275
    %1107 = vmatpush1.msra.mxu0 %v274
    %1108 = vmatprep.subr.mxu0 %v271
    %1109 = vmatpush1.msra.mxu0 %v270
    %1110 = vmatprep.subr.mxu0 %v267
    %1111 = vmatpush1.msra.mxu0 %v266
    %1112 = vmatprep.subr.mxu0 %v263
    %1113 = vmatpush1.msra.mxu0 %v262
    %1114 = vmatprep.subr.mxu0 %v259
    %1115 = vmatpush1.msra.mxu0 %v258
    %1116 = vmatprep.subr.mxu0 %v255
    %1117 = vmatpush1.msra.mxu0 %v254
    %1118 = vmatprep.subr.mxu0 %v251
    %1119 = vmatpush1.msra.mxu0 %v250
    %1120 = vmatprep.subr.mxu0 %v247
    %1121 = vmatpush1.msra.mxu0 %v246
    %1122 = vmatprep.subr.mxu0 %v243
    %1123 = vmatpush1.msra.mxu0 %v242
    %1124 = vmatprep.subr.mxu0 %v239
    %1125 = vmatpush1.msra.mxu0 %v238
    %1126 = vmatprep.subr.mxu0 %v235
    %1127 = vmatpush1.msra.mxu0 %v234
    %1128 = vmatprep.subr.mxu0 %v231
    %1129 = vmatpush1.msra.mxu0 %v230
    %1130 = vmatprep.subr.mxu0 0.0
    %1131 = vmatpush2.msra.mxu0 0.0
    %1132 = vmatprep.subr.mxu0 0.0
    %1133 = vmatpush2.msra.mxu0 0.0
    %1134 = vmatprep.subr.mxu0 0.0
    %1135 = vmatpush2.msra.mxu0 0.0
    %1136 = vmatprep.subr.mxu0 0.0
    %1137 = vmatpush2.msra.mxu0 0.0
    %1138 = vmatprep.subr.mxu0 0.0
    %1139 = vmatpush2.msra.mxu0 0.0
    %1140 = vmatprep.subr.mxu0 0.0
    %1141 = vmatpush2.msra.mxu0 0.0
    %1142 = vmatprep.subr.mxu0 0.0
    %1143 = vmatpush2.msra.mxu0 0.0
    %1144 = vmatprep.subr.mxu0 0.0
    %1145 = vmatpush2.msra.mxu0 0.0
    %1146 = vmatprep.subr.mxu0 0.0
    %1147 = vmatpush2.msra.mxu0 0.0
    %1148 = vmatprep.subr.mxu0 0.0
    %1149 = vmatpush2.msra.mxu0 0.0
    %1150 = vmatprep.subr.mxu0 0.0
    %1151 = vmatpush2.msra.mxu0 0.0
    %1152 = vmatprep.subr.mxu0 0.0
    %1153 = vmatpush2.msra.mxu0 0.0
    %1154 = vmatprep.subr.mxu0 0.0
    %1155 = vmatpush2.msra.mxu0 0.0
    %1156 = vmatprep.subr.mxu0 0.0
    %1157 = vmatpush2.msra.mxu0 0.0
    %1158 = vmatprep.subr.mxu0 0.0
    %1159 = vmatpush2.msra.mxu0 0.0
    %1160 = vmatprep.subr.mxu0 0.0
    %1161 = vmatpush2.msra.mxu0 0.0
    %1162 = vmatprep.mubr.f32.mxu0 0.0
    %1163 = vmatmul.mubr.f32.gmra.mxu0 %v1025
    %v1164 = vpop.f32.mrf.mxu0
    %v1165 = vadd.f32 0.0, %v1164
    %v1166 = vpop.f32.mrf.mxu0
    %v1167 = vadd.f32 0.0, %v1166
    %1168 = vdwg.mxu0
    %v1173 = vrot.slane %v1094, 2
    %v1174 = vrot.slane %v1096, 2
    %v1175 = vrot.slane %v1165, 2
    %v1176 = vrot.slane %v1167, 2
    %v1181 = vadd.f32 %v1020, %v1173
    %v1182 = vadd.f32 %v1021, %v1174
    %v1183 = vadd.f32 %v1022, %v1175
    %v1184 = vadd.f32 %v1023, %v1176
    %v1185 = vmul.f32 %v1181, 0.5
    %v1186 = vtanh.pop %v1185
    %v1187 = vmul.f32 %v1186, 0.5
    %v1188 = vadd.f32 %v1187, 0.5
    %v1189 = vmul.f32 %v1182, 0.5
    %v1190 = vtanh.pop %v1189
    %v1191 = vmul.f32 %v1190, 0.5
    %v1192 = vadd.f32 %v1191, 0.5
    %v1193 = vtanh.pop %v1183
    %v1194 = vmul.f32 %v1184, 0.5
    %v1195 = vtanh.pop %v1194
    %v1196 = vmul.f32 %v1195, 0.5
    %v1197 = vadd.f32 %v1196, 0.5
    %v1199 = vrot.slane %v1016, 6
    %v1201 = vmul.f32 %v1192, %v1199
    %v1202 = vmul.f32 %v1188, %v1193
    %v1203 = vadd.f32 %v1201, %v1202
    %v1204 = vtanh.pop %v1203
    %v1205 = vmul.f32 %v1197, %v1204
    %1206 = vst [vmem:[#allocation3] sm:$0xc0] %v1205
    %v1207 = vld [vmem:[#allocation2 + $0x20] sm:$0x3]
    %v1208 = vld [vmem:[#allocation2 + $0x28] sm:$0x3]
    %v1209 = vld [vmem:[#allocation2 + $0x30] sm:$0x3]
    %v1210 = vld [vmem:[#allocation2 + $0x38] sm:$0x3]
    %v1212 = vrot.slane %v1205, 6
    %1214 = vmatprep.subr.mxu0 %v289
    %1215 = vmatpush1.msra.mxu0 %v288
    %1216 = vmatprep.subr.mxu0 %v285
    %1217 = vmatpush1.msra.mxu0 %v284
    %1218 = vmatprep.subr.mxu0 %v281
    %1219 = vmatpush1.msra.mxu0 %v280
    %1220 = vmatprep.subr.mxu0 %v277
    %1221 = vmatpush1.msra.mxu0 %v276
    %1222 = vmatprep.subr.mxu0 %v273
    %1223 = vmatpush1.msra.mxu0 %v272
    %1224 = vmatprep.subr.mxu0 %v269
    %1225 = vmatpush1.msra.mxu0 %v268
    %1226 = vmatprep.subr.mxu0 %v265
    %1227 = vmatpush1.msra.mxu0 %v264
    %1228 = vmatprep.subr.mxu0 %v261
    %1229 = vmatpush1.msra.mxu0 %v260
    %1230 = vmatprep.subr.mxu0 %v257
    %1231 = vmatpush1.msra.mxu0 %v256
    %1232 = vmatprep.subr.mxu0 %v253
    %1233 = vmatpush1.msra.mxu0 %v252
    %1234 = vmatprep.subr.mxu0 %v249
    %1235 = vmatpush1.msra.mxu0 %v248
    %1236 = vmatprep.subr.mxu0 %v245
    %1237 = vmatpush1.msra.mxu0 %v244
    %1238 = vmatprep.subr.mxu0 %v241
    %1239 = vmatpush1.msra.mxu0 %v240
    %1240 = vmatprep.subr.mxu0 %v237
    %1241 = vmatpush1.msra.mxu0 %v236
    %1242 = vmatprep.subr.mxu0 %v233
    %1243 = vmatpush1.msra.mxu0 %v232
    %1244 = vmatprep.subr.mxu0 %v229
    %1245 = vmatpush1.msra.mxu0 %v228
    %1246 = vmatprep.subr.mxu0 0.0
    %1247 = vmatpush2.msra.mxu0 0.0
    %1248 = vmatprep.subr.mxu0 0.0
    %1249 = vmatpush2.msra.mxu0 0.0
    %1250 = vmatprep.subr.mxu0 0.0
    %1251 = vmatpush2.msra.mxu0 0.0
    %1252 = vmatprep.subr.mxu0 0.0
    %1253 = vmatpush2.msra.mxu0 0.0
    %1254 = vmatprep.subr.mxu0 0.0
    %1255 = vmatpush2.msra.mxu0 0.0
    %1256 = vmatprep.subr.mxu0 0.0
    %1257 = vmatpush2.msra.mxu0 0.0
    %1258 = vmatprep.subr.mxu0 0.0
    %1259 = vmatpush2.msra.mxu0 0.0
    %1260 = vmatprep.subr.mxu0 0.0
    %1261 = vmatpush2.msra.mxu0 0.0
    %1262 = vmatprep.subr.mxu0 0.0
    %1263 = vmatpush2.msra.mxu0 0.0
    %1264 = vmatprep.subr.mxu0 0.0
    %1265 = vmatpush2.msra.mxu0 0.0
    %1266 = vmatprep.subr.mxu0 0.0
    %1267 = vmatpush2.msra.mxu0 0.0
    %1268 = vmatprep.subr.mxu0 0.0
    %1269 = vmatpush2.msra.mxu0 0.0
    %1270 = vmatprep.subr.mxu0 0.0
    %1271 = vmatpush2.msra.mxu0 0.0
    %1272 = vmatprep.subr.mxu0 0.0
    %1273 = vmatpush2.msra.mxu0 0.0
    %1274 = vmatprep.subr.mxu0 0.0
    %1275 = vmatpush2.msra.mxu0 0.0
    %1276 = vmatprep.subr.mxu0 0.0
    %1277 = vmatpush2.msra.mxu0 0.0
    %1278 = vmatprep.mubr.f32.mxu0 0.0
    %1279 = vmatmul.mubr.f32.gmra.mxu0 %v1212
    %v1280 = vpop.f32.mrf.mxu0
    %v1281 = vadd.f32 0.0, %v1280
    %v1282 = vpop.f32.mrf.mxu0
    %v1283 = vadd.f32 0.0, %v1282
    %1284 = vdwg.mxu0
    %1285 = vmatprep.subr.mxu0 %v291
    %1286 = vmatpush1.msra.mxu0 %v290
    %1287 = vmatprep.subr.mxu0 %v287
    %1288 = vmatpush1.msra.mxu0 %v286
    %1289 = vmatprep.subr.mxu0 %v283
    %1290 = vmatpush1.msra.mxu0 %v282
    %1291 = vmatprep.subr.mxu0 %v279
    %1292 = vmatpush1.msra.mxu0 %v278
    %1293 = vmatprep.subr.mxu0 %v275
    %1294 = vmatpush1.msra.mxu0 %v274
    %1295 = vmatprep.subr.mxu0 %v271
    %1296 = vmatpush1.msra.mxu0 %v270
    %1297 = vmatprep.subr.mxu0 %v267
    %1298 = vmatpush1.msra.mxu0 %v266
    %1299 = vmatprep.subr.mxu0 %v263
    %1300 = vmatpush1.msra.mxu0 %v262
    %1301 = vmatprep.subr.mxu0 %v259
    %1302 = vmatpush1.msra.mxu0 %v258
    %1303 = vmatprep.subr.mxu0 %v255
    %1304 = vmatpush1.msra.mxu0 %v254
    %1305 = vmatprep.subr.mxu0 %v251
    %1306 = vmatpush1.msra.mxu0 %v250
    %1307 = vmatprep.subr.mxu0 %v247
    %1308 = vmatpush1.msra.mxu0 %v246
    %1309 = vmatprep.subr.mxu0 %v243
    %1310 = vmatpush1.msra.mxu0 %v242
    %1311 = vmatprep.subr.mxu0 %v239
    %1312 = vmatpush1.msra.mxu0 %v238
    %1313 = vmatprep.subr.mxu0 %v235
    %1314 = vmatpush1.msra.mxu0 %v234
    %1315 = vmatprep.subr.mxu0 %v231
    %1316 = vmatpush1.msra.mxu0 %v230
    %1317 = vmatprep.subr.mxu0 0.0
    %1318 = vmatpush2.msra.mxu0 0.0
    %1319 = vmatprep.subr.mxu0 0.0
    %1320 = vmatpush2.msra.mxu0 0.0
    %1321 = vmatprep.subr.mxu0 0.0
    %1322 = vmatpush2.msra.mxu0 0.0
    %1323 = vmatprep.subr.mxu0 0.0
    %1324 = vmatpush2.msra.mxu0 0.0
    %1325 = vmatprep.subr.mxu0 0.0
    %1326 = vmatpush2.msra.mxu0 0.0
    %1327 = vmatprep.subr.mxu0 0.0
    %1328 = vmatpush2.msra.mxu0 0.0
    %1329 = vmatprep.subr.mxu0 0.0
    %1330 = vmatpush2.msra.mxu0 0.0
    %1331 = vmatprep.subr.mxu0 0.0
    %1332 = vmatpush2.msra.mxu0 0.0
    %1333 = vmatprep.subr.mxu0 0.0
    %1334 = vmatpush2.msra.mxu0 0.0
    %1335 = vmatprep.subr.mxu0 0.0
    %1336 = vmatpush2.msra.mxu0 0.0
    %1337 = vmatprep.subr.mxu0 0.0
    %1338 = vmatpush2.msra.mxu0 0.0
    %1339 = vmatprep.subr.mxu0 0.0
    %1340 = vmatpush2.msra.mxu0 0.0
    %1341 = vmatprep.subr.mxu0 0.0
    %1342 = vmatpush2.msra.mxu0 0.0
    %1343 = vmatprep.subr.mxu0 0.0
    %1344 = vmatpush2.msra.mxu0 0.0
    %1345 = vmatprep.subr.mxu0 0.0
    %1346 = vmatpush2.msra.mxu0 0.0
    %1347 = vmatprep.subr.mxu0 0.0
    %1348 = vmatpush2.msra.mxu0 0.0
    %1349 = vmatprep.mubr.f32.mxu0 0.0
    %1350 = vmatmul.mubr.f32.gmra.mxu0 %v1212
    %v1351 = vpop.f32.mrf.mxu0
    %v1352 = vadd.f32 0.0, %v1351
    %v1353 = vpop.f32.mrf.mxu0
    %v1354 = vadd.f32 0.0, %v1353
    %1355 = vdwg.mxu0
    %v1356 = vadd.f32 %v1207, %v1281
    %v1357 = vadd.f32 %v1208, %v1283
    %v1358 = vadd.f32 %v1209, %v1352
    %v1359 = vadd.f32 %v1210, %v1354
    %v1360 = vmul.f32 %v1356, 0.5
    %v1361 = vtanh.pop %v1360
    %v1362 = vmul.f32 %v1361, 0.5
    %v1363 = vadd.f32 %v1362, 0.5
    %v1364 = vmul.f32 %v1357, 0.5
    %v1365 = vtanh.pop %v1364
    %v1366 = vmul.f32 %v1365, 0.5
    %v1367 = vadd.f32 %v1366, 0.5
    %v1368 = vtanh.pop %v1358
    %v1369 = vmul.f32 %v1359, 0.5
    %v1370 = vtanh.pop %v1369
    %v1371 = vmul.f32 %v1370, 0.5
    %v1372 = vadd.f32 %v1371, 0.5
    %v1374 = vrot.slane %v1203, 6
    %v1376 = vmul.f32 %v1367, %v1374
    %v1377 = vmul.f32 %v1363, %v1368
    %v1378 = vadd.f32 %v1376, %v1377
    %v1379 = vtanh.pop %v1378
    %v1380 = vmul.f32 %v1372, %v1379
    %1381 = vst [vmem:[#allocation3 + $0x8] sm:$0x3] %v1380
    %v1382 = vld [vmem:[#allocation2 + $0x20] sm:$0xc]
    %v1383 = vld [vmem:[#allocation2 + $0x28] sm:$0xc]
    %v1384 = vld [vmem:[#allocation2 + $0x30] sm:$0xc]
    %v1385 = vld [vmem:[#allocation2 + $0x38] sm:$0xc]
    %1386 = vmatprep.subr.mxu0 %v289
    %1387 = vmatpush1.msra.mxu0 %v288
    %1388 = vmatprep.subr.mxu0 %v285
    %1389 = vmatpush1.msra.mxu0 %v284
    %1390 = vmatprep.subr.mxu0 %v281
    %1391 = vmatpush1.msra.mxu0 %v280
    %1392 = vmatprep.subr.mxu0 %v277
    %1393 = vmatpush1.msra.mxu0 %v276
    %1394 = vmatprep.subr.mxu0 %v273
    %1395 = vmatpush1.msra.mxu0 %v272
    %1396 = vmatprep.subr.mxu0 %v269
    %1397 = vmatpush1.msra.mxu0 %v268
    %1398 = vmatprep.subr.mxu0 %v265
    %1399 = vmatpush1.msra.mxu0 %v264
    %1400 = vmatprep.subr.mxu0 %v261
    %1401 = vmatpush1.msra.mxu0 %v260
    %1402 = vmatprep.subr.mxu0 %v257
    %1403 = vmatpush1.msra.mxu0 %v256
    %1404 = vmatprep.subr.mxu0 %v253
    %1405 = vmatpush1.msra.mxu0 %v252
    %1406 = vmatprep.subr.mxu0 %v249
    %1407 = vmatpush1.msra.mxu0 %v248
    %1408 = vmatprep.subr.mxu0 %v245
    %1409 = vmatpush1.msra.mxu0 %v244
    %1410 = vmatprep.subr.mxu0 %v241
    %1411 = vmatpush1.msra.mxu0 %v240
    %1412 = vmatprep.subr.mxu0 %v237
    %1413 = vmatpush1.msra.mxu0 %v236
    %1414 = vmatprep.subr.mxu0 %v233
    %1415 = vmatpush1.msra.mxu0 %v232
    %1416 = vmatprep.subr.mxu0 %v229
    %1417 = vmatpush1.msra.mxu0 %v228
    %1418 = vmatprep.subr.mxu0 0.0
    %1419 = vmatpush2.msra.mxu0 0.0
    %1420 = vmatprep.subr.mxu0 0.0
    %1421 = vmatpush2.msra.mxu0 0.0
    %1422 = vmatprep.subr.mxu0 0.0
    %1423 = vmatpush2.msra.mxu0 0.0
    %1424 = vmatprep.subr.mxu0 0.0
    %1425 = vmatpush2.msra.mxu0 0.0
    %1426 = vmatprep.subr.mxu0 0.0
    %1427 = vmatpush2.msra.mxu0 0.0
    %1428 = vmatprep.subr.mxu0 0.0
    %1429 = vmatpush2.msra.mxu0 0.0
    %1430 = vmatprep.subr.mxu0 0.0
    %1431 = vmatpush2.msra.mxu0 0.0
    %1432 = vmatprep.subr.mxu0 0.0
    %1433 = vmatpush2.msra.mxu0 0.0
    %1434 = vmatprep.subr.mxu0 0.0
    %1435 = vmatpush2.msra.mxu0 0.0
    %1436 = vmatprep.subr.mxu0 0.0
    %1437 = vmatpush2.msra.mxu0 0.0
    %1438 = vmatprep.subr.mxu0 0.0
    %1439 = vmatpush2.msra.mxu0 0.0
    %1440 = vmatprep.subr.mxu0 0.0
    %1441 = vmatpush2.msra.mxu0 0.0
    %1442 = vmatprep.subr.mxu0 0.0
    %1443 = vmatpush2.msra.mxu0 0.0
    %1444 = vmatprep.subr.mxu0 0.0
    %1445 = vmatpush2.msra.mxu0 0.0
    %1446 = vmatprep.subr.mxu0 0.0
    %1447 = vmatpush2.msra.mxu0 0.0
    %1448 = vmatprep.subr.mxu0 0.0
    %1449 = vmatpush2.msra.mxu0 0.0
    %1450 = vmatprep.mubr.f32.mxu0 0.0
    %1451 = vmatmul.mubr.f32.gmra.mxu0 %v1380
    %v1452 = vpop.f32.mrf.mxu0
    %v1453 = vadd.f32 0.0, %v1452
    %v1454 = vpop.f32.mrf.mxu0
    %v1455 = vadd.f32 0.0, %v1454
    %1456 = vdwg.mxu0
    %1457 = vmatprep.subr.mxu0 %v291
    %1458 = vmatpush1.msra.mxu0 %v290
    %1459 = vmatprep.subr.mxu0 %v287
    %1460 = vmatpush1.msra.mxu0 %v286
    %1461 = vmatprep.subr.mxu0 %v283
    %1462 = vmatpush1.msra.mxu0 %v282
    %1463 = vmatprep.subr.mxu0 %v279
    %1464 = vmatpush1.msra.mxu0 %v278
    %1465 = vmatprep.subr.mxu0 %v275
    %1466 = vmatpush1.msra.mxu0 %v274
    %1467 = vmatprep.subr.mxu0 %v271
    %1468 = vmatpush1.msra.mxu0 %v270
    %1469 = vmatprep.subr.mxu0 %v267
    %1470 = vmatpush1.msra.mxu0 %v266
    %1471 = vmatprep.subr.mxu0 %v263
    %1472 = vmatpush1.msra.mxu0 %v262
    %1473 = vmatprep.subr.mxu0 %v259
    %1474 = vmatpush1.msra.mxu0 %v258
    %1475 = vmatprep.subr.mxu0 %v255
    %1476 = vmatpush1.msra.mxu0 %v254
    %1477 = vmatprep.subr.mxu0 %v251
    %1478 = vmatpush1.msra.mxu0 %v250
    %1479 = vmatprep.subr.mxu0 %v247
    %1480 = vmatpush1.msra.mxu0 %v246
    %1481 = vmatprep.subr.mxu0 %v243
    %1482 = vmatpush1.msra.mxu0 %v242
    %1483 = vmatprep.subr.mxu0 %v239
    %1484 = vmatpush1.msra.mxu0 %v238
    %1485 = vmatprep.subr.mxu0 %v235
    %1486 = vmatpush1.msra.mxu0 %v234
    %1487 = vmatprep.subr.mxu0 %v231
    %1488 = vmatpush1.msra.mxu0 %v230
    %1489 = vmatprep.subr.mxu0 0.0
    %1490 = vmatpush2.msra.mxu0 0.0
    %1491 = vmatprep.subr.mxu0 0.0
    %1492 = vmatpush2.msra.mxu0 0.0
    %1493 = vmatprep.subr.mxu0 0.0
    %1494 = vmatpush2.msra.mxu0 0.0
    %1495 = vmatprep.subr.mxu0 0.0
    %1496 = vmatpush2.msra.mxu0 0.0
    %1497 = vmatprep.subr.mxu0 0.0
    %1498 = vmatpush2.msra.mxu0 0.0
    %1499 = vmatprep.subr.mxu0 0.0
    %1500 = vmatpush2.msra.mxu0 0.0
    %1501 = vmatprep.subr.mxu0 0.0
    %1502 = vmatpush2.msra.mxu0 0.0
    %1503 = vmatprep.subr.mxu0 0.0
    %1504 = vmatpush2.msra.mxu0 0.0
    %1505 = vmatprep.subr.mxu0 0.0
    %1506 = vmatpush2.msra.mxu0 0.0
    %1507 = vmatprep.subr.mxu0 0.0
    %1508 = vmatpush2.msra.mxu0 0.0
    %1509 = vmatprep.subr.mxu0 0.0
    %1510 = vmatpush2.msra.mxu0 0.0
    %1511 = vmatprep.subr.mxu0 0.0
    %1512 = vmatpush2.msra.mxu0 0.0
    %1513 = vmatprep.subr.mxu0 0.0
    %1514 = vmatpush2.msra.mxu0 0.0
    %1515 = vmatprep.subr.mxu0 0.0
    %1516 = vmatpush2.msra.mxu0 0.0
    %1517 = vmatprep.subr.mxu0 0.0
    %1518 = vmatpush2.msra.mxu0 0.0
    %1519 = vmatprep.subr.mxu0 0.0
    %1520 = vmatpush2.msra.mxu0 0.0
    %1521 = vmatprep.mubr.f32.mxu0 0.0
    %1522 = vmatmul.mubr.f32.gmra.mxu0 %v1380
    %v1523 = vpop.f32.mrf.mxu0
    %v1524 = vadd.f32 0.0, %v1523
    %v1525 = vpop.f32.mrf.mxu0
    %v1526 = vadd.f32 0.0, %v1525
    %1527 = vdwg.mxu0
    %v1532 = vrot.slane %v1453, 6
    %v1533 = vrot.slane %v1455, 6
    %v1534 = vrot.slane %v1524, 6
    %v1535 = vrot.slane %v1526, 6
    %v1540 = vadd.f32 %v1382, %v1532
    %v1541 = vadd.f32 %v1383, %v1533
    %v1542 = vadd.f32 %v1384, %v1534
    %v1543 = vadd.f32 %v1385, %v1535
    %v1544 = vmul.f32 %v1540, 0.5
    %v1545 = vtanh.pop %v1544
    %v1546 = vmul.f32 %v1545, 0.5
    %v1547 = vadd.f32 %v1546, 0.5
    %v1548 = vmul.f32 %v1541, 0.5
    %v1549 = vtanh.pop %v1548
    %v1550 = vmul.f32 %v1549, 0.5
    %v1551 = vadd.f32 %v1550, 0.5
    %v1552 = vtanh.pop %v1542
    %v1553 = vmul.f32 %v1543, 0.5
    %v1554 = vtanh.pop %v1553
    %v1555 = vmul.f32 %v1554, 0.5
    %v1556 = vadd.f32 %v1555, 0.5
    %v1558 = vrot.slane %v1378, 6
    %v1560 = vmul.f32 %v1551, %v1558
    %v1561 = vmul.f32 %v1547, %v1552
    %v1562 = vadd.f32 %v1560, %v1561
    %v1563 = vtanh.pop %v1562
    %v1564 = vmul.f32 %v1556, %v1563
    %1565 = vst [vmem:[#allocation3 + $0x8] sm:$0xc] %v1564
    %v1566 = vld [vmem:[#allocation2 + $0x20] sm:$0x30]
    %v1567 = vld [vmem:[#allocation2 + $0x28] sm:$0x30]
    %v1568 = vld [vmem:[#allocation2 + $0x30] sm:$0x30]
    %v1569 = vld [vmem:[#allocation2 + $0x38] sm:$0x30]
    %v1571 = vrot.slane %v1564, 2
    %1573 = vmatprep.subr.mxu0 %v289
    %1574 = vmatpush1.msra.mxu0 %v288
    %1575 = vmatprep.subr.mxu0 %v285
    %1576 = vmatpush1.msra.mxu0 %v284
    %1577 = vmatprep.subr.mxu0 %v281
    %1578 = vmatpush1.msra.mxu0 %v280
    %1579 = vmatprep.subr.mxu0 %v277
    %1580 = vmatpush1.msra.mxu0 %v276
    %1581 = vmatprep.subr.mxu0 %v273
    %1582 = vmatpush1.msra.mxu0 %v272
    %1583 = vmatprep.subr.mxu0 %v269
    %1584 = vmatpush1.msra.mxu0 %v268
    %1585 = vmatprep.subr.mxu0 %v265
    %1586 = vmatpush1.msra.mxu0 %v264
    %1587 = vmatprep.subr.mxu0 %v261
    %1588 = vmatpush1.msra.mxu0 %v260
    %1589 = vmatprep.subr.mxu0 %v257
    %1590 = vmatpush1.msra.mxu0 %v256
    %1591 = vmatprep.subr.mxu0 %v253
    %1592 = vmatpush1.msra.mxu0 %v252
    %1593 = vmatprep.subr.mxu0 %v249
    %1594 = vmatpush1.msra.mxu0 %v248
    %1595 = vmatprep.subr.mxu0 %v245
    %1596 = vmatpush1.msra.mxu0 %v244
    %1597 = vmatprep.subr.mxu0 %v241
    %1598 = vmatpush1.msra.mxu0 %v240
    %1599 = vmatprep.subr.mxu0 %v237
    %1600 = vmatpush1.msra.mxu0 %v236
    %1601 = vmatprep.subr.mxu0 %v233
    %1602 = vmatpush1.msra.mxu0 %v232
    %1603 = vmatprep.subr.mxu0 %v229
    %1604 = vmatpush1.msra.mxu0 %v228
    %1605 = vmatprep.subr.mxu0 0.0
    %1606 = vmatpush2.msra.mxu0 0.0
    %1607 = vmatprep.subr.mxu0 0.0
    %1608 = vmatpush2.msra.mxu0 0.0
    %1609 = vmatprep.subr.mxu0 0.0
    %1610 = vmatpush2.msra.mxu0 0.0
    %1611 = vmatprep.subr.mxu0 0.0
    %1612 = vmatpush2.msra.mxu0 0.0
    %1613 = vmatprep.subr.mxu0 0.0
    %1614 = vmatpush2.msra.mxu0 0.0
    %1615 = vmatprep.subr.mxu0 0.0
    %1616 = vmatpush2.msra.mxu0 0.0
    %1617 = vmatprep.subr.mxu0 0.0
    %1618 = vmatpush2.msra.mxu0 0.0
    %1619 = vmatprep.subr.mxu0 0.0
    %1620 = vmatpush2.msra.mxu0 0.0
    %1621 = vmatprep.subr.mxu0 0.0
    %1622 = vmatpush2.msra.mxu0 0.0
    %1623 = vmatprep.subr.mxu0 0.0
    %1624 = vmatpush2.msra.mxu0 0.0
    %1625 = vmatprep.subr.mxu0 0.0
    %1626 = vmatpush2.msra.mxu0 0.0
    %1627 = vmatprep.subr.mxu0 0.0
    %1628 = vmatpush2.msra.mxu0 0.0
    %1629 = vmatprep.subr.mxu0 0.0
    %1630 = vmatpush2.msra.mxu0 0.0
    %1631 = vmatprep.subr.mxu0 0.0
    %1632 = vmatpush2.msra.mxu0 0.0
    %1633 = vmatprep.subr.mxu0 0.0
    %1634 = vmatpush2.msra.mxu0 0.0
    %1635 = vmatprep.subr.mxu0 0.0
    %1636 = vmatpush2.msra.mxu0 0.0
    %1637 = vmatprep.mubr.f32.mxu0 0.0
    %1638 = vmatmul.mubr.f32.gmra.mxu0 %v1571
    %v1639 = vpop.f32.mrf.mxu0
    %v1640 = vadd.f32 0.0, %v1639
    %v1641 = vpop.f32.mrf.mxu0
    %v1642 = vadd.f32 0.0, %v1641
    %1643 = vdwg.mxu0
    %1644 = vmatprep.subr.mxu0 %v291
    %1645 = vmatpush1.msra.mxu0 %v290
    %1646 = vmatprep.subr.mxu0 %v287
    %1647 = vmatpush1.msra.mxu0 %v286
    %1648 = vmatprep.subr.mxu0 %v283
    %1649 = vmatpush1.msra.mxu0 %v282
    %1650 = vmatprep.subr.mxu0 %v279
    %1651 = vmatpush1.msra.mxu0 %v278
    %1652 = vmatprep.subr.mxu0 %v275
    %1653 = vmatpush1.msra.mxu0 %v274
    %1654 = vmatprep.subr.mxu0 %v271
    %1655 = vmatpush1.msra.mxu0 %v270
    %1656 = vmatprep.subr.mxu0 %v267
    %1657 = vmatpush1.msra.mxu0 %v266
    %1658 = vmatprep.subr.mxu0 %v263
    %1659 = vmatpush1.msra.mxu0 %v262
    %1660 = vmatprep.subr.mxu0 %v259
    %1661 = vmatpush1.msra.mxu0 %v258
    %1662 = vmatprep.subr.mxu0 %v255
    %1663 = vmatpush1.msra.mxu0 %v254
    %1664 = vmatprep.subr.mxu0 %v251
    %1665 = vmatpush1.msra.mxu0 %v250
    %1666 = vmatprep.subr.mxu0 %v247
    %1667 = vmatpush1.msra.mxu0 %v246
    %1668 = vmatprep.subr.mxu0 %v243
    %1669 = vmatpush1.msra.mxu0 %v242
    %1670 = vmatprep.subr.mxu0 %v239
    %1671 = vmatpush1.msra.mxu0 %v238
    %1672 = vmatprep.subr.mxu0 %v235
    %1673 = vmatpush1.msra.mxu0 %v234
    %1674 = vmatprep.subr.mxu0 %v231
    %1675 = vmatpush1.msra.mxu0 %v230
    %1676 = vmatprep.subr.mxu0 0.0
    %1677 = vmatpush2.msra.mxu0 0.0
    %1678 = vmatprep.subr.mxu0 0.0
    %1679 = vmatpush2.msra.mxu0 0.0
    %1680 = vmatprep.subr.mxu0 0.0
    %1681 = vmatpush2.msra.mxu0 0.0
    %1682 = vmatprep.subr.mxu0 0.0
    %1683 = vmatpush2.msra.mxu0 0.0
    %1684 = vmatprep.subr.mxu0 0.0
    %1685 = vmatpush2.msra.mxu0 0.0
    %1686 = vmatprep.subr.mxu0 0.0
    %1687 = vmatpush2.msra.mxu0 0.0
    %1688 = vmatprep.subr.mxu0 0.0
    %1689 = vmatpush2.msra.mxu0 0.0
    %1690 = vmatprep.subr.mxu0 0.0
    %1691 = vmatpush2.msra.mxu0 0.0
    %1692 = vmatprep.subr.mxu0 0.0
    %1693 = vmatpush2.msra.mxu0 0.0
    %1694 = vmatprep.subr.mxu0 0.0
    %1695 = vmatpush2.msra.mxu0 0.0
    %1696 = vmatprep.subr.mxu0 0.0
    %1697 = vmatpush2.msra.mxu0 0.0
    %1698 = vmatprep.subr.mxu0 0.0
    %1699 = vmatpush2.msra.mxu0 0.0
    %1700 = vmatprep.subr.mxu0 0.0
    %1701 = vmatpush2.msra.mxu0 0.0
    %1702 = vmatprep.subr.mxu0 0.0
    %1703 = vmatpush2.msra.mxu0 0.0
    %1704 = vmatprep.subr.mxu0 0.0
    %1705 = vmatpush2.msra.mxu0 0.0
    %1706 = vmatprep.subr.mxu0 0.0
    %1707 = vmatpush2.msra.mxu0 0.0
    %1708 = vmatprep.mubr.f32.mxu0 0.0
    %1709 = vmatmul.mubr.f32.gmra.mxu0 %v1571
    %v1710 = vpop.f32.mrf.mxu0
    %v1711 = vadd.f32 0.0, %v1710
    %v1712 = vpop.f32.mrf.mxu0
    %v1713 = vadd.f32 0.0, %v1712
    %1714 = vdwg.mxu0
    %v1719 = vrot.slane %v1640, 4
    %v1720 = vrot.slane %v1642, 4
    %v1721 = vrot.slane %v1711, 4
    %v1722 = vrot.slane %v1713, 4
    %v1727 = vadd.f32 %v1566, %v1719
    %v1728 = vadd.f32 %v1567, %v1720
    %v1729 = vadd.f32 %v1568, %v1721
    %v1730 = vadd.f32 %v1569, %v1722
    %v1731 = vmul.f32 %v1727, 0.5
    %v1732 = vtanh.pop %v1731
    %v1733 = vmul.f32 %v1732, 0.5
    %v1734 = vadd.f32 %v1733, 0.5
    %v1735 = vmul.f32 %v1728, 0.5
    %v1736 = vtanh.pop %v1735
    %v1737 = vmul.f32 %v1736, 0.5
    %v1738 = vadd.f32 %v1737, 0.5
    %v1739 = vtanh.pop %v1729
    %v1740 = vmul.f32 %v1730, 0.5
    %v1741 = vtanh.pop %v1740
    %v1742 = vmul.f32 %v1741, 0.5
    %v1743 = vadd.f32 %v1742, 0.5
    %v1745 = vrot.slane %v1562, 6
    %v1747 = vmul.f32 %v1738, %v1745
    %v1748 = vmul.f32 %v1734, %v1739
    %v1749 = vadd.f32 %v1747, %v1748
    %v1750 = vtanh.pop %v1749
    %v1751 = vmul.f32 %v1743, %v1750
    %1752 = vst [vmem:[#allocation3 + $0x8] sm:$0x30] %v1751
    %v1753 = vld [vmem:[#allocation2 + $0x20] sm:$0xc0]
    %v1754 = vld [vmem:[#allocation2 + $0x28] sm:$0xc0]
    %v1755 = vld [vmem:[#allocation2 + $0x30] sm:$0xc0]
    %v1756 = vld [vmem:[#allocation2 + $0x38] sm:$0xc0]
    %v1758 = vrot.slane %v1751, 4
    %1760 = vmatprep.subr.mxu0 %v289
    %1761 = vmatpush1.msra.mxu0 %v288
    %1762 = vmatprep.subr.mxu0 %v285
    %1763 = vmatpush1.msra.mxu0 %v284
    %1764 = vmatprep.subr.mxu0 %v281
    %1765 = vmatpush1.msra.mxu0 %v280
    %1766 = vmatprep.subr.mxu0 %v277
    %1767 = vmatpush1.msra.mxu0 %v276
    %1768 = vmatprep.subr.mxu0 %v273
    %1769 = vmatpush1.msra.mxu0 %v272
    %1770 = vmatprep.subr.mxu0 %v269
    %1771 = vmatpush1.msra.mxu0 %v268
    %1772 = vmatprep.subr.mxu0 %v265
    %1773 = vmatpush1.msra.mxu0 %v264
    %1774 = vmatprep.subr.mxu0 %v261
    %1775 = vmatpush1.msra.mxu0 %v260
    %1776 = vmatprep.subr.mxu0 %v257
    %1777 = vmatpush1.msra.mxu0 %v256
    %1778 = vmatprep.subr.mxu0 %v253
    %1779 = vmatpush1.msra.mxu0 %v252
    %1780 = vmatprep.subr.mxu0 %v249
    %1781 = vmatpush1.msra.mxu0 %v248
    %1782 = vmatprep.subr.mxu0 %v245
    %1783 = vmatpush1.msra.mxu0 %v244
    %1784 = vmatprep.subr.mxu0 %v241
    %1785 = vmatpush1.msra.mxu0 %v240
    %1786 = vmatprep.subr.mxu0 %v237
    %1787 = vmatpush1.msra.mxu0 %v236
    %1788 = vmatprep.subr.mxu0 %v233
    %1789 = vmatpush1.msra.mxu0 %v232
    %1790 = vmatprep.subr.mxu0 %v229
    %1791 = vmatpush1.msra.mxu0 %v228
    %1792 = vmatprep.subr.mxu0 0.0
    %1793 = vmatpush2.msra.mxu0 0.0
    %1794 = vmatprep.subr.mxu0 0.0
    %1795 = vmatpush2.msra.mxu0 0.0
    %1796 = vmatprep.subr.mxu0 0.0
    %1797 = vmatpush2.msra.mxu0 0.0
    %1798 = vmatprep.subr.mxu0 0.0
    %1799 = vmatpush2.msra.mxu0 0.0
    %1800 = vmatprep.subr.mxu0 0.0
    %1801 = vmatpush2.msra.mxu0 0.0
    %1802 = vmatprep.subr.mxu0 0.0
    %1803 = vmatpush2.msra.mxu0 0.0
    %1804 = vmatprep.subr.mxu0 0.0
    %1805 = vmatpush2.msra.mxu0 0.0
    %1806 = vmatprep.subr.mxu0 0.0
    %1807 = vmatpush2.msra.mxu0 0.0
    %1808 = vmatprep.subr.mxu0 0.0
    %1809 = vmatpush2.msra.mxu0 0.0
    %1810 = vmatprep.subr.mxu0 0.0
    %1811 = vmatpush2.msra.mxu0 0.0
    %1812 = vmatprep.subr.mxu0 0.0
    %1813 = vmatpush2.msra.mxu0 0.0
    %1814 = vmatprep.subr.mxu0 0.0
    %1815 = vmatpush2.msra.mxu0 0.0
    %1816 = vmatprep.subr.mxu0 0.0
    %1817 = vmatpush2.msra.mxu0 0.0
    %1818 = vmatprep.subr.mxu0 0.0
    %1819 = vmatpush2.msra.mxu0 0.0
    %1820 = vmatprep.subr.mxu0 0.0
    %1821 = vmatpush2.msra.mxu0 0.0
    %1822 = vmatprep.subr.mxu0 0.0
    %1823 = vmatpush2.msra.mxu0 0.0
    %1824 = vmatprep.mubr.f32.mxu0 0.0
    %1825 = vmatmul.mubr.f32.gmra.mxu0 %v1758
    %v1826 = vpop.f32.mrf.mxu0
    %v1827 = vadd.f32 0.0, %v1826
    %v1828 = vpop.f32.mrf.mxu0
    %v1829 = vadd.f32 0.0, %v1828
    %1830 = vdwg.mxu0
    %1831 = vmatprep.subr.mxu0 %v291
    %1832 = vmatpush1.msra.mxu0 %v290
    %1833 = vmatprep.subr.mxu0 %v287
    %1834 = vmatpush1.msra.mxu0 %v286
    %1835 = vmatprep.subr.mxu0 %v283
    %1836 = vmatpush1.msra.mxu0 %v282
    %1837 = vmatprep.subr.mxu0 %v279
    %1838 = vmatpush1.msra.mxu0 %v278
    %1839 = vmatprep.subr.mxu0 %v275
    %1840 = vmatpush1.msra.mxu0 %v274
    %1841 = vmatprep.subr.mxu0 %v271
    %1842 = vmatpush1.msra.mxu0 %v270
    %1843 = vmatprep.subr.mxu0 %v267
    %1844 = vmatpush1.msra.mxu0 %v266
    %1845 = vmatprep.subr.mxu0 %v263
    %1846 = vmatpush1.msra.mxu0 %v262
    %1847 = vmatprep.subr.mxu0 %v259
    %1848 = vmatpush1.msra.mxu0 %v258
    %1849 = vmatprep.subr.mxu0 %v255
    %1850 = vmatpush1.msra.mxu0 %v254
    %1851 = vmatprep.subr.mxu0 %v251
    %1852 = vmatpush1.msra.mxu0 %v250
    %1853 = vmatprep.subr.mxu0 %v247
    %1854 = vmatpush1.msra.mxu0 %v246
    %1855 = vmatprep.subr.mxu0 %v243
    %1856 = vmatpush1.msra.mxu0 %v242
    %1857 = vmatprep.subr.mxu0 %v239
    %1858 = vmatpush1.msra.mxu0 %v238
    %1859 = vmatprep.subr.mxu0 %v235
    %1860 = vmatpush1.msra.mxu0 %v234
    %1861 = vmatprep.subr.mxu0 %v231
    %1862 = vmatpush1.msra.mxu0 %v230
    %1863 = vmatprep.subr.mxu0 0.0
    %1864 = vmatpush2.msra.mxu0 0.0
    %1865 = vmatprep.subr.mxu0 0.0
    %1866 = vmatpush2.msra.mxu0 0.0
    %1867 = vmatprep.subr.mxu0 0.0
    %1868 = vmatpush2.msra.mxu0 0.0
    %1869 = vmatprep.subr.mxu0 0.0
    %1870 = vmatpush2.msra.mxu0 0.0
    %1871 = vmatprep.subr.mxu0 0.0
    %1872 = vmatpush2.msra.mxu0 0.0
    %1873 = vmatprep.subr.mxu0 0.0
    %1874 = vmatpush2.msra.mxu0 0.0
    %1875 = vmatprep.subr.mxu0 0.0
    %1876 = vmatpush2.msra.mxu0 0.0
    %1877 = vmatprep.subr.mxu0 0.0
    %1878 = vmatpush2.msra.mxu0 0.0
    %1879 = vmatprep.subr.mxu0 0.0
    %1880 = vmatpush2.msra.mxu0 0.0
    %1881 = vmatprep.subr.mxu0 0.0
    %1882 = vmatpush2.msra.mxu0 0.0
    %1883 = vmatprep.subr.mxu0 0.0
    %1884 = vmatpush2.msra.mxu0 0.0
    %1885 = vmatprep.subr.mxu0 0.0
    %1886 = vmatpush2.msra.mxu0 0.0
    %1887 = vmatprep.subr.mxu0 0.0
    %1888 = vmatpush2.msra.mxu0 0.0
    %1889 = vmatprep.subr.mxu0 0.0
    %1890 = vmatpush2.msra.mxu0 0.0
    %1891 = vmatprep.subr.mxu0 0.0
    %1892 = vmatpush2.msra.mxu0 0.0
    %1893 = vmatprep.subr.mxu0 0.0
    %1894 = vmatpush2.msra.mxu0 0.0
    %1895 = vmatprep.mubr.f32.mxu0 0.0
    %1896 = vmatmul.mubr.f32.gmra.mxu0 %v1758
    %v1897 = vpop.f32.mrf.mxu0
    %v1898 = vadd.f32 0.0, %v1897
    %v1899 = vpop.f32.mrf.mxu0
    %v1900 = vadd.f32 0.0, %v1899
    %1901 = vdwg.mxu0
    %v1906 = vrot.slane %v1827, 2
    %v1907 = vrot.slane %v1829, 2
    %v1908 = vrot.slane %v1898, 2
    %v1909 = vrot.slane %v1900, 2
    %v1914 = vadd.f32 %v1753, %v1906
    %v1915 = vadd.f32 %v1754, %v1907
    %v1916 = vadd.f32 %v1755, %v1908
    %v1917 = vadd.f32 %v1756, %v1909
    %v1918 = vmul.f32 %v1914, 0.5
    %v1919 = vtanh.pop %v1918
    %v1920 = vmul.f32 %v1919, 0.5
    %v1921 = vadd.f32 %v1920, 0.5
    %v1922 = vmul.f32 %v1915, 0.5
    %v1923 = vtanh.pop %v1922
    %v1924 = vmul.f32 %v1923, 0.5
    %v1925 = vadd.f32 %v1924, 0.5
    %v1926 = vtanh.pop %v1916
    %v1927 = vmul.f32 %v1917, 0.5
    %v1928 = vtanh.pop %v1927
    %v1929 = vmul.f32 %v1928, 0.5
    %v1930 = vadd.f32 %v1929, 0.5
    %v1932 = vrot.slane %v1749, 6
    %v1934 = vmul.f32 %v1925, %v1932
    %v1935 = vmul.f32 %v1921, %v1926
    %v1936 = vadd.f32 %v1934, %v1935
    %v1937 = vtanh.pop %v1936
    %v1938 = vmul.f32 %v1930, %v1937
    %1939 = vst [vmem:[#allocation3 + $0x8] sm:$0xc0] %v1938
    %1940 = vst [vmem:[#allocation19 - $0x6] sm:$0xc0] %v1938
    %1941 = vst [vmem:[#allocation21 - $0x6] sm:$0xc0] %v1936
    %v1942 = vld [vmem:[#allocation13] sm:$0xff]
    %v1943 = vld [vmem:[#allocation13 + $0x8] sm:$0xff]
    %v1944 = vld [vmem:[#allocation13 + $0x10] sm:$0xff]
    %v1945 = vld [vmem:[#allocation13 + $0x18] sm:$0xff]
    %v1946 = vld [vmem:[#allocation13 + $0x20] sm:$0xff]
    %v1947 = vld [vmem:[#allocation13 + $0x28] sm:$0xff]
    %v1948 = vld [vmem:[#allocation13 + $0x30] sm:$0xff]
    %v1949 = vld [vmem:[#allocation13 + $0x38] sm:$0xff]
    %v1950 = vld [vmem:[#allocation13 + $0x40] sm:$0xff]
    %v1951 = vld [vmem:[#allocation13 + $0x48] sm:$0xff]
    %v1952 = vld [vmem:[#allocation13 + $0x50] sm:$0xff]
    %v1953 = vld [vmem:[#allocation13 + $0x58] sm:$0xff]
    %v1954 = vld [vmem:[#allocation13 + $0x60] sm:$0xff]
    %v1955 = vld [vmem:[#allocation13 + $0x68] sm:$0xff]
    %v1956 = vld [vmem:[#allocation13 + $0x70] sm:$0xff]
    %v1957 = vld [vmem:[#allocation13 + $0x78] sm:$0xff]
    %v1958 = vld [vmem:[#allocation13 + $0x80] sm:$0xff]
    %v1959 = vld [vmem:[#allocation13 + $0x88] sm:$0xff]
    %v1960 = vld [vmem:[#allocation13 + $0x90] sm:$0xff]
    %v1961 = vld [vmem:[#allocation13 + $0x98] sm:$0xff]
    %v1962 = vld [vmem:[#allocation13 + $0xa0] sm:$0xff]
    %v1963 = vld [vmem:[#allocation13 + $0xa8] sm:$0xff]
    %v1964 = vld [vmem:[#allocation13 + $0xb0] sm:$0xff]
    %v1965 = vld [vmem:[#allocation13 + $0xb8] sm:$0xff]
    %v1966 = vld [vmem:[#allocation13 + $0xc0] sm:$0xff]
    %v1967 = vld [vmem:[#allocation13 + $0xc8] sm:$0xff]
    %v1968 = vld [vmem:[#allocation13 + $0xd0] sm:$0xff]
    %v1969 = vld [vmem:[#allocation13 + $0xd8] sm:$0xff]
    %v1970 = vld [vmem:[#allocation13 + $0xe0] sm:$0xff]
    %v1971 = vld [vmem:[#allocation13 + $0xe8] sm:$0xff]
    %v1972 = vld [vmem:[#allocation13 + $0xf0] sm:$0xff]
    %v1973 = vld [vmem:[#allocation13 + $0xf8] sm:$0xff]
    %v1974 = vld [vmem:[#allocation13 + $0x100] sm:$0xff]
    %v1975 = vld [vmem:[#allocation13 + $0x108] sm:$0xff]
    %v1976 = vld [vmem:[#allocation13 + $0x110] sm:$0xff]
    %v1977 = vld [vmem:[#allocation13 + $0x118] sm:$0xff]
    %v1978 = vld [vmem:[#allocation13 + $0x120] sm:$0xff]
    %v1979 = vld [vmem:[#allocation13 + $0x128] sm:$0xff]
    %v1980 = vld [vmem:[#allocation13 + $0x130] sm:$0xff]
    %v1981 = vld [vmem:[#allocation13 + $0x138] sm:$0xff]
    %v1982 = vld [vmem:[#allocation13 + $0x140] sm:$0xff]
    %v1983 = vld [vmem:[#allocation13 + $0x148] sm:$0xff]
    %v1984 = vld [vmem:[#allocation13 + $0x150] sm:$0xff]
    %v1985 = vld [vmem:[#allocation13 + $0x158] sm:$0xff]
    %v1986 = vld [vmem:[#allocation13 + $0x160] sm:$0xff]
    %v1987 = vld [vmem:[#allocation13 + $0x168] sm:$0xff]
    %v1988 = vld [vmem:[#allocation13 + $0x170] sm:$0xff]
    %v1989 = vld [vmem:[#allocation13 + $0x178] sm:$0xff]
    %v1990 = vld [vmem:[#allocation13 + $0x180] sm:$0xff]
    %v1991 = vld [vmem:[#allocation13 + $0x188] sm:$0xff]
    %v1992 = vld [vmem:[#allocation13 + $0x190] sm:$0xff]
    %v1993 = vld [vmem:[#allocation13 + $0x198] sm:$0xff]
    %v1994 = vld [vmem:[#allocation13 + $0x1a0] sm:$0xff]
    %v1995 = vld [vmem:[#allocation13 + $0x1a8] sm:$0xff]
    %v1996 = vld [vmem:[#allocation13 + $0x1b0] sm:$0xff]
    %v1997 = vld [vmem:[#allocation13 + $0x1b8] sm:$0xff]
    %v1998 = vld [vmem:[#allocation13 + $0x1c0] sm:$0xff]
    %v1999 = vld [vmem:[#allocation13 + $0x1c8] sm:$0xff]
    %v2000 = vld [vmem:[#allocation13 + $0x1d0] sm:$0xff]
    %v2001 = vld [vmem:[#allocation13 + $0x1d8] sm:$0xff]
    %v2002 = vld [vmem:[#allocation13 + $0x1e0] sm:$0xff]
    %v2003 = vld [vmem:[#allocation13 + $0x1e8] sm:$0xff]
    %v2004 = vld [vmem:[#allocation13 + $0x1f0] sm:$0xff]
    %v2005 = vld [vmem:[#allocation13 + $0x1f8] sm:$0xff]
    %v2006 = vld [vmem:[#allocation15] sm:$0xff]
    %v2007 = vld [vmem:[#allocation15 + $0x8] sm:$0xff]
    %v2008 = vld [vmem:[#allocation15 + $0x10] sm:$0xff]
    %v2009 = vld [vmem:[#allocation15 + $0x18] sm:$0xff]
    %v2010 = vld [vmem:[#allocation15 + $0x20] sm:$0xff]
    %v2011 = vld [vmem:[#allocation15 + $0x28] sm:$0xff]
    %v2012 = vld [vmem:[#allocation15 + $0x30] sm:$0xff]
    %v2013 = vld [vmem:[#allocation15 + $0x38] sm:$0xff]
    %v2014 = vld [vmem:[#allocation15 + $0x40] sm:$0xff]
    %v2015 = vld [vmem:[#allocation15 + $0x48] sm:$0xff]
    %v2016 = vld [vmem:[#allocation15 + $0x50] sm:$0xff]
    %v2017 = vld [vmem:[#allocation15 + $0x58] sm:$0xff]
    %v2018 = vld [vmem:[#allocation15 + $0x60] sm:$0xff]
    %v2019 = vld [vmem:[#allocation15 + $0x68] sm:$0xff]
    %v2020 = vld [vmem:[#allocation15 + $0x70] sm:$0xff]
    %v2021 = vld [vmem:[#allocation15 + $0x78] sm:$0xff]
    %v2022 = vld [vmem:[#allocation15 + $0x80] sm:$0xff]
    %v2023 = vld [vmem:[#allocation15 + $0x88] sm:$0xff]
    %v2024 = vld [vmem:[#allocation15 + $0x90] sm:$0xff]
    %v2025 = vld [vmem:[#allocation15 + $0x98] sm:$0xff]
    %v2026 = vld [vmem:[#allocation15 + $0xa0] sm:$0xff]
    %v2027 = vld [vmem:[#allocation15 + $0xa8] sm:$0xff]
    %v2028 = vld [vmem:[#allocation15 + $0xb0] sm:$0xff]
    %v2029 = vld [vmem:[#allocation15 + $0xb8] sm:$0xff]
    %v2030 = vld [vmem:[#allocation15 + $0xc0] sm:$0xff]
    %v2031 = vld [vmem:[#allocation15 + $0xc8] sm:$0xff]
    %v2032 = vld [vmem:[#allocation15 + $0xd0] sm:$0xff]
    %v2033 = vld [vmem:[#allocation15 + $0xd8] sm:$0xff]
    %v2034 = vld [vmem:[#allocation15 + $0xe0] sm:$0xff]
    %v2035 = vld [vmem:[#allocation15 + $0xe8] sm:$0xff]
    %v2036 = vld [vmem:[#allocation15 + $0xf0] sm:$0xff]
    %v2037 = vld [vmem:[#allocation15 + $0xf8] sm:$0xff]
    %v2038 = vld [vmem:[#allocation15 + $0x100] sm:$0xff]
    %v2039 = vld [vmem:[#allocation15 + $0x108] sm:$0xff]
    %v2040 = vld [vmem:[#allocation15 + $0x110] sm:$0xff]
    %v2041 = vld [vmem:[#allocation15 + $0x118] sm:$0xff]
    %v2042 = vld [vmem:[#allocation15 + $0x120] sm:$0xff]
    %v2043 = vld [vmem:[#allocation15 + $0x128] sm:$0xff]
    %v2044 = vld [vmem:[#allocation15 + $0x130] sm:$0xff]
    %v2045 = vld [vmem:[#allocation15 + $0x138] sm:$0xff]
    %v2046 = vld [vmem:[#allocation15 + $0x140] sm:$0xff]
    %v2047 = vld [vmem:[#allocation15 + $0x148] sm:$0xff]
    %v2048 = vld [vmem:[#allocation15 + $0x150] sm:$0xff]
    %v2049 = vld [vmem:[#allocation15 + $0x158] sm:$0xff]
    %v2050 = vld [vmem:[#allocation15 + $0x160] sm:$0xff]
    %v2051 = vld [vmem:[#allocation15 + $0x168] sm:$0xff]
    %v2052 = vld [vmem:[#allocation15 + $0x170] sm:$0xff]
    %v2053 = vld [vmem:[#allocation15 + $0x178] sm:$0xff]
    %v2054 = vld [vmem:[#allocation15 + $0x180] sm:$0xff]
    %v2055 = vld [vmem:[#allocation15 + $0x188] sm:$0xff]
    %v2056 = vld [vmem:[#allocation15 + $0x190] sm:$0xff]
    %v2057 = vld [vmem:[#allocation15 + $0x198] sm:$0xff]
    %v2058 = vld [vmem:[#allocation15 + $0x1a0] sm:$0xff]
    %v2059 = vld [vmem:[#allocation15 + $0x1a8] sm:$0xff]
    %v2060 = vld [vmem:[#allocation15 + $0x1b0] sm:$0xff]
    %v2061 = vld [vmem:[#allocation15 + $0x1b8] sm:$0xff]
    %v2062 = vld [vmem:[#allocation15 + $0x1c0] sm:$0xff]
    %v2063 = vld [vmem:[#allocation15 + $0x1c8] sm:$0xff]
    %v2064 = vld [vmem:[#allocation15 + $0x1d0] sm:$0xff]
    %v2065 = vld [vmem:[#allocation15 + $0x1d8] sm:$0xff]
    %v2066 = vld [vmem:[#allocation15 + $0x1e0] sm:$0xff]
    %v2067 = vld [vmem:[#allocation15 + $0x1e8] sm:$0xff]
    %v2068 = vld [vmem:[#allocation15 + $0x1f0] sm:$0xff]
    %v2069 = vld [vmem:[#allocation15 + $0x1f8] sm:$0xff]
    %v2070 = vld [vmem:[%s8] sm:$0xf]
    %v2071 = vld [vmem:[#allocation3] sm:$0xff]
    %v2072 = vld [vmem:[#allocation3 + $0x8] sm:$0xff]
    %v2074 = vlaneseq
    %v2075 = vshrl.u32 %v2074, 7
    %v2076 = vsub.s32 0, %v2075
    %v2077 = vrot.slane %v2070, %v2076
    %v2078 = vlaneseq
    %v2079 = vshrl.u32 %v2078, 7
    %v2080 = vsub.s32 1, %v2079
    %v2081 = vrot.slane %v2070, %v2080
    %v2082 = vlaneseq
    %v2083 = vshrl.u32 %v2082, 7
    %v2084 = vsub.s32 2, %v2083
    %v2085 = vrot.slane %v2070, %v2084
    %v2086 = vlaneseq
    %v2087 = vshrl.u32 %v2086, 7
    %v2088 = vsub.s32 3, %v2087
    %v2089 = vrot.slane %v2070, %v2088
    %2094 = vmatprep.subr.mxu0 %v2003
    %2095 = vmatpush1.msra.mxu0 %v2002
    %2096 = vmatprep.subr.mxu0 %v1999
    %2097 = vmatpush1.msra.mxu0 %v1998
    %2098 = vmatprep.subr.mxu0 %v1995
    %2099 = vmatpush1.msra.mxu0 %v1994
    %2100 = vmatprep.subr.mxu0 %v1991
    %2101 = vmatpush1.msra.mxu0 %v1990
    %2102 = vmatprep.subr.mxu0 %v1987
    %2103 = vmatpush1.msra.mxu0 %v1986
    %2104 = vmatprep.subr.mxu0 %v1983
    %2105 = vmatpush1.msra.mxu0 %v1982
    %2106 = vmatprep.subr.mxu0 %v1979
    %2107 = vmatpush1.msra.mxu0 %v1978
    %2108 = vmatprep.subr.mxu0 %v1975
    %2109 = vmatpush1.msra.mxu0 %v1974
    %2110 = vmatprep.subr.mxu0 %v1971
    %2111 = vmatpush1.msra.mxu0 %v1970
    %2112 = vmatprep.subr.mxu0 %v1967
    %2113 = vmatpush1.msra.mxu0 %v1966
    %2114 = vmatprep.subr.mxu0 %v1963
    %2115 = vmatpush1.msra.mxu0 %v1962
    %2116 = vmatprep.subr.mxu0 %v1959
    %2117 = vmatpush1.msra.mxu0 %v1958
    %2118 = vmatprep.subr.mxu0 %v1955
    %2119 = vmatpush1.msra.mxu0 %v1954
    %2120 = vmatprep.subr.mxu0 %v1951
    %2121 = vmatpush1.msra.mxu0 %v1950
    %2122 = vmatprep.subr.mxu0 %v1947
    %2123 = vmatpush1.msra.mxu0 %v1946
    %2124 = vmatprep.subr.mxu0 %v1943
    %2125 = vmatpush1.msra.mxu0 %v1942
    %2126 = vmatprep.subr.mxu0 0.0
    %2127 = vmatpush2.msra.mxu0 0.0
    %2128 = vmatprep.subr.mxu0 0.0
    %2129 = vmatpush2.msra.mxu0 0.0
    %2130 = vmatprep.subr.mxu0 0.0
    %2131 = vmatpush2.msra.mxu0 0.0
    %2132 = vmatprep.subr.mxu0 0.0
    %2133 = vmatpush2.msra.mxu0 0.0
    %2134 = vmatprep.subr.mxu0 0.0
    %2135 = vmatpush2.msra.mxu0 0.0
    %2136 = vmatprep.subr.mxu0 0.0
    %2137 = vmatpush2.msra.mxu0 0.0
    %2138 = vmatprep.subr.mxu0 0.0
    %2139 = vmatpush2.msra.mxu0 0.0
    %2140 = vmatprep.subr.mxu0 0.0
    %2141 = vmatpush2.msra.mxu0 0.0
    %2142 = vmatprep.subr.mxu0 0.0
    %2143 = vmatpush2.msra.mxu0 0.0
    %2144 = vmatprep.subr.mxu0 0.0
    %2145 = vmatpush2.msra.mxu0 0.0
    %2146 = vmatprep.subr.mxu0 0.0
    %2147 = vmatpush2.msra.mxu0 0.0
    %2148 = vmatprep.subr.mxu0 0.0
    %2149 = vmatpush2.msra.mxu0 0.0
    %2150 = vmatprep.subr.mxu0 0.0
    %2151 = vmatpush2.msra.mxu0 0.0
    %2152 = vmatprep.subr.mxu0 0.0
    %2153 = vmatpush2.msra.mxu0 0.0
    %2154 = vmatprep.subr.mxu0 0.0
    %2155 = vmatpush2.msra.mxu0 0.0
    %2156 = vmatprep.subr.mxu0 0.0
    %2157 = vmatpush2.msra.mxu0 0.0
    %2158 = vmatprep.mubr.f32.mxu0 0.0
    %2159 = vmatmul.mubr.f32.gmra.mxu0 %v2071
    %v2160 = vpop.f32.mrf.mxu0
    %v2161 = vadd.f32 %v2077, %v2160
    %v2162 = vpop.f32.mrf.mxu0
    %v2163 = vadd.f32 %v2081, %v2162
    %2164 = vmatprep.mubr.f32.mxu0 0.0
    %2165 = vmatmul.mubr.f32.gmra.mxu0 %v2072
    %v2166 = vpop.f32.mrf.mxu0
    %v2167 = vadd.f32 %v2077, %v2166
    %v2168 = vpop.f32.mrf.mxu0
    %v2169 = vadd.f32 %v2081, %v2168
    %2170 = vdwg.mxu0
    %2171 = vmatprep.subr.mxu0 %v2005
    %2172 = vmatpush1.msra.mxu0 %v2004
    %2173 = vmatprep.subr.mxu0 %v2001
    %2174 = vmatpush1.msra.mxu0 %v2000
    %2175 = vmatprep.subr.mxu0 %v1997
    %2176 = vmatpush1.msra.mxu0 %v1996
    %2177 = vmatprep.subr.mxu0 %v1993
    %2178 = vmatpush1.msra.mxu0 %v1992
    %2179 = vmatprep.subr.mxu0 %v1989
    %2180 = vmatpush1.msra.mxu0 %v1988
    %2181 = vmatprep.subr.mxu0 %v1985
    %2182 = vmatpush1.msra.mxu0 %v1984
    %2183 = vmatprep.subr.mxu0 %v1981
    %2184 = vmatpush1.msra.mxu0 %v1980
    %2185 = vmatprep.subr.mxu0 %v1977
    %2186 = vmatpush1.msra.mxu0 %v1976
    %2187 = vmatprep.subr.mxu0 %v1973
    %2188 = vmatpush1.msra.mxu0 %v1972
    %2189 = vmatprep.subr.mxu0 %v1969
    %2190 = vmatpush1.msra.mxu0 %v1968
    %2191 = vmatprep.subr.mxu0 %v1965
    %2192 = vmatpush1.msra.mxu0 %v1964
    %2193 = vmatprep.subr.mxu0 %v1961
    %2194 = vmatpush1.msra.mxu0 %v1960
    %2195 = vmatprep.subr.mxu0 %v1957
    %2196 = vmatpush1.msra.mxu0 %v1956
    %2197 = vmatprep.subr.mxu0 %v1953
    %2198 = vmatpush1.msra.mxu0 %v1952
    %2199 = vmatprep.subr.mxu0 %v1949
    %2200 = vmatpush1.msra.mxu0 %v1948
    %2201 = vmatprep.subr.mxu0 %v1945
    %2202 = vmatpush1.msra.mxu0 %v1944
    %2203 = vmatprep.subr.mxu0 0.0
    %2204 = vmatpush2.msra.mxu0 0.0
    %2205 = vmatprep.subr.mxu0 0.0
    %2206 = vmatpush2.msra.mxu0 0.0
    %2207 = vmatprep.subr.mxu0 0.0
    %2208 = vmatpush2.msra.mxu0 0.0
    %2209 = vmatprep.subr.mxu0 0.0
    %2210 = vmatpush2.msra.mxu0 0.0
    %2211 = vmatprep.subr.mxu0 0.0
    %2212 = vmatpush2.msra.mxu0 0.0
    %2213 = vmatprep.subr.mxu0 0.0
    %2214 = vmatpush2.msra.mxu0 0.0
    %2215 = vmatprep.subr.mxu0 0.0
    %2216 = vmatpush2.msra.mxu0 0.0
    %2217 = vmatprep.subr.mxu0 0.0
    %2218 = vmatpush2.msra.mxu0 0.0
    %2219 = vmatprep.subr.mxu0 0.0
    %2220 = vmatpush2.msra.mxu0 0.0
    %2221 = vmatprep.subr.mxu0 0.0
    %2222 = vmatpush2.msra.mxu0 0.0
    %2223 = vmatprep.subr.mxu0 0.0
    %2224 = vmatpush2.msra.mxu0 0.0
    %2225 = vmatprep.subr.mxu0 0.0
    %2226 = vmatpush2.msra.mxu0 0.0
    %2227 = vmatprep.subr.mxu0 0.0
    %2228 = vmatpush2.msra.mxu0 0.0
    %2229 = vmatprep.subr.mxu0 0.0
    %2230 = vmatpush2.msra.mxu0 0.0
    %2231 = vmatprep.subr.mxu0 0.0
    %2232 = vmatpush2.msra.mxu0 0.0
    %2233 = vmatprep.subr.mxu0 0.0
    %2234 = vmatpush2.msra.mxu0 0.0
    %2235 = vmatprep.mubr.f32.mxu0 0.0
    %2236 = vmatmul.mubr.f32.gmra.mxu0 %v2071
    %v2237 = vpop.f32.mrf.mxu0
    %v2238 = vadd.f32 %v2085, %v2237
    %v2239 = vpop.f32.mrf.mxu0
    %v2240 = vadd.f32 %v2089, %v2239
    %2241 = vmatprep.mubr.f32.mxu0 0.0
    %2242 = vmatmul.mubr.f32.gmra.mxu0 %v2072
    %v2243 = vpop.f32.mrf.mxu0
    %v2244 = vadd.f32 %v2085, %v2243
    %v2245 = vpop.f32.mrf.mxu0
    %v2246 = vadd.f32 %v2089, %v2245
    %2247 = vdwg.mxu0
    %2248 = vst [vmem:[#allocation2] sm:$0xff] %v2161
    %2249 = vst [vmem:[#allocation2 + $0x8] sm:$0xff] %v2163
    %2250 = vst [vmem:[#allocation2 + $0x10] sm:$0xff] %v2238
    %2251 = vst [vmem:[#allocation2 + $0x18] sm:$0xff] %v2240
    %2252 = vst [vmem:[#allocation2 + $0x20] sm:$0xff] %v2167
    %2253 = vst [vmem:[#allocation2 + $0x28] sm:$0xff] %v2169
    %2254 = vst [vmem:[#allocation2 + $0x30] sm:$0xff] %v2244
    %2255 = vst [vmem:[#allocation2 + $0x38] sm:$0xff] %v2246
    %s2256 = scalar_lea.vmem [#allocation19], 2
    %v2257 = vld [vmem:[%s2256] sm:$0x3]
    %s2258 = scalar_lea.vmem [#allocation21], 2
    %v2259 = vld [vmem:[%s2258] sm:$0x3]
    %v2260 = vld [vmem:[#allocation2] sm:$0x3]
    %v2261 = vld [vmem:[#allocation2 + $0x8] sm:$0x3]
    %v2262 = vld [vmem:[#allocation2 + $0x10] sm:$0x3]
    %v2263 = vld [vmem:[#allocation2 + $0x18] sm:$0x3]
    %2264 = vmatprep.subr.mxu0 %v2067
    %2265 = vmatpush1.msra.mxu0 %v2066
    %2266 = vmatprep.subr.mxu0 %v2063
    %2267 = vmatpush1.msra.mxu0 %v2062
    %2268 = vmatprep.subr.mxu0 %v2059
    %2269 = vmatpush1.msra.mxu0 %v2058
    %2270 = vmatprep.subr.mxu0 %v2055
    %2271 = vmatpush1.msra.mxu0 %v2054
    %2272 = vmatprep.subr.mxu0 %v2051
    %2273 = vmatpush1.msra.mxu0 %v2050
    %2274 = vmatprep.subr.mxu0 %v2047
    %2275 = vmatpush1.msra.mxu0 %v2046
    %2276 = vmatprep.subr.mxu0 %v2043
    %2277 = vmatpush1.msra.mxu0 %v2042
    %2278 = vmatprep.subr.mxu0 %v2039
    %2279 = vmatpush1.msra.mxu0 %v2038
    %2280 = vmatprep.subr.mxu0 %v2035
    %2281 = vmatpush1.msra.mxu0 %v2034
    %2282 = vmatprep.subr.mxu0 %v2031
    %2283 = vmatpush1.msra.mxu0 %v2030
    %2284 = vmatprep.subr.mxu0 %v2027
    %2285 = vmatpush1.msra.mxu0 %v2026
    %2286 = vmatprep.subr.mxu0 %v2023
    %2287 = vmatpush1.msra.mxu0 %v2022
    %2288 = vmatprep.subr.mxu0 %v2019
    %2289 = vmatpush1.msra.mxu0 %v2018
    %2290 = vmatprep.subr.mxu0 %v2015
    %2291 = vmatpush1.msra.mxu0 %v2014
    %2292 = vmatprep.subr.mxu0 %v2011
    %2293 = vmatpush1.msra.mxu0 %v2010
    %2294 = vmatprep.subr.mxu0 %v2007
    %2295 = vmatpush1.msra.mxu0 %v2006
    %2296 = vmatprep.subr.mxu0 0.0
    %2297 = vmatpush2.msra.mxu0 0.0
    %2298 = vmatprep.subr.mxu0 0.0
    %2299 = vmatpush2.msra.mxu0 0.0
    %2300 = vmatprep.subr.mxu0 0.0
    %2301 = vmatpush2.msra.mxu0 0.0
    %2302 = vmatprep.subr.mxu0 0.0
    %2303 = vmatpush2.msra.mxu0 0.0
    %2304 = vmatprep.subr.mxu0 0.0
    %2305 = vmatpush2.msra.mxu0 0.0
    %2306 = vmatprep.subr.mxu0 0.0
    %2307 = vmatpush2.msra.mxu0 0.0
    %2308 = vmatprep.subr.mxu0 0.0
    %2309 = vmatpush2.msra.mxu0 0.0
    %2310 = vmatprep.subr.mxu0 0.0
    %2311 = vmatpush2.msra.mxu0 0.0
    %2312 = vmatprep.subr.mxu0 0.0
    %2313 = vmatpush2.msra.mxu0 0.0
    %2314 = vmatprep.subr.mxu0 0.0
    %2315 = vmatpush2.msra.mxu0 0.0
    %2316 = vmatprep.subr.mxu0 0.0
    %2317 = vmatpush2.msra.mxu0 0.0
    %2318 = vmatprep.subr.mxu0 0.0
    %2319 = vmatpush2.msra.mxu0 0.0
    %2320 = vmatprep.subr.mxu0 0.0
    %2321 = vmatpush2.msra.mxu0 0.0
    %2322 = vmatprep.subr.mxu0 0.0
    %2323 = vmatpush2.msra.mxu0 0.0
    %2324 = vmatprep.subr.mxu0 0.0
    %2325 = vmatpush2.msra.mxu0 0.0
    %2326 = vmatprep.subr.mxu0 0.0
    %2327 = vmatpush2.msra.mxu0 0.0
    %2328 = vmatprep.mubr.f32.mxu0 0.0
    %2329 = vmatmul.mubr.f32.gmra.mxu0 %v2257
    %v2330 = vpop.f32.mrf.mxu0
    %v2331 = vadd.f32 0.0, %v2330
    %v2332 = vpop.f32.mrf.mxu0
    %v2333 = vadd.f32 0.0, %v2332
    %2334 = vdwg.mxu0
    %2335 = vmatprep.subr.mxu0 %v2069
    %2336 = vmatpush1.msra.mxu0 %v2068
    %2337 = vmatprep.subr.mxu0 %v2065
    %2338 = vmatpush1.msra.mxu0 %v2064
    %2339 = vmatprep.subr.mxu0 %v2061
    %2340 = vmatpush1.msra.mxu0 %v2060
    %2341 = vmatprep.subr.mxu0 %v2057
    %2342 = vmatpush1.msra.mxu0 %v2056
    %2343 = vmatprep.subr.mxu0 %v2053
    %2344 = vmatpush1.msra.mxu0 %v2052
    %2345 = vmatprep.subr.mxu0 %v2049
    %2346 = vmatpush1.msra.mxu0 %v2048
    %2347 = vmatprep.subr.mxu0 %v2045
    %2348 = vmatpush1.msra.mxu0 %v2044
    %2349 = vmatprep.subr.mxu0 %v2041
    %2350 = vmatpush1.msra.mxu0 %v2040
    %2351 = vmatprep.subr.mxu0 %v2037
    %2352 = vmatpush1.msra.mxu0 %v2036
    %2353 = vmatprep.subr.mxu0 %v2033
    %2354 = vmatpush1.msra.mxu0 %v2032
    %2355 = vmatprep.subr.mxu0 %v2029
    %2356 = vmatpush1.msra.mxu0 %v2028
    %2357 = vmatprep.subr.mxu0 %v2025
    %2358 = vmatpush1.msra.mxu0 %v2024
    %2359 = vmatprep.subr.mxu0 %v2021
    %2360 = vmatpush1.msra.mxu0 %v2020
    %2361 = vmatprep.subr.mxu0 %v2017
    %2362 = vmatpush1.msra.mxu0 %v2016
    %2363 = vmatprep.subr.mxu0 %v2013
    %2364 = vmatpush1.msra.mxu0 %v2012
    %2365 = vmatprep.subr.mxu0 %v2009
    %2366 = vmatpush1.msra.mxu0 %v2008
    %2367 = vmatprep.subr.mxu0 0.0
    %2368 = vmatpush2.msra.mxu0 0.0
    %2369 = vmatprep.subr.mxu0 0.0
    %2370 = vmatpush2.msra.mxu0 0.0
    %2371 = vmatprep.subr.mxu0 0.0
    %2372 = vmatpush2.msra.mxu0 0.0
    %2373 = vmatprep.subr.mxu0 0.0
    %2374 = vmatpush2.msra.mxu0 0.0
    %2375 = vmatprep.subr.mxu0 0.0
    %2376 = vmatpush2.msra.mxu0 0.0
    %2377 = vmatprep.subr.mxu0 0.0
    %2378 = vmatpush2.msra.mxu0 0.0
    %2379 = vmatprep.subr.mxu0 0.0
    %2380 = vmatpush2.msra.mxu0 0.0
    %2381 = vmatprep.subr.mxu0 0.0
    %2382 = vmatpush2.msra.mxu0 0.0
    %2383 = vmatprep.subr.mxu0 0.0
    %2384 = vmatpush2.msra.mxu0 0.0
    %2385 = vmatprep.subr.mxu0 0.0
    %2386 = vmatpush2.msra.mxu0 0.0
    %2387 = vmatprep.subr.mxu0 0.0
    %2388 = vmatpush2.msra.mxu0 0.0
    %2389 = vmatprep.subr.mxu0 0.0
    %2390 = vmatpush2.msra.mxu0 0.0
    %2391 = vmatprep.subr.mxu0 0.0
    %2392 = vmatpush2.msra.mxu0 0.0
    %2393 = vmatprep.subr.mxu0 0.0
    %2394 = vmatpush2.msra.mxu0 0.0
    %2395 = vmatprep.subr.mxu0 0.0
    %2396 = vmatpush2.msra.mxu0 0.0
    %2397 = vmatprep.subr.mxu0 0.0
    %2398 = vmatpush2.msra.mxu0 0.0
    %2399 = vmatprep.mubr.f32.mxu0 0.0
    %2400 = vmatmul.mubr.f32.gmra.mxu0 %v2257
    %v2401 = vpop.f32.mrf.mxu0
    %v2402 = vadd.f32 0.0, %v2401
    %v2403 = vpop.f32.mrf.mxu0
    %v2404 = vadd.f32 0.0, %v2403
    %2405 = vdwg.mxu0
    %v2406 = vadd.f32 %v2260, %v2331
    %v2407 = vadd.f32 %v2261, %v2333
    %v2408 = vadd.f32 %v2262, %v2402
    %v2409 = vadd.f32 %v2263, %v2404
    %v2410 = vmul.f32 %v2406, 0.5
    %v2411 = vtanh.pop %v2410
    %v2412 = vmul.f32 %v2411, 0.5
    %v2413 = vadd.f32 %v2412, 0.5
    %v2414 = vmul.f32 %v2407, 0.5
    %v2415 = vtanh.pop %v2414
    %v2416 = vmul.f32 %v2415, 0.5
    %v2417 = vadd.f32 %v2416, 0.5
    %v2418 = vtanh.pop %v2408
    %v2419 = vmul.f32 %v2409, 0.5
    %v2420 = vtanh.pop %v2419
    %v2421 = vmul.f32 %v2420, 0.5
    %v2422 = vadd.f32 %v2421, 0.5
    %v2423 = vmul.f32 %v2417, %v2259
    %v2424 = vmul.f32 %v2413, %v2418
    %v2425 = vadd.f32 %v2423, %v2424
    %v2426 = vtanh.pop %v2425
    %v2427 = vmul.f32 %v2422, %v2426
    %2428 = vst [vmem:[#allocation3] sm:$0x3] %v2427
    %v2429 = vld [vmem:[#allocation2] sm:$0xc]
    %v2430 = vld [vmem:[#allocation2 + $0x8] sm:$0xc]
    %v2431 = vld [vmem:[#allocation2 + $0x10] sm:$0xc]
    %v2432 = vld [vmem:[#allocation2 + $0x18] sm:$0xc]
    %2433 = vmatprep.subr.mxu0 %v2067
    %2434 = vmatpush1.msra.mxu0 %v2066
    %2435 = vmatprep.subr.mxu0 %v2063
    %2436 = vmatpush1.msra.mxu0 %v2062
    %2437 = vmatprep.subr.mxu0 %v2059
    %2438 = vmatpush1.msra.mxu0 %v2058
    %2439 = vmatprep.subr.mxu0 %v2055
    %2440 = vmatpush1.msra.mxu0 %v2054
    %2441 = vmatprep.subr.mxu0 %v2051
    %2442 = vmatpush1.msra.mxu0 %v2050
    %2443 = vmatprep.subr.mxu0 %v2047
    %2444 = vmatpush1.msra.mxu0 %v2046
    %2445 = vmatprep.subr.mxu0 %v2043
    %2446 = vmatpush1.msra.mxu0 %v2042
    %2447 = vmatprep.subr.mxu0 %v2039
    %2448 = vmatpush1.msra.mxu0 %v2038
    %2449 = vmatprep.subr.mxu0 %v2035
    %2450 = vmatpush1.msra.mxu0 %v2034
    %2451 = vmatprep.subr.mxu0 %v2031
    %2452 = vmatpush1.msra.mxu0 %v2030
    %2453 = vmatprep.subr.mxu0 %v2027
    %2454 = vmatpush1.msra.mxu0 %v2026
    %2455 = vmatprep.subr.mxu0 %v2023
    %2456 = vmatpush1.msra.mxu0 %v2022
    %2457 = vmatprep.subr.mxu0 %v2019
    %2458 = vmatpush1.msra.mxu0 %v2018
    %2459 = vmatprep.subr.mxu0 %v2015
    %2460 = vmatpush1.msra.mxu0 %v2014
    %2461 = vmatprep.subr.mxu0 %v2011
    %2462 = vmatpush1.msra.mxu0 %v2010
    %2463 = vmatprep.subr.mxu0 %v2007
    %2464 = vmatpush1.msra.mxu0 %v2006
    %2465 = vmatprep.subr.mxu0 0.0
    %2466 = vmatpush2.msra.mxu0 0.0
    %2467 = vmatprep.subr.mxu0 0.0
    %2468 = vmatpush2.msra.mxu0 0.0
    %2469 = vmatprep.subr.mxu0 0.0
    %2470 = vmatpush2.msra.mxu0 0.0
    %2471 = vmatprep.subr.mxu0 0.0
    %2472 = vmatpush2.msra.mxu0 0.0
    %2473 = vmatprep.subr.mxu0 0.0
    %2474 = vmatpush2.msra.mxu0 0.0
    %2475 = vmatprep.subr.mxu0 0.0
    %2476 = vmatpush2.msra.mxu0 0.0
    %2477 = vmatprep.subr.mxu0 0.0
    %2478 = vmatpush2.msra.mxu0 0.0
    %2479 = vmatprep.subr.mxu0 0.0
    %2480 = vmatpush2.msra.mxu0 0.0
    %2481 = vmatprep.subr.mxu0 0.0
    %2482 = vmatpush2.msra.mxu0 0.0
    %2483 = vmatprep.subr.mxu0 0.0
    %2484 = vmatpush2.msra.mxu0 0.0
    %2485 = vmatprep.subr.mxu0 0.0
    %2486 = vmatpush2.msra.mxu0 0.0
    %2487 = vmatprep.subr.mxu0 0.0
    %2488 = vmatpush2.msra.mxu0 0.0
    %2489 = vmatprep.subr.mxu0 0.0
    %2490 = vmatpush2.msra.mxu0 0.0
    %2491 = vmatprep.subr.mxu0 0.0
    %2492 = vmatpush2.msra.mxu0 0.0
    %2493 = vmatprep.subr.mxu0 0.0
    %2494 = vmatpush2.msra.mxu0 0.0
    %2495 = vmatprep.subr.mxu0 0.0
    %2496 = vmatpush2.msra.mxu0 0.0
    %2497 = vmatprep.mubr.f32.mxu0 0.0
    %2498 = vmatmul.mubr.f32.gmra.mxu0 %v2427
    %v2499 = vpop.f32.mrf.mxu0
    %v2500 = vadd.f32 0.0, %v2499
    %v2501 = vpop.f32.mrf.mxu0
    %v2502 = vadd.f32 0.0, %v2501
    %2503 = vdwg.mxu0
    %2504 = vmatprep.subr.mxu0 %v2069
    %2505 = vmatpush1.msra.mxu0 %v2068
    %2506 = vmatprep.subr.mxu0 %v2065
    %2507 = vmatpush1.msra.mxu0 %v2064
    %2508 = vmatprep.subr.mxu0 %v2061
    %2509 = vmatpush1.msra.mxu0 %v2060
    %2510 = vmatprep.subr.mxu0 %v2057
    %2511 = vmatpush1.msra.mxu0 %v2056
    %2512 = vmatprep.subr.mxu0 %v2053
    %2513 = vmatpush1.msra.mxu0 %v2052
    %2514 = vmatprep.subr.mxu0 %v2049
    %2515 = vmatpush1.msra.mxu0 %v2048
    %2516 = vmatprep.subr.mxu0 %v2045
    %2517 = vmatpush1.msra.mxu0 %v2044
    %2518 = vmatprep.subr.mxu0 %v2041
    %2519 = vmatpush1.msra.mxu0 %v2040
    %2520 = vmatprep.subr.mxu0 %v2037
    %2521 = vmatpush1.msra.mxu0 %v2036
    %2522 = vmatprep.subr.mxu0 %v2033
    %2523 = vmatpush1.msra.mxu0 %v2032
    %2524 = vmatprep.subr.mxu0 %v2029
    %2525 = vmatpush1.msra.mxu0 %v2028
    %2526 = vmatprep.subr.mxu0 %v2025
    %2527 = vmatpush1.msra.mxu0 %v2024
    %2528 = vmatprep.subr.mxu0 %v2021
    %2529 = vmatpush1.msra.mxu0 %v2020
    %2530 = vmatprep.subr.mxu0 %v2017
    %2531 = vmatpush1.msra.mxu0 %v2016
    %2532 = vmatprep.subr.mxu0 %v2013
    %2533 = vmatpush1.msra.mxu0 %v2012
    %2534 = vmatprep.subr.mxu0 %v2009
    %2535 = vmatpush1.msra.mxu0 %v2008
    %2536 = vmatprep.subr.mxu0 0.0
    %2537 = vmatpush2.msra.mxu0 0.0
    %2538 = vmatprep.subr.mxu0 0.0
    %2539 = vmatpush2.msra.mxu0 0.0
    %2540 = vmatprep.subr.mxu0 0.0
    %2541 = vmatpush2.msra.mxu0 0.0
    %2542 = vmatprep.subr.mxu0 0.0
    %2543 = vmatpush2.msra.mxu0 0.0
    %2544 = vmatprep.subr.mxu0 0.0
    %2545 = vmatpush2.msra.mxu0 0.0
    %2546 = vmatprep.subr.mxu0 0.0
    %2547 = vmatpush2.msra.mxu0 0.0
    %2548 = vmatprep.subr.mxu0 0.0
    %2549 = vmatpush2.msra.mxu0 0.0
    %2550 = vmatprep.subr.mxu0 0.0
    %2551 = vmatpush2.msra.mxu0 0.0
    %2552 = vmatprep.subr.mxu0 0.0
    %2553 = vmatpush2.msra.mxu0 0.0
    %2554 = vmatprep.subr.mxu0 0.0
    %2555 = vmatpush2.msra.mxu0 0.0
    %2556 = vmatprep.subr.mxu0 0.0
    %2557 = vmatpush2.msra.mxu0 0.0
    %2558 = vmatprep.subr.mxu0 0.0
    %2559 = vmatpush2.msra.mxu0 0.0
    %2560 = vmatprep.subr.mxu0 0.0
    %2561 = vmatpush2.msra.mxu0 0.0
    %2562 = vmatprep.subr.mxu0 0.0
    %2563 = vmatpush2.msra.mxu0 0.0
    %2564 = vmatprep.subr.mxu0 0.0
    %2565 = vmatpush2.msra.mxu0 0.0
    %2566 = vmatprep.subr.mxu0 0.0
    %2567 = vmatpush2.msra.mxu0 0.0
    %2568 = vmatprep.mubr.f32.mxu0 0.0
    %2569 = vmatmul.mubr.f32.gmra.mxu0 %v2427
    %v2570 = vpop.f32.mrf.mxu0
    %v2571 = vadd.f32 0.0, %v2570
    %v2572 = vpop.f32.mrf.mxu0
    %v2573 = vadd.f32 0.0, %v2572
    %2574 = vdwg.mxu0
    %v2579 = vrot.slane %v2500, 6
    %v2580 = vrot.slane %v2502, 6
    %v2581 = vrot.slane %v2571, 6
    %v2582 = vrot.slane %v2573, 6
    %v2587 = vadd.f32 %v2429, %v2579
    %v2588 = vadd.f32 %v2430, %v2580
    %v2589 = vadd.f32 %v2431, %v2581
    %v2590 = vadd.f32 %v2432, %v2582
    %v2591 = vmul.f32 %v2587, 0.5
    %v2592 = vtanh.pop %v2591
    %v2593 = vmul.f32 %v2592, 0.5
    %v2594 = vadd.f32 %v2593, 0.5
    %v2595 = vmul.f32 %v2588, 0.5
    %v2596 = vtanh.pop %v2595
    %v2597 = vmul.f32 %v2596, 0.5
    %v2598 = vadd.f32 %v2597, 0.5
    %v2599 = vtanh.pop %v2589
    %v2600 = vmul.f32 %v2590, 0.5
    %v2601 = vtanh.pop %v2600
    %v2602 = vmul.f32 %v2601, 0.5
    %v2603 = vadd.f32 %v2602, 0.5
    %v2605 = vrot.slane %v2425, 6
    %v2607 = vmul.f32 %v2598, %v2605
    %v2608 = vmul.f32 %v2594, %v2599
    %v2609 = vadd.f32 %v2607, %v2608
    %v2610 = vtanh.pop %v2609
    %v2611 = vmul.f32 %v2603, %v2610
    %2612 = vst [vmem:[#allocation3] sm:$0xc] %v2611
    %v2613 = vld [vmem:[#allocation2] sm:$0x30]
    %v2614 = vld [vmem:[#allocation2 + $0x8] sm:$0x30]
    %v2615 = vld [vmem:[#allocation2 + $0x10] sm:$0x30]
    %v2616 = vld [vmem:[#allocation2 + $0x18] sm:$0x30]
    %v2618 = vrot.slane %v2611, 2
    %2620 = vmatprep.subr.mxu0 %v2067
    %2621 = vmatpush1.msra.mxu0 %v2066
    %2622 = vmatprep.subr.mxu0 %v2063
    %2623 = vmatpush1.msra.mxu0 %v2062
    %2624 = vmatprep.subr.mxu0 %v2059
    %2625 = vmatpush1.msra.mxu0 %v2058
    %2626 = vmatprep.subr.mxu0 %v2055
    %2627 = vmatpush1.msra.mxu0 %v2054
    %2628 = vmatprep.subr.mxu0 %v2051
    %2629 = vmatpush1.msra.mxu0 %v2050
    %2630 = vmatprep.subr.mxu0 %v2047
    %2631 = vmatpush1.msra.mxu0 %v2046
    %2632 = vmatprep.subr.mxu0 %v2043
    %2633 = vmatpush1.msra.mxu0 %v2042
    %2634 = vmatprep.subr.mxu0 %v2039
    %2635 = vmatpush1.msra.mxu0 %v2038
    %2636 = vmatprep.subr.mxu0 %v2035
    %2637 = vmatpush1.msra.mxu0 %v2034
    %2638 = vmatprep.subr.mxu0 %v2031
    %2639 = vmatpush1.msra.mxu0 %v2030
    %2640 = vmatprep.subr.mxu0 %v2027
    %2641 = vmatpush1.msra.mxu0 %v2026
    %2642 = vmatprep.subr.mxu0 %v2023
    %2643 = vmatpush1.msra.mxu0 %v2022
    %2644 = vmatprep.subr.mxu0 %v2019
    %2645 = vmatpush1.msra.mxu0 %v2018
    %2646 = vmatprep.subr.mxu0 %v2015
    %2647 = vmatpush1.msra.mxu0 %v2014
    %2648 = vmatprep.subr.mxu0 %v2011
    %2649 = vmatpush1.msra.mxu0 %v2010
    %2650 = vmatprep.subr.mxu0 %v2007
    %2651 = vmatpush1.msra.mxu0 %v2006
    %2652 = vmatprep.subr.mxu0 0.0
    %2653 = vmatpush2.msra.mxu0 0.0
    %2654 = vmatprep.subr.mxu0 0.0
    %2655 = vmatpush2.msra.mxu0 0.0
    %2656 = vmatprep.subr.mxu0 0.0
    %2657 = vmatpush2.msra.mxu0 0.0
    %2658 = vmatprep.subr.mxu0 0.0
    %2659 = vmatpush2.msra.mxu0 0.0
    %2660 = vmatprep.subr.mxu0 0.0
    %2661 = vmatpush2.msra.mxu0 0.0
    %2662 = vmatprep.subr.mxu0 0.0
    %2663 = vmatpush2.msra.mxu0 0.0
    %2664 = vmatprep.subr.mxu0 0.0
    %2665 = vmatpush2.msra.mxu0 0.0
    %2666 = vmatprep.subr.mxu0 0.0
    %2667 = vmatpush2.msra.mxu0 0.0
    %2668 = vmatprep.subr.mxu0 0.0
    %2669 = vmatpush2.msra.mxu0 0.0
    %2670 = vmatprep.subr.mxu0 0.0
    %2671 = vmatpush2.msra.mxu0 0.0
    %2672 = vmatprep.subr.mxu0 0.0
    %2673 = vmatpush2.msra.mxu0 0.0
    %2674 = vmatprep.subr.mxu0 0.0
    %2675 = vmatpush2.msra.mxu0 0.0
    %2676 = vmatprep.subr.mxu0 0.0
    %2677 = vmatpush2.msra.mxu0 0.0
    %2678 = vmatprep.subr.mxu0 0.0
    %2679 = vmatpush2.msra.mxu0 0.0
    %2680 = vmatprep.subr.mxu0 0.0
    %2681 = vmatpush2.msra.mxu0 0.0
    %2682 = vmatprep.subr.mxu0 0.0
    %2683 = vmatpush2.msra.mxu0 0.0
    %2684 = vmatprep.mubr.f32.mxu0 0.0
    %2685 = vmatmul.mubr.f32.gmra.mxu0 %v2618
    %v2686 = vpop.f32.mrf.mxu0
    %v2687 = vadd.f32 0.0, %v2686
    %v2688 = vpop.f32.mrf.mxu0
    %v2689 = vadd.f32 0.0, %v2688
    %2690 = vdwg.mxu0
    %2691 = vmatprep.subr.mxu0 %v2069
    %2692 = vmatpush1.msra.mxu0 %v2068
    %2693 = vmatprep.subr.mxu0 %v2065
    %2694 = vmatpush1.msra.mxu0 %v2064
    %2695 = vmatprep.subr.mxu0 %v2061
    %2696 = vmatpush1.msra.mxu0 %v2060
    %2697 = vmatprep.subr.mxu0 %v2057
    %2698 = vmatpush1.msra.mxu0 %v2056
    %2699 = vmatprep.subr.mxu0 %v2053
    %2700 = vmatpush1.msra.mxu0 %v2052
    %2701 = vmatprep.subr.mxu0 %v2049
    %2702 = vmatpush1.msra.mxu0 %v2048
    %2703 = vmatprep.subr.mxu0 %v2045
    %2704 = vmatpush1.msra.mxu0 %v2044
    %2705 = vmatprep.subr.mxu0 %v2041
    %2706 = vmatpush1.msra.mxu0 %v2040
    %2707 = vmatprep.subr.mxu0 %v2037
    %2708 = vmatpush1.msra.mxu0 %v2036
    %2709 = vmatprep.subr.mxu0 %v2033
    %2710 = vmatpush1.msra.mxu0 %v2032
    %2711 = vmatprep.subr.mxu0 %v2029
    %2712 = vmatpush1.msra.mxu0 %v2028
    %2713 = vmatprep.subr.mxu0 %v2025
    %2714 = vmatpush1.msra.mxu0 %v2024
    %2715 = vmatprep.subr.mxu0 %v2021
    %2716 = vmatpush1.msra.mxu0 %v2020
    %2717 = vmatprep.subr.mxu0 %v2017
    %2718 = vmatpush1.msra.mxu0 %v2016
    %2719 = vmatprep.subr.mxu0 %v2013
    %2720 = vmatpush1.msra.mxu0 %v2012
    %2721 = vmatprep.subr.mxu0 %v2009
    %2722 = vmatpush1.msra.mxu0 %v2008
    %2723 = vmatprep.subr.mxu0 0.0
    %2724 = vmatpush2.msra.mxu0 0.0
    %2725 = vmatprep.subr.mxu0 0.0
    %2726 = vmatpush2.msra.mxu0 0.0
    %2727 = vmatprep.subr.mxu0 0.0
    %2728 = vmatpush2.msra.mxu0 0.0
    %2729 = vmatprep.subr.mxu0 0.0
    %2730 = vmatpush2.msra.mxu0 0.0
    %2731 = vmatprep.subr.mxu0 0.0
    %2732 = vmatpush2.msra.mxu0 0.0
    %2733 = vmatprep.subr.mxu0 0.0
    %2734 = vmatpush2.msra.mxu0 0.0
    %2735 = vmatprep.subr.mxu0 0.0
    %2736 = vmatpush2.msra.mxu0 0.0
    %2737 = vmatprep.subr.mxu0 0.0
    %2738 = vmatpush2.msra.mxu0 0.0
    %2739 = vmatprep.subr.mxu0 0.0
    %2740 = vmatpush2.msra.mxu0 0.0
    %2741 = vmatprep.subr.mxu0 0.0
    %2742 = vmatpush2.msra.mxu0 0.0
    %2743 = vmatprep.subr.mxu0 0.0
    %2744 = vmatpush2.msra.mxu0 0.0
    %2745 = vmatprep.subr.mxu0 0.0
    %2746 = vmatpush2.msra.mxu0 0.0
    %2747 = vmatprep.subr.mxu0 0.0
    %2748 = vmatpush2.msra.mxu0 0.0
    %2749 = vmatprep.subr.mxu0 0.0
    %2750 = vmatpush2.msra.mxu0 0.0
    %2751 = vmatprep.subr.mxu0 0.0
    %2752 = vmatpush2.msra.mxu0 0.0
    %2753 = vmatprep.subr.mxu0 0.0
    %2754 = vmatpush2.msra.mxu0 0.0
    %2755 = vmatprep.mubr.f32.mxu0 0.0
    %2756 = vmatmul.mubr.f32.gmra.mxu0 %v2618
    %v2757 = vpop.f32.mrf.mxu0
    %v2758 = vadd.f32 0.0, %v2757
    %v2759 = vpop.f32.mrf.mxu0
    %v2760 = vadd.f32 0.0, %v2759
    %2761 = vdwg.mxu0
    %v2766 = vrot.slane %v2687, 4
    %v2767 = vrot.slane %v2689, 4
    %v2768 = vrot.slane %v2758, 4
    %v2769 = vrot.slane %v2760, 4
    %v2774 = vadd.f32 %v2613, %v2766
    %v2775 = vadd.f32 %v2614, %v2767
    %v2776 = vadd.f32 %v2615, %v2768
    %v2777 = vadd.f32 %v2616, %v2769
    %v2778 = vmul.f32 %v2774, 0.5
    %v2779 = vtanh.pop %v2778
    %v2780 = vmul.f32 %v2779, 0.5
    %v2781 = vadd.f32 %v2780, 0.5
    %v2782 = vmul.f32 %v2775, 0.5
    %v2783 = vtanh.pop %v2782
    %v2784 = vmul.f32 %v2783, 0.5
    %v2785 = vadd.f32 %v2784, 0.5
    %v2786 = vtanh.pop %v2776
    %v2787 = vmul.f32 %v2777, 0.5
    %v2788 = vtanh.pop %v2787
    %v2789 = vmul.f32 %v2788, 0.5
    %v2790 = vadd.f32 %v2789, 0.5
    %v2792 = vrot.slane %v2609, 6
    %v2794 = vmul.f32 %v2785, %v2792
    %v2795 = vmul.f32 %v2781, %v2786
    %v2796 = vadd.f32 %v2794, %v2795
    %v2797 = vtanh.pop %v2796
    %v2798 = vmul.f32 %v2790, %v2797
    %2799 = vst [vmem:[#allocation3] sm:$0x30] %v2798
    %v2800 = vld [vmem:[#allocation2] sm:$0xc0]
    %v2801 = vld [vmem:[#allocation2 + $0x8] sm:$0xc0]
    %v2802 = vld [vmem:[#allocation2 + $0x10] sm:$0xc0]
    %v2803 = vld [vmem:[#allocation2 + $0x18] sm:$0xc0]
    %v2805 = vrot.slane %v2798, 4
    %2807 = vmatprep.subr.mxu0 %v2067
    %2808 = vmatpush1.msra.mxu0 %v2066
    %2809 = vmatprep.subr.mxu0 %v2063
    %2810 = vmatpush1.msra.mxu0 %v2062
    %2811 = vmatprep.subr.mxu0 %v2059
    %2812 = vmatpush1.msra.mxu0 %v2058
    %2813 = vmatprep.subr.mxu0 %v2055
    %2814 = vmatpush1.msra.mxu0 %v2054
    %2815 = vmatprep.subr.mxu0 %v2051
    %2816 = vmatpush1.msra.mxu0 %v2050
    %2817 = vmatprep.subr.mxu0 %v2047
    %2818 = vmatpush1.msra.mxu0 %v2046
    %2819 = vmatprep.subr.mxu0 %v2043
    %2820 = vmatpush1.msra.mxu0 %v2042
    %2821 = vmatprep.subr.mxu0 %v2039
    %2822 = vmatpush1.msra.mxu0 %v2038
    %2823 = vmatprep.subr.mxu0 %v2035
    %2824 = vmatpush1.msra.mxu0 %v2034
    %2825 = vmatprep.subr.mxu0 %v2031
    %2826 = vmatpush1.msra.mxu0 %v2030
    %2827 = vmatprep.subr.mxu0 %v2027
    %2828 = vmatpush1.msra.mxu0 %v2026
    %2829 = vmatprep.subr.mxu0 %v2023
    %2830 = vmatpush1.msra.mxu0 %v2022
    %2831 = vmatprep.subr.mxu0 %v2019
    %2832 = vmatpush1.msra.mxu0 %v2018
    %2833 = vmatprep.subr.mxu0 %v2015
    %2834 = vmatpush1.msra.mxu0 %v2014
    %2835 = vmatprep.subr.mxu0 %v2011
    %2836 = vmatpush1.msra.mxu0 %v2010
    %2837 = vmatprep.subr.mxu0 %v2007
    %2838 = vmatpush1.msra.mxu0 %v2006
    %2839 = vmatprep.subr.mxu0 0.0
    %2840 = vmatpush2.msra.mxu0 0.0
    %2841 = vmatprep.subr.mxu0 0.0
    %2842 = vmatpush2.msra.mxu0 0.0
    %2843 = vmatprep.subr.mxu0 0.0
    %2844 = vmatpush2.msra.mxu0 0.0
    %2845 = vmatprep.subr.mxu0 0.0
    %2846 = vmatpush2.msra.mxu0 0.0
    %2847 = vmatprep.subr.mxu0 0.0
    %2848 = vmatpush2.msra.mxu0 0.0
    %2849 = vmatprep.subr.mxu0 0.0
    %2850 = vmatpush2.msra.mxu0 0.0
    %2851 = vmatprep.subr.mxu0 0.0
    %2852 = vmatpush2.msra.mxu0 0.0
    %2853 = vmatprep.subr.mxu0 0.0
    %2854 = vmatpush2.msra.mxu0 0.0
    %2855 = vmatprep.subr.mxu0 0.0
    %2856 = vmatpush2.msra.mxu0 0.0
    %2857 = vmatprep.subr.mxu0 0.0
    %2858 = vmatpush2.msra.mxu0 0.0
    %2859 = vmatprep.subr.mxu0 0.0
    %2860 = vmatpush2.msra.mxu0 0.0
    %2861 = vmatprep.subr.mxu0 0.0
    %2862 = vmatpush2.msra.mxu0 0.0
    %2863 = vmatprep.subr.mxu0 0.0
    %2864 = vmatpush2.msra.mxu0 0.0
    %2865 = vmatprep.subr.mxu0 0.0
    %2866 = vmatpush2.msra.mxu0 0.0
    %2867 = vmatprep.subr.mxu0 0.0
    %2868 = vmatpush2.msra.mxu0 0.0
    %2869 = vmatprep.subr.mxu0 0.0
    %2870 = vmatpush2.msra.mxu0 0.0
    %2871 = vmatprep.mubr.f32.mxu0 0.0
    %2872 = vmatmul.mubr.f32.gmra.mxu0 %v2805
    %v2873 = vpop.f32.mrf.mxu0
    %v2874 = vadd.f32 0.0, %v2873
    %v2875 = vpop.f32.mrf.mxu0
    %v2876 = vadd.f32 0.0, %v2875
    %2877 = vdwg.mxu0
    %2878 = vmatprep.subr.mxu0 %v2069
    %2879 = vmatpush1.msra.mxu0 %v2068
    %2880 = vmatprep.subr.mxu0 %v2065
    %2881 = vmatpush1.msra.mxu0 %v2064
    %2882 = vmatprep.subr.mxu0 %v2061
    %2883 = vmatpush1.msra.mxu0 %v2060
    %2884 = vmatprep.subr.mxu0 %v2057
    %2885 = vmatpush1.msra.mxu0 %v2056
    %2886 = vmatprep.subr.mxu0 %v2053
    %2887 = vmatpush1.msra.mxu0 %v2052
    %2888 = vmatprep.subr.mxu0 %v2049
    %2889 = vmatpush1.msra.mxu0 %v2048
    %2890 = vmatprep.subr.mxu0 %v2045
    %2891 = vmatpush1.msra.mxu0 %v2044
    %2892 = vmatprep.subr.mxu0 %v2041
    %2893 = vmatpush1.msra.mxu0 %v2040
    %2894 = vmatprep.subr.mxu0 %v2037
    %2895 = vmatpush1.msra.mxu0 %v2036
    %2896 = vmatprep.subr.mxu0 %v2033
    %2897 = vmatpush1.msra.mxu0 %v2032
    %2898 = vmatprep.subr.mxu0 %v2029
    %2899 = vmatpush1.msra.mxu0 %v2028
    %2900 = vmatprep.subr.mxu0 %v2025
    %2901 = vmatpush1.msra.mxu0 %v2024
    %2902 = vmatprep.subr.mxu0 %v2021
    %2903 = vmatpush1.msra.mxu0 %v2020
    %2904 = vmatprep.subr.mxu0 %v2017
    %2905 = vmatpush1.msra.mxu0 %v2016
    %2906 = vmatprep.subr.mxu0 %v2013
    %2907 = vmatpush1.msra.mxu0 %v2012
    %2908 = vmatprep.subr.mxu0 %v2009
    %2909 = vmatpush1.msra.mxu0 %v2008
    %2910 = vmatprep.subr.mxu0 0.0
    %2911 = vmatpush2.msra.mxu0 0.0
    %2912 = vmatprep.subr.mxu0 0.0
    %2913 = vmatpush2.msra.mxu0 0.0
    %2914 = vmatprep.subr.mxu0 0.0
    %2915 = vmatpush2.msra.mxu0 0.0
    %2916 = vmatprep.subr.mxu0 0.0
    %2917 = vmatpush2.msra.mxu0 0.0
    %2918 = vmatprep.subr.mxu0 0.0
    %2919 = vmatpush2.msra.mxu0 0.0
    %2920 = vmatprep.subr.mxu0 0.0
    %2921 = vmatpush2.msra.mxu0 0.0
    %2922 = vmatprep.subr.mxu0 0.0
    %2923 = vmatpush2.msra.mxu0 0.0
    %2924 = vmatprep.subr.mxu0 0.0
    %2925 = vmatpush2.msra.mxu0 0.0
    %2926 = vmatprep.subr.mxu0 0.0
    %2927 = vmatpush2.msra.mxu0 0.0
    %2928 = vmatprep.subr.mxu0 0.0
    %2929 = vmatpush2.msra.mxu0 0.0
    %2930 = vmatprep.subr.mxu0 0.0
    %2931 = vmatpush2.msra.mxu0 0.0
    %2932 = vmatprep.subr.mxu0 0.0
    %2933 = vmatpush2.msra.mxu0 0.0
    %2934 = vmatprep.subr.mxu0 0.0
    %2935 = vmatpush2.msra.mxu0 0.0
    %2936 = vmatprep.subr.mxu0 0.0
    %2937 = vmatpush2.msra.mxu0 0.0
    %2938 = vmatprep.subr.mxu0 0.0
    %2939 = vmatpush2.msra.mxu0 0.0
    %2940 = vmatprep.subr.mxu0 0.0
    %2941 = vmatpush2.msra.mxu0 0.0
    %2942 = vmatprep.mubr.f32.mxu0 0.0
    %2943 = vmatmul.mubr.f32.gmra.mxu0 %v2805
    %v2944 = vpop.f32.mrf.mxu0
    %v2945 = vadd.f32 0.0, %v2944
    %v2946 = vpop.f32.mrf.mxu0
    %v2947 = vadd.f32 0.0, %v2946
    %2948 = vdwg.mxu0
    %v2953 = vrot.slane %v2874, 2
    %v2954 = vrot.slane %v2876, 2
    %v2955 = vrot.slane %v2945, 2
    %v2956 = vrot.slane %v2947, 2
    %v2961 = vadd.f32 %v2800, %v2953
    %v2962 = vadd.f32 %v2801, %v2954
    %v2963 = vadd.f32 %v2802, %v2955
    %v2964 = vadd.f32 %v2803, %v2956
    %v2965 = vmul.f32 %v2961, 0.5
    %v2966 = vtanh.pop %v2965
    %v2967 = vmul.f32 %v2966, 0.5
    %v2968 = vadd.f32 %v2967, 0.5
    %v2969 = vmul.f32 %v2962, 0.5
    %v2970 = vtanh.pop %v2969
    %v2971 = vmul.f32 %v2970, 0.5
    %v2972 = vadd.f32 %v2971, 0.5
    %v2973 = vtanh.pop %v2963
    %v2974 = vmul.f32 %v2964, 0.5
    %v2975 = vtanh.pop %v2974
    %v2976 = vmul.f32 %v2975, 0.5
    %v2977 = vadd.f32 %v2976, 0.5
    %v2979 = vrot.slane %v2796, 6
    %v2981 = vmul.f32 %v2972, %v2979
    %v2982 = vmul.f32 %v2968, %v2973
    %v2983 = vadd.f32 %v2981, %v2982
    %v2984 = vtanh.pop %v2983
    %v2985 = vmul.f32 %v2977, %v2984
    %2986 = vst [vmem:[#allocation3] sm:$0xc0] %v2985
    %v2987 = vld [vmem:[#allocation2 + $0x20] sm:$0x3]
    %v2988 = vld [vmem:[#allocation2 + $0x28] sm:$0x3]
    %v2989 = vld [vmem:[#allocation2 + $0x30] sm:$0x3]
    %v2990 = vld [vmem:[#allocation2 + $0x38] sm:$0x3]
    %v2992 = vrot.slane %v2985, 6
    %2994 = vmatprep.subr.mxu0 %v2067
    %2995 = vmatpush1.msra.mxu0 %v2066
    %2996 = vmatprep.subr.mxu0 %v2063
    %2997 = vmatpush1.msra.mxu0 %v2062
    %2998 = vmatprep.subr.mxu0 %v2059
    %2999 = vmatpush1.msra.mxu0 %v2058
    %3000 = vmatprep.subr.mxu0 %v2055
    %3001 = vmatpush1.msra.mxu0 %v2054
    %3002 = vmatprep.subr.mxu0 %v2051
    %3003 = vmatpush1.msra.mxu0 %v2050
    %3004 = vmatprep.subr.mxu0 %v2047
    %3005 = vmatpush1.msra.mxu0 %v2046
    %3006 = vmatprep.subr.mxu0 %v2043
    %3007 = vmatpush1.msra.mxu0 %v2042
    %3008 = vmatprep.subr.mxu0 %v2039
    %3009 = vmatpush1.msra.mxu0 %v2038
    %3010 = vmatprep.subr.mxu0 %v2035
    %3011 = vmatpush1.msra.mxu0 %v2034
    %3012 = vmatprep.subr.mxu0 %v2031
    %3013 = vmatpush1.msra.mxu0 %v2030
    %3014 = vmatprep.subr.mxu0 %v2027
    %3015 = vmatpush1.msra.mxu0 %v2026
    %3016 = vmatprep.subr.mxu0 %v2023
    %3017 = vmatpush1.msra.mxu0 %v2022
    %3018 = vmatprep.subr.mxu0 %v2019
    %3019 = vmatpush1.msra.mxu0 %v2018
    %3020 = vmatprep.subr.mxu0 %v2015
    %3021 = vmatpush1.msra.mxu0 %v2014
    %3022 = vmatprep.subr.mxu0 %v2011
    %3023 = vmatpush1.msra.mxu0 %v2010
    %3024 = vmatprep.subr.mxu0 %v2007
    %3025 = vmatpush1.msra.mxu0 %v2006
    %3026 = vmatprep.subr.mxu0 0.0
    %3027 = vmatpush2.msra.mxu0 0.0
    %3028 = vmatprep.subr.mxu0 0.0
    %3029 = vmatpush2.msra.mxu0 0.0
    %3030 = vmatprep.subr.mxu0 0.0
    %3031 = vmatpush2.msra.mxu0 0.0
    %3032 = vmatprep.subr.mxu0 0.0
    %3033 = vmatpush2.msra.mxu0 0.0
    %3034 = vmatprep.subr.mxu0 0.0
    %3035 = vmatpush2.msra.mxu0 0.0
    %3036 = vmatprep.subr.mxu0 0.0
    %3037 = vmatpush2.msra.mxu0 0.0
    %3038 = vmatprep.subr.mxu0 0.0
    %3039 = vmatpush2.msra.mxu0 0.0
    %3040 = vmatprep.subr.mxu0 0.0
    %3041 = vmatpush2.msra.mxu0 0.0
    %3042 = vmatprep.subr.mxu0 0.0
    %3043 = vmatpush2.msra.mxu0 0.0
    %3044 = vmatprep.subr.mxu0 0.0
    %3045 = vmatpush2.msra.mxu0 0.0
    %3046 = vmatprep.subr.mxu0 0.0
    %3047 = vmatpush2.msra.mxu0 0.0
    %3048 = vmatprep.subr.mxu0 0.0
    %3049 = vmatpush2.msra.mxu0 0.0
    %3050 = vmatprep.subr.mxu0 0.0
    %3051 = vmatpush2.msra.mxu0 0.0
    %3052 = vmatprep.subr.mxu0 0.0
    %3053 = vmatpush2.msra.mxu0 0.0
    %3054 = vmatprep.subr.mxu0 0.0
    %3055 = vmatpush2.msra.mxu0 0.0
    %3056 = vmatprep.subr.mxu0 0.0
    %3057 = vmatpush2.msra.mxu0 0.0
    %3058 = vmatprep.mubr.f32.mxu0 0.0
    %3059 = vmatmul.mubr.f32.gmra.mxu0 %v2992
    %v3060 = vpop.f32.mrf.mxu0
    %v3061 = vadd.f32 0.0, %v3060
    %v3062 = vpop.f32.mrf.mxu0
    %v3063 = vadd.f32 0.0, %v3062
    %3064 = vdwg.mxu0
    %3065 = vmatprep.subr.mxu0 %v2069
    %3066 = vmatpush1.msra.mxu0 %v2068
    %3067 = vmatprep.subr.mxu0 %v2065
    %3068 = vmatpush1.msra.mxu0 %v2064
    %3069 = vmatprep.subr.mxu0 %v2061
    %3070 = vmatpush1.msra.mxu0 %v2060
    %3071 = vmatprep.subr.mxu0 %v2057
    %3072 = vmatpush1.msra.mxu0 %v2056
    %3073 = vmatprep.subr.mxu0 %v2053
    %3074 = vmatpush1.msra.mxu0 %v2052
    %3075 = vmatprep.subr.mxu0 %v2049
    %3076 = vmatpush1.msra.mxu0 %v2048
    %3077 = vmatprep.subr.mxu0 %v2045
    %3078 = vmatpush1.msra.mxu0 %v2044
    %3079 = vmatprep.subr.mxu0 %v2041
    %3080 = vmatpush1.msra.mxu0 %v2040
    %3081 = vmatprep.subr.mxu0 %v2037
    %3082 = vmatpush1.msra.mxu0 %v2036
    %3083 = vmatprep.subr.mxu0 %v2033
    %3084 = vmatpush1.msra.mxu0 %v2032
    %3085 = vmatprep.subr.mxu0 %v2029
    %3086 = vmatpush1.msra.mxu0 %v2028
    %3087 = vmatprep.subr.mxu0 %v2025
    %3088 = vmatpush1.msra.mxu0 %v2024
    %3089 = vmatprep.subr.mxu0 %v2021
    %3090 = vmatpush1.msra.mxu0 %v2020
    %3091 = vmatprep.subr.mxu0 %v2017
    %3092 = vmatpush1.msra.mxu0 %v2016
    %3093 = vmatprep.subr.mxu0 %v2013
    %3094 = vmatpush1.msra.mxu0 %v2012
    %3095 = vmatprep.subr.mxu0 %v2009
    %3096 = vmatpush1.msra.mxu0 %v2008
    %3097 = vmatprep.subr.mxu0 0.0
    %3098 = vmatpush2.msra.mxu0 0.0
    %3099 = vmatprep.subr.mxu0 0.0
    %3100 = vmatpush2.msra.mxu0 0.0
    %3101 = vmatprep.subr.mxu0 0.0
    %3102 = vmatpush2.msra.mxu0 0.0
    %3103 = vmatprep.subr.mxu0 0.0
    %3104 = vmatpush2.msra.mxu0 0.0
    %3105 = vmatprep.subr.mxu0 0.0
    %3106 = vmatpush2.msra.mxu0 0.0
    %3107 = vmatprep.subr.mxu0 0.0
    %3108 = vmatpush2.msra.mxu0 0.0
    %3109 = vmatprep.subr.mxu0 0.0
    %3110 = vmatpush2.msra.mxu0 0.0
    %3111 = vmatprep.subr.mxu0 0.0
    %3112 = vmatpush2.msra.mxu0 0.0
    %3113 = vmatprep.subr.mxu0 0.0
    %3114 = vmatpush2.msra.mxu0 0.0
    %3115 = vmatprep.subr.mxu0 0.0
    %3116 = vmatpush2.msra.mxu0 0.0
    %3117 = vmatprep.subr.mxu0 0.0
    %3118 = vmatpush2.msra.mxu0 0.0
    %3119 = vmatprep.subr.mxu0 0.0
    %3120 = vmatpush2.msra.mxu0 0.0
    %3121 = vmatprep.subr.mxu0 0.0
    %3122 = vmatpush2.msra.mxu0 0.0
    %3123 = vmatprep.subr.mxu0 0.0
    %3124 = vmatpush2.msra.mxu0 0.0
    %3125 = vmatprep.subr.mxu0 0.0
    %3126 = vmatpush2.msra.mxu0 0.0
    %3127 = vmatprep.subr.mxu0 0.0
    %3128 = vmatpush2.msra.mxu0 0.0
    %3129 = vmatprep.mubr.f32.mxu0 0.0
    %3130 = vmatmul.mubr.f32.gmra.mxu0 %v2992
    %v3131 = vpop.f32.mrf.mxu0
    %v3132 = vadd.f32 0.0, %v3131
    %v3133 = vpop.f32.mrf.mxu0
    %v3134 = vadd.f32 0.0, %v3133
    %3135 = vdwg.mxu0
    %v3136 = vadd.f32 %v2987, %v3061
    %v3137 = vadd.f32 %v2988, %v3063
    %v3138 = vadd.f32 %v2989, %v3132
    %v3139 = vadd.f32 %v2990, %v3134
    %v3140 = vmul.f32 %v3136, 0.5
    %v3141 = vtanh.pop %v3140
    %v3142 = vmul.f32 %v3141, 0.5
    %v3143 = vadd.f32 %v3142, 0.5
    %v3144 = vmul.f32 %v3137, 0.5
    %v3145 = vtanh.pop %v3144
    %v3146 = vmul.f32 %v3145, 0.5
    %v3147 = vadd.f32 %v3146, 0.5
    %v3148 = vtanh.pop %v3138
    %v3149 = vmul.f32 %v3139, 0.5
    %v3150 = vtanh.pop %v3149
    %v3151 = vmul.f32 %v3150, 0.5
    %v3152 = vadd.f32 %v3151, 0.5
    %v3154 = vrot.slane %v2983, 6
    %v3156 = vmul.f32 %v3147, %v3154
    %v3157 = vmul.f32 %v3143, %v3148
    %v3158 = vadd.f32 %v3156, %v3157
    %v3159 = vtanh.pop %v3158
    %v3160 = vmul.f32 %v3152, %v3159
    %3161 = vst [vmem:[#allocation3 + $0x8] sm:$0x3] %v3160
    %v3162 = vld [vmem:[#allocation2 + $0x20] sm:$0xc]
    %v3163 = vld [vmem:[#allocation2 + $0x28] sm:$0xc]
    %v3164 = vld [vmem:[#allocation2 + $0x30] sm:$0xc]
    %v3165 = vld [vmem:[#allocation2 + $0x38] sm:$0xc]
    %3166 = vmatprep.subr.mxu0 %v2067
    %3167 = vmatpush1.msra.mxu0 %v2066
    %3168 = vmatprep.subr.mxu0 %v2063
    %3169 = vmatpush1.msra.mxu0 %v2062
    %3170 = vmatprep.subr.mxu0 %v2059
    %3171 = vmatpush1.msra.mxu0 %v2058
    %3172 = vmatprep.subr.mxu0 %v2055
    %3173 = vmatpush1.msra.mxu0 %v2054
    %3174 = vmatprep.subr.mxu0 %v2051
    %3175 = vmatpush1.msra.mxu0 %v2050
    %3176 = vmatprep.subr.mxu0 %v2047
    %3177 = vmatpush1.msra.mxu0 %v2046
    %3178 = vmatprep.subr.mxu0 %v2043
    %3179 = vmatpush1.msra.mxu0 %v2042
    %3180 = vmatprep.subr.mxu0 %v2039
    %3181 = vmatpush1.msra.mxu0 %v2038
    %3182 = vmatprep.subr.mxu0 %v2035
    %3183 = vmatpush1.msra.mxu0 %v2034
    %3184 = vmatprep.subr.mxu0 %v2031
    %3185 = vmatpush1.msra.mxu0 %v2030
    %3186 = vmatprep.subr.mxu0 %v2027
    %3187 = vmatpush1.msra.mxu0 %v2026
    %3188 = vmatprep.subr.mxu0 %v2023
    %3189 = vmatpush1.msra.mxu0 %v2022
    %3190 = vmatprep.subr.mxu0 %v2019
    %3191 = vmatpush1.msra.mxu0 %v2018
    %3192 = vmatprep.subr.mxu0 %v2015
    %3193 = vmatpush1.msra.mxu0 %v2014
    %3194 = vmatprep.subr.mxu0 %v2011
    %3195 = vmatpush1.msra.mxu0 %v2010
    %3196 = vmatprep.subr.mxu0 %v2007
    %3197 = vmatpush1.msra.mxu0 %v2006
    %3198 = vmatprep.subr.mxu0 0.0
    %3199 = vmatpush2.msra.mxu0 0.0
    %3200 = vmatprep.subr.mxu0 0.0
    %3201 = vmatpush2.msra.mxu0 0.0
    %3202 = vmatprep.subr.mxu0 0.0
    %3203 = vmatpush2.msra.mxu0 0.0
    %3204 = vmatprep.subr.mxu0 0.0
    %3205 = vmatpush2.msra.mxu0 0.0
    %3206 = vmatprep.subr.mxu0 0.0
    %3207 = vmatpush2.msra.mxu0 0.0
    %3208 = vmatprep.subr.mxu0 0.0
    %3209 = vmatpush2.msra.mxu0 0.0
    %3210 = vmatprep.subr.mxu0 0.0
    %3211 = vmatpush2.msra.mxu0 0.0
    %3212 = vmatprep.subr.mxu0 0.0
    %3213 = vmatpush2.msra.mxu0 0.0
    %3214 = vmatprep.subr.mxu0 0.0
    %3215 = vmatpush2.msra.mxu0 0.0
    %3216 = vmatprep.subr.mxu0 0.0
    %3217 = vmatpush2.msra.mxu0 0.0
    %3218 = vmatprep.subr.mxu0 0.0
    %3219 = vmatpush2.msra.mxu0 0.0
    %3220 = vmatprep.subr.mxu0 0.0
    %3221 = vmatpush2.msra.mxu0 0.0
    %3222 = vmatprep.subr.mxu0 0.0
    %3223 = vmatpush2.msra.mxu0 0.0
    %3224 = vmatprep.subr.mxu0 0.0
    %3225 = vmatpush2.msra.mxu0 0.0
    %3226 = vmatprep.subr.mxu0 0.0
    %3227 = vmatpush2.msra.mxu0 0.0
    %3228 = vmatprep.subr.mxu0 0.0
    %3229 = vmatpush2.msra.mxu0 0.0
    %3230 = vmatprep.mubr.f32.mxu0 0.0
    %3231 = vmatmul.mubr.f32.gmra.mxu0 %v3160
    %v3232 = vpop.f32.mrf.mxu0
    %v3233 = vadd.f32 0.0, %v3232
    %v3234 = vpop.f32.mrf.mxu0
    %v3235 = vadd.f32 0.0, %v3234
    %3236 = vdwg.mxu0
    %3237 = vmatprep.subr.mxu0 %v2069
    %3238 = vmatpush1.msra.mxu0 %v2068
    %3239 = vmatprep.subr.mxu0 %v2065
    %3240 = vmatpush1.msra.mxu0 %v2064
    %3241 = vmatprep.subr.mxu0 %v2061
    %3242 = vmatpush1.msra.mxu0 %v2060
    %3243 = vmatprep.subr.mxu0 %v2057
    %3244 = vmatpush1.msra.mxu0 %v2056
    %3245 = vmatprep.subr.mxu0 %v2053
    %3246 = vmatpush1.msra.mxu0 %v2052
    %3247 = vmatprep.subr.mxu0 %v2049
    %3248 = vmatpush1.msra.mxu0 %v2048
    %3249 = vmatprep.subr.mxu0 %v2045
    %3250 = vmatpush1.msra.mxu0 %v2044
    %3251 = vmatprep.subr.mxu0 %v2041
    %3252 = vmatpush1.msra.mxu0 %v2040
    %3253 = vmatprep.subr.mxu0 %v2037
    %3254 = vmatpush1.msra.mxu0 %v2036
    %3255 = vmatprep.subr.mxu0 %v2033
    %3256 = vmatpush1.msra.mxu0 %v2032
    %3257 = vmatprep.subr.mxu0 %v2029
    %3258 = vmatpush1.msra.mxu0 %v2028
    %3259 = vmatprep.subr.mxu0 %v2025
    %3260 = vmatpush1.msra.mxu0 %v2024
    %3261 = vmatprep.subr.mxu0 %v2021
    %3262 = vmatpush1.msra.mxu0 %v2020
    %3263 = vmatprep.subr.mxu0 %v2017
    %3264 = vmatpush1.msra.mxu0 %v2016
    %3265 = vmatprep.subr.mxu0 %v2013
    %3266 = vmatpush1.msra.mxu0 %v2012
    %3267 = vmatprep.subr.mxu0 %v2009
    %3268 = vmatpush1.msra.mxu0 %v2008
    %3269 = vmatprep.subr.mxu0 0.0
    %3270 = vmatpush2.msra.mxu0 0.0
    %3271 = vmatprep.subr.mxu0 0.0
    %3272 = vmatpush2.msra.mxu0 0.0
    %3273 = vmatprep.subr.mxu0 0.0
    %3274 = vmatpush2.msra.mxu0 0.0
    %3275 = vmatprep.subr.mxu0 0.0
    %3276 = vmatpush2.msra.mxu0 0.0
    %3277 = vmatprep.subr.mxu0 0.0
    %3278 = vmatpush2.msra.mxu0 0.0
    %3279 = vmatprep.subr.mxu0 0.0
    %3280 = vmatpush2.msra.mxu0 0.0
    %3281 = vmatprep.subr.mxu0 0.0
    %3282 = vmatpush2.msra.mxu0 0.0
    %3283 = vmatprep.subr.mxu0 0.0
    %3284 = vmatpush2.msra.mxu0 0.0
    %3285 = vmatprep.subr.mxu0 0.0
    %3286 = vmatpush2.msra.mxu0 0.0
    %3287 = vmatprep.subr.mxu0 0.0
    %3288 = vmatpush2.msra.mxu0 0.0
    %3289 = vmatprep.subr.mxu0 0.0
    %3290 = vmatpush2.msra.mxu0 0.0
    %3291 = vmatprep.subr.mxu0 0.0
    %3292 = vmatpush2.msra.mxu0 0.0
    %3293 = vmatprep.subr.mxu0 0.0
    %3294 = vmatpush2.msra.mxu0 0.0
    %3295 = vmatprep.subr.mxu0 0.0
    %3296 = vmatpush2.msra.mxu0 0.0
    %3297 = vmatprep.subr.mxu0 0.0
    %3298 = vmatpush2.msra.mxu0 0.0
    %3299 = vmatprep.subr.mxu0 0.0
    %3300 = vmatpush2.msra.mxu0 0.0
    %3301 = vmatprep.mubr.f32.mxu0 0.0
    %3302 = vmatmul.mubr.f32.gmra.mxu0 %v3160
    %v3303 = vpop.f32.mrf.mxu0
    %v3304 = vadd.f32 0.0, %v3303
    %v3305 = vpop.f32.mrf.mxu0
    %v3306 = vadd.f32 0.0, %v3305
    %3307 = vdwg.mxu0
    %v3312 = vrot.slane %v3233, 6
    %v3313 = vrot.slane %v3235, 6
    %v3314 = vrot.slane %v3304, 6
    %v3315 = vrot.slane %v3306, 6
    %v3320 = vadd.f32 %v3162, %v3312
    %v3321 = vadd.f32 %v3163, %v3313
    %v3322 = vadd.f32 %v3164, %v3314
    %v3323 = vadd.f32 %v3165, %v3315
    %v3324 = vmul.f32 %v3320, 0.5
    %v3325 = vtanh.pop %v3324
    %v3326 = vmul.f32 %v3325, 0.5
    %v3327 = vadd.f32 %v3326, 0.5
    %v3328 = vmul.f32 %v3321, 0.5
    %v3329 = vtanh.pop %v3328
    %v3330 = vmul.f32 %v3329, 0.5
    %v3331 = vadd.f32 %v3330, 0.5
    %v3332 = vtanh.pop %v3322
    %v3333 = vmul.f32 %v3323, 0.5
    %v3334 = vtanh.pop %v3333
    %v3335 = vmul.f32 %v3334, 0.5
    %v3336 = vadd.f32 %v3335, 0.5
    %v3338 = vrot.slane %v3158, 6
    %v3340 = vmul.f32 %v3331, %v3338
    %v3341 = vmul.f32 %v3327, %v3332
    %v3342 = vadd.f32 %v3340, %v3341
    %v3343 = vtanh.pop %v3342
    %v3344 = vmul.f32 %v3336, %v3343
    %3345 = vst [vmem:[#allocation3 + $0x8] sm:$0xc] %v3344
    %v3346 = vld [vmem:[#allocation2 + $0x20] sm:$0x30]
    %v3347 = vld [vmem:[#allocation2 + $0x28] sm:$0x30]
    %v3348 = vld [vmem:[#allocation2 + $0x30] sm:$0x30]
    %v3349 = vld [vmem:[#allocation2 + $0x38] sm:$0x30]
    %v3351 = vrot.slane %v3344, 2
    %3353 = vmatprep.subr.mxu0 %v2067
    %3354 = vmatpush1.msra.mxu0 %v2066
    %3355 = vmatprep.subr.mxu0 %v2063
    %3356 = vmatpush1.msra.mxu0 %v2062
    %3357 = vmatprep.subr.mxu0 %v2059
    %3358 = vmatpush1.msra.mxu0 %v2058
    %3359 = vmatprep.subr.mxu0 %v2055
    %3360 = vmatpush1.msra.mxu0 %v2054
    %3361 = vmatprep.subr.mxu0 %v2051
    %3362 = vmatpush1.msra.mxu0 %v2050
    %3363 = vmatprep.subr.mxu0 %v2047
    %3364 = vmatpush1.msra.mxu0 %v2046
    %3365 = vmatprep.subr.mxu0 %v2043
    %3366 = vmatpush1.msra.mxu0 %v2042
    %3367 = vmatprep.subr.mxu0 %v2039
    %3368 = vmatpush1.msra.mxu0 %v2038
    %3369 = vmatprep.subr.mxu0 %v2035
    %3370 = vmatpush1.msra.mxu0 %v2034
    %3371 = vmatprep.subr.mxu0 %v2031
    %3372 = vmatpush1.msra.mxu0 %v2030
    %3373 = vmatprep.subr.mxu0 %v2027
    %3374 = vmatpush1.msra.mxu0 %v2026
    %3375 = vmatprep.subr.mxu0 %v2023
    %3376 = vmatpush1.msra.mxu0 %v2022
    %3377 = vmatprep.subr.mxu0 %v2019
    %3378 = vmatpush1.msra.mxu0 %v2018
    %3379 = vmatprep.subr.mxu0 %v2015
    %3380 = vmatpush1.msra.mxu0 %v2014
    %3381 = vmatprep.subr.mxu0 %v2011
    %3382 = vmatpush1.msra.mxu0 %v2010
    %3383 = vmatprep.subr.mxu0 %v2007
    %3384 = vmatpush1.msra.mxu0 %v2006
    %3385 = vmatprep.subr.mxu0 0.0
    %3386 = vmatpush2.msra.mxu0 0.0
    %3387 = vmatprep.subr.mxu0 0.0
    %3388 = vmatpush2.msra.mxu0 0.0
    %3389 = vmatprep.subr.mxu0 0.0
    %3390 = vmatpush2.msra.mxu0 0.0
    %3391 = vmatprep.subr.mxu0 0.0
    %3392 = vmatpush2.msra.mxu0 0.0
    %3393 = vmatprep.subr.mxu0 0.0
    %3394 = vmatpush2.msra.mxu0 0.0
    %3395 = vmatprep.subr.mxu0 0.0
    %3396 = vmatpush2.msra.mxu0 0.0
    %3397 = vmatprep.subr.mxu0 0.0
    %3398 = vmatpush2.msra.mxu0 0.0
    %3399 = vmatprep.subr.mxu0 0.0
    %3400 = vmatpush2.msra.mxu0 0.0
    %3401 = vmatprep.subr.mxu0 0.0
    %3402 = vmatpush2.msra.mxu0 0.0
    %3403 = vmatprep.subr.mxu0 0.0
    %3404 = vmatpush2.msra.mxu0 0.0
    %3405 = vmatprep.subr.mxu0 0.0
    %3406 = vmatpush2.msra.mxu0 0.0
    %3407 = vmatprep.subr.mxu0 0.0
    %3408 = vmatpush2.msra.mxu0 0.0
    %3409 = vmatprep.subr.mxu0 0.0
    %3410 = vmatpush2.msra.mxu0 0.0
    %3411 = vmatprep.subr.mxu0 0.0
    %3412 = vmatpush2.msra.mxu0 0.0
    %3413 = vmatprep.subr.mxu0 0.0
    %3414 = vmatpush2.msra.mxu0 0.0
    %3415 = vmatprep.subr.mxu0 0.0
    %3416 = vmatpush2.msra.mxu0 0.0
    %3417 = vmatprep.mubr.f32.mxu0 0.0
    %3418 = vmatmul.mubr.f32.gmra.mxu0 %v3351
    %v3419 = vpop.f32.mrf.mxu0
    %v3420 = vadd.f32 0.0, %v3419
    %v3421 = vpop.f32.mrf.mxu0
    %v3422 = vadd.f32 0.0, %v3421
    %3423 = vdwg.mxu0
    %3424 = vmatprep.subr.mxu0 %v2069
    %3425 = vmatpush1.msra.mxu0 %v2068
    %3426 = vmatprep.subr.mxu0 %v2065
    %3427 = vmatpush1.msra.mxu0 %v2064
    %3428 = vmatprep.subr.mxu0 %v2061
    %3429 = vmatpush1.msra.mxu0 %v2060
    %3430 = vmatprep.subr.mxu0 %v2057
    %3431 = vmatpush1.msra.mxu0 %v2056
    %3432 = vmatprep.subr.mxu0 %v2053
    %3433 = vmatpush1.msra.mxu0 %v2052
    %3434 = vmatprep.subr.mxu0 %v2049
    %3435 = vmatpush1.msra.mxu0 %v2048
    %3436 = vmatprep.subr.mxu0 %v2045
    %3437 = vmatpush1.msra.mxu0 %v2044
    %3438 = vmatprep.subr.mxu0 %v2041
    %3439 = vmatpush1.msra.mxu0 %v2040
    %3440 = vmatprep.subr.mxu0 %v2037
    %3441 = vmatpush1.msra.mxu0 %v2036
    %3442 = vmatprep.subr.mxu0 %v2033
    %3443 = vmatpush1.msra.mxu0 %v2032
    %3444 = vmatprep.subr.mxu0 %v2029
    %3445 = vmatpush1.msra.mxu0 %v2028
    %3446 = vmatprep.subr.mxu0 %v2025
    %3447 = vmatpush1.msra.mxu0 %v2024
    %3448 = vmatprep.subr.mxu0 %v2021
    %3449 = vmatpush1.msra.mxu0 %v2020
    %3450 = vmatprep.subr.mxu0 %v2017
    %3451 = vmatpush1.msra.mxu0 %v2016
    %3452 = vmatprep.subr.mxu0 %v2013
    %3453 = vmatpush1.msra.mxu0 %v2012
    %3454 = vmatprep.subr.mxu0 %v2009
    %3455 = vmatpush1.msra.mxu0 %v2008
    %3456 = vmatprep.subr.mxu0 0.0
    %3457 = vmatpush2.msra.mxu0 0.0
    %3458 = vmatprep.subr.mxu0 0.0
    %3459 = vmatpush2.msra.mxu0 0.0
    %3460 = vmatprep.subr.mxu0 0.0
    %3461 = vmatpush2.msra.mxu0 0.0
    %3462 = vmatprep.subr.mxu0 0.0
    %3463 = vmatpush2.msra.mxu0 0.0
    %3464 = vmatprep.subr.mxu0 0.0
    %3465 = vmatpush2.msra.mxu0 0.0
    %3466 = vmatprep.subr.mxu0 0.0
    %3467 = vmatpush2.msra.mxu0 0.0
    %3468 = vmatprep.subr.mxu0 0.0
    %3469 = vmatpush2.msra.mxu0 0.0
    %3470 = vmatprep.subr.mxu0 0.0
    %3471 = vmatpush2.msra.mxu0 0.0
    %3472 = vmatprep.subr.mxu0 0.0
    %3473 = vmatpush2.msra.mxu0 0.0
    %3474 = vmatprep.subr.mxu0 0.0
    %3475 = vmatpush2.msra.mxu0 0.0
    %3476 = vmatprep.subr.mxu0 0.0
    %3477 = vmatpush2.msra.mxu0 0.0
    %3478 = vmatprep.subr.mxu0 0.0
    %3479 = vmatpush2.msra.mxu0 0.0
    %3480 = vmatprep.subr.mxu0 0.0
    %3481 = vmatpush2.msra.mxu0 0.0
    %3482 = vmatprep.subr.mxu0 0.0
    %3483 = vmatpush2.msra.mxu0 0.0
    %3484 = vmatprep.subr.mxu0 0.0
    %3485 = vmatpush2.msra.mxu0 0.0
    %3486 = vmatprep.subr.mxu0 0.0
    %3487 = vmatpush2.msra.mxu0 0.0
    %3488 = vmatprep.mubr.f32.mxu0 0.0
    %3489 = vmatmul.mubr.f32.gmra.mxu0 %v3351
    %v3490 = vpop.f32.mrf.mxu0
    %v3491 = vadd.f32 0.0, %v3490
    %v3492 = vpop.f32.mrf.mxu0
    %v3493 = vadd.f32 0.0, %v3492
    %3494 = vdwg.mxu0
    %v3499 = vrot.slane %v3420, 4
    %v3500 = vrot.slane %v3422, 4
    %v3501 = vrot.slane %v3491, 4
    %v3502 = vrot.slane %v3493, 4
    %v3507 = vadd.f32 %v3346, %v3499
    %v3508 = vadd.f32 %v3347, %v3500
    %v3509 = vadd.f32 %v3348, %v3501
    %v3510 = vadd.f32 %v3349, %v3502
    %v3511 = vmul.f32 %v3507, 0.5
    %v3512 = vtanh.pop %v3511
    %v3513 = vmul.f32 %v3512, 0.5
    %v3514 = vadd.f32 %v3513, 0.5
    %v3515 = vmul.f32 %v3508, 0.5
    %v3516 = vtanh.pop %v3515
    %v3517 = vmul.f32 %v3516, 0.5
    %v3518 = vadd.f32 %v3517, 0.5
    %v3519 = vtanh.pop %v3509
    %v3520 = vmul.f32 %v3510, 0.5
    %v3521 = vtanh.pop %v3520
    %v3522 = vmul.f32 %v3521, 0.5
    %v3523 = vadd.f32 %v3522, 0.5
    %v3525 = vrot.slane %v3342, 6
    %v3527 = vmul.f32 %v3518, %v3525
    %v3528 = vmul.f32 %v3514, %v3519
    %v3529 = vadd.f32 %v3527, %v3528
    %v3530 = vtanh.pop %v3529
    %v3531 = vmul.f32 %v3523, %v3530
    %3532 = vst [vmem:[#allocation3 + $0x8] sm:$0x30] %v3531
    %v3533 = vld [vmem:[#allocation2 + $0x20] sm:$0xc0]
    %v3534 = vld [vmem:[#allocation2 + $0x28] sm:$0xc0]
    %v3535 = vld [vmem:[#allocation2 + $0x30] sm:$0xc0]
    %v3536 = vld [vmem:[#allocation2 + $0x38] sm:$0xc0]
    %v3538 = vrot.slane %v3531, 4
    %3540 = vmatprep.subr.mxu0 %v2067
    %3541 = vmatpush1.msra.mxu0 %v2066
    %3542 = vmatprep.subr.mxu0 %v2063
    %3543 = vmatpush1.msra.mxu0 %v2062
    %3544 = vmatprep.subr.mxu0 %v2059
    %3545 = vmatpush1.msra.mxu0 %v2058
    %3546 = vmatprep.subr.mxu0 %v2055
    %3547 = vmatpush1.msra.mxu0 %v2054
    %3548 = vmatprep.subr.mxu0 %v2051
    %3549 = vmatpush1.msra.mxu0 %v2050
    %3550 = vmatprep.subr.mxu0 %v2047
    %3551 = vmatpush1.msra.mxu0 %v2046
    %3552 = vmatprep.subr.mxu0 %v2043
    %3553 = vmatpush1.msra.mxu0 %v2042
    %3554 = vmatprep.subr.mxu0 %v2039
    %3555 = vmatpush1.msra.mxu0 %v2038
    %3556 = vmatprep.subr.mxu0 %v2035
    %3557 = vmatpush1.msra.mxu0 %v2034
    %3558 = vmatprep.subr.mxu0 %v2031
    %3559 = vmatpush1.msra.mxu0 %v2030
    %3560 = vmatprep.subr.mxu0 %v2027
    %3561 = vmatpush1.msra.mxu0 %v2026
    %3562 = vmatprep.subr.mxu0 %v2023
    %3563 = vmatpush1.msra.mxu0 %v2022
    %3564 = vmatprep.subr.mxu0 %v2019
    %3565 = vmatpush1.msra.mxu0 %v2018
    %3566 = vmatprep.subr.mxu0 %v2015
    %3567 = vmatpush1.msra.mxu0 %v2014
    %3568 = vmatprep.subr.mxu0 %v2011
    %3569 = vmatpush1.msra.mxu0 %v2010
    %3570 = vmatprep.subr.mxu0 %v2007
    %3571 = vmatpush1.msra.mxu0 %v2006
    %3572 = vmatprep.subr.mxu0 0.0
    %3573 = vmatpush2.msra.mxu0 0.0
    %3574 = vmatprep.subr.mxu0 0.0
    %3575 = vmatpush2.msra.mxu0 0.0
    %3576 = vmatprep.subr.mxu0 0.0
    %3577 = vmatpush2.msra.mxu0 0.0
    %3578 = vmatprep.subr.mxu0 0.0
    %3579 = vmatpush2.msra.mxu0 0.0
    %3580 = vmatprep.subr.mxu0 0.0
    %3581 = vmatpush2.msra.mxu0 0.0
    %3582 = vmatprep.subr.mxu0 0.0
    %3583 = vmatpush2.msra.mxu0 0.0
    %3584 = vmatprep.subr.mxu0 0.0
    %3585 = vmatpush2.msra.mxu0 0.0
    %3586 = vmatprep.subr.mxu0 0.0
    %3587 = vmatpush2.msra.mxu0 0.0
    %3588 = vmatprep.subr.mxu0 0.0
    %3589 = vmatpush2.msra.mxu0 0.0
    %3590 = vmatprep.subr.mxu0 0.0
    %3591 = vmatpush2.msra.mxu0 0.0
    %3592 = vmatprep.subr.mxu0 0.0
    %3593 = vmatpush2.msra.mxu0 0.0
    %3594 = vmatprep.subr.mxu0 0.0
    %3595 = vmatpush2.msra.mxu0 0.0
    %3596 = vmatprep.subr.mxu0 0.0
    %3597 = vmatpush2.msra.mxu0 0.0
    %3598 = vmatprep.subr.mxu0 0.0
    %3599 = vmatpush2.msra.mxu0 0.0
    %3600 = vmatprep.subr.mxu0 0.0
    %3601 = vmatpush2.msra.mxu0 0.0
    %3602 = vmatprep.subr.mxu0 0.0
    %3603 = vmatpush2.msra.mxu0 0.0
    %3604 = vmatprep.mubr.f32.mxu0 0.0
    %3605 = vmatmul.mubr.f32.gmra.mxu0 %v3538
    %v3606 = vpop.f32.mrf.mxu0
    %v3607 = vadd.f32 0.0, %v3606
    %v3608 = vpop.f32.mrf.mxu0
    %v3609 = vadd.f32 0.0, %v3608
    %3610 = vdwg.mxu0
    %3611 = vmatprep.subr.mxu0 %v2069
    %3612 = vmatpush1.msra.mxu0 %v2068
    %3613 = vmatprep.subr.mxu0 %v2065
    %3614 = vmatpush1.msra.mxu0 %v2064
    %3615 = vmatprep.subr.mxu0 %v2061
    %3616 = vmatpush1.msra.mxu0 %v2060
    %3617 = vmatprep.subr.mxu0 %v2057
    %3618 = vmatpush1.msra.mxu0 %v2056
    %3619 = vmatprep.subr.mxu0 %v2053
    %3620 = vmatpush1.msra.mxu0 %v2052
    %3621 = vmatprep.subr.mxu0 %v2049
    %3622 = vmatpush1.msra.mxu0 %v2048
    %3623 = vmatprep.subr.mxu0 %v2045
    %3624 = vmatpush1.msra.mxu0 %v2044
    %3625 = vmatprep.subr.mxu0 %v2041
    %3626 = vmatpush1.msra.mxu0 %v2040
    %3627 = vmatprep.subr.mxu0 %v2037
    %3628 = vmatpush1.msra.mxu0 %v2036
    %3629 = vmatprep.subr.mxu0 %v2033
    %3630 = vmatpush1.msra.mxu0 %v2032
    %3631 = vmatprep.subr.mxu0 %v2029
    %3632 = vmatpush1.msra.mxu0 %v2028
    %3633 = vmatprep.subr.mxu0 %v2025
    %3634 = vmatpush1.msra.mxu0 %v2024
    %3635 = vmatprep.subr.mxu0 %v2021
    %3636 = vmatpush1.msra.mxu0 %v2020
    %3637 = vmatprep.subr.mxu0 %v2017
    %3638 = vmatpush1.msra.mxu0 %v2016
    %3639 = vmatprep.subr.mxu0 %v2013
    %3640 = vmatpush1.msra.mxu0 %v2012
    %3641 = vmatprep.subr.mxu0 %v2009
    %3642 = vmatpush1.msra.mxu0 %v2008
    %3643 = vmatprep.subr.mxu0 0.0
    %3644 = vmatpush2.msra.mxu0 0.0
    %3645 = vmatprep.subr.mxu0 0.0
    %3646 = vmatpush2.msra.mxu0 0.0
    %3647 = vmatprep.subr.mxu0 0.0
    %3648 = vmatpush2.msra.mxu0 0.0
    %3649 = vmatprep.subr.mxu0 0.0
    %3650 = vmatpush2.msra.mxu0 0.0
    %3651 = vmatprep.subr.mxu0 0.0
    %3652 = vmatpush2.msra.mxu0 0.0
    %3653 = vmatprep.subr.mxu0 0.0
    %3654 = vmatpush2.msra.mxu0 0.0
    %3655 = vmatprep.subr.mxu0 0.0
    %3656 = vmatpush2.msra.mxu0 0.0
    %3657 = vmatprep.subr.mxu0 0.0
    %3658 = vmatpush2.msra.mxu0 0.0
    %3659 = vmatprep.subr.mxu0 0.0
    %3660 = vmatpush2.msra.mxu0 0.0
    %3661 = vmatprep.subr.mxu0 0.0
    %3662 = vmatpush2.msra.mxu0 0.0
    %3663 = vmatprep.subr.mxu0 0.0
    %3664 = vmatpush2.msra.mxu0 0.0
    %3665 = vmatprep.subr.mxu0 0.0
    %3666 = vmatpush2.msra.mxu0 0.0
    %3667 = vmatprep.subr.mxu0 0.0
    %3668 = vmatpush2.msra.mxu0 0.0
    %3669 = vmatprep.subr.mxu0 0.0
    %3670 = vmatpush2.msra.mxu0 0.0
    %3671 = vmatprep.subr.mxu0 0.0
    %3672 = vmatpush2.msra.mxu0 0.0
    %3673 = vmatprep.subr.mxu0 0.0
    %3674 = vmatpush2.msra.mxu0 0.0
    %3675 = vmatprep.mubr.f32.mxu0 0.0
    %3676 = vmatmul.mubr.f32.gmra.mxu0 %v3538
    %v3677 = vpop.f32.mrf.mxu0
    %v3678 = vadd.f32 0.0, %v3677
    %v3679 = vpop.f32.mrf.mxu0
    %v3680 = vadd.f32 0.0, %v3679
    %3681 = vdwg.mxu0
    %v3686 = vrot.slane %v3607, 2
    %v3687 = vrot.slane %v3609, 2
    %v3688 = vrot.slane %v3678, 2
    %v3689 = vrot.slane %v3680, 2
    %v3694 = vadd.f32 %v3533, %v3686
    %v3695 = vadd.f32 %v3534, %v3687
    %v3696 = vadd.f32 %v3535, %v3688
    %v3697 = vadd.f32 %v3536, %v3689
    %v3698 = vmul.f32 %v3694, 0.5
    %v3699 = vtanh.pop %v3698
    %v3700 = vmul.f32 %v3699, 0.5
    %v3701 = vadd.f32 %v3700, 0.5
    %v3702 = vmul.f32 %v3695, 0.5
    %v3703 = vtanh.pop %v3702
    %v3704 = vmul.f32 %v3703, 0.5
    %v3705 = vadd.f32 %v3704, 0.5
    %v3706 = vtanh.pop %v3696
    %v3707 = vmul.f32 %v3697, 0.5
    %v3708 = vtanh.pop %v3707
    %v3709 = vmul.f32 %v3708, 0.5
    %v3710 = vadd.f32 %v3709, 0.5
    %v3712 = vrot.slane %v3529, 6
    %v3714 = vmul.f32 %v3705, %v3712
    %v3715 = vmul.f32 %v3701, %v3706
    %v3716 = vadd.f32 %v3714, %v3715
    %v3717 = vtanh.pop %v3716
    %v3718 = vmul.f32 %v3710, %v3717
    %3719 = vst [vmem:[#allocation3 + $0x8] sm:$0xc0] %v3718
    %3720 = vst [vmem:[%s2256 - $0x6] sm:$0xc0] %v3718
    %3721 = vst [vmem:[%s2258 - $0x6] sm:$0xc0] %v3716
    %v3722 = vld [vmem:[#allocation3] sm:$0xff]
    %v3723 = vld [vmem:[#allocation3 + $0x8] sm:$0xff]
    %v3724 = vld [vmem:[#allocation16] sm:$0xff]
    %v3725 = vld [vmem:[#allocation16 + $0x8] sm:$0xff]
    %v3726 = vld [vmem:[#allocation16 + $0x10] sm:$0xff]
    %v3727 = vld [vmem:[#allocation16 + $0x18] sm:$0xff]
    %v3728 = vld [vmem:[#allocation16 + $0x20] sm:$0xff]
    %v3729 = vld [vmem:[#allocation16 + $0x28] sm:$0xff]
    %v3730 = vld [vmem:[#allocation16 + $0x30] sm:$0xff]
    %v3731 = vld [vmem:[#allocation16 + $0x38] sm:$0xff]
    %v3732 = vld [vmem:[#allocation16 + $0x40] sm:$0xff]
    %v3733 = vld [vmem:[#allocation16 + $0x48] sm:$0xff]
    %v3734 = vld [vmem:[#allocation16 + $0x50] sm:$0xff]
    %v3735 = vld [vmem:[#allocation16 + $0x58] sm:$0xff]
    %v3736 = vld [vmem:[#allocation16 + $0x60] sm:$0xff]
    %v3737 = vld [vmem:[#allocation16 + $0x68] sm:$0xff]
    %v3738 = vld [vmem:[#allocation16 + $0x70] sm:$0xff]
    %v3739 = vld [vmem:[#allocation16 + $0x78] sm:$0xff]
    %v3740 = vld [vmem:[%s10] sm:$0x1]
    %v3742 = vlaneseq
    %v3743 = vshrl.u32 %v3742, 7
    %v3744 = vsub.s32 0, %v3743
    %v3745 = vrot.slane %v3740, %v3744
    %3747 = vmatprep.subr.mxu0 0.0
    %3748 = vmatpush1.msra.mxu0 %v3739
    %3749 = vmatprep.subr.mxu0 0.0
    %3750 = vmatpush1.msra.mxu0 %v3738
    %3751 = vmatprep.subr.mxu0 0.0
    %3752 = vmatpush1.msra.mxu0 %v3737
    %3753 = vmatprep.subr.mxu0 0.0
    %3754 = vmatpush1.msra.mxu0 %v3736
    %3755 = vmatprep.subr.mxu0 0.0
    %3756 = vmatpush1.msra.mxu0 %v3735
    %3757 = vmatprep.subr.mxu0 0.0
    %3758 = vmatpush1.msra.mxu0 %v3734
    %3759 = vmatprep.subr.mxu0 0.0
    %3760 = vmatpush1.msra.mxu0 %v3733
    %3761 = vmatprep.subr.mxu0 0.0
    %3762 = vmatpush1.msra.mxu0 %v3732
    %3763 = vmatprep.subr.mxu0 0.0
    %3764 = vmatpush1.msra.mxu0 %v3731
    %3765 = vmatprep.subr.mxu0 0.0
    %3766 = vmatpush1.msra.mxu0 %v3730
    %3767 = vmatprep.subr.mxu0 0.0
    %3768 = vmatpush1.msra.mxu0 %v3729
    %3769 = vmatprep.subr.mxu0 0.0
    %3770 = vmatpush1.msra.mxu0 %v3728
    %3771 = vmatprep.subr.mxu0 0.0
    %3772 = vmatpush1.msra.mxu0 %v3727
    %3773 = vmatprep.subr.mxu0 0.0
    %3774 = vmatpush1.msra.mxu0 %v3726
    %3775 = vmatprep.subr.mxu0 0.0
    %3776 = vmatpush1.msra.mxu0 %v3725
    %3777 = vmatprep.subr.mxu0 0.0
    %3778 = vmatpush1.msra.mxu0 %v3724
    %3779 = vmatprep.subr.mxu0 0.0
    %3780 = vmatpush2.msra.mxu0 0.0
    %3781 = vmatprep.subr.mxu0 0.0
    %3782 = vmatpush2.msra.mxu0 0.0
    %3783 = vmatprep.subr.mxu0 0.0
    %3784 = vmatpush2.msra.mxu0 0.0
    %3785 = vmatprep.subr.mxu0 0.0
    %3786 = vmatpush2.msra.mxu0 0.0
    %3787 = vmatprep.subr.mxu0 0.0
    %3788 = vmatpush2.msra.mxu0 0.0
    %3789 = vmatprep.subr.mxu0 0.0
    %3790 = vmatpush2.msra.mxu0 0.0
    %3791 = vmatprep.subr.mxu0 0.0
    %3792 = vmatpush2.msra.mxu0 0.0
    %3793 = vmatprep.subr.mxu0 0.0
    %3794 = vmatpush2.msra.mxu0 0.0
    %3795 = vmatprep.subr.mxu0 0.0
    %3796 = vmatpush2.msra.mxu0 0.0
    %3797 = vmatprep.subr.mxu0 0.0
    %3798 = vmatpush2.msra.mxu0 0.0
    %3799 = vmatprep.subr.mxu0 0.0
    %3800 = vmatpush2.msra.mxu0 0.0
    %3801 = vmatprep.subr.mxu0 0.0
    %3802 = vmatpush2.msra.mxu0 0.0
    %3803 = vmatprep.subr.mxu0 0.0
    %3804 = vmatpush2.msra.mxu0 0.0
    %3805 = vmatprep.subr.mxu0 0.0
    %3806 = vmatpush2.msra.mxu0 0.0
    %3807 = vmatprep.subr.mxu0 0.0
    %3808 = vmatpush2.msra.mxu0 0.0
    %3809 = vmatprep.subr.mxu0 0.0
    %3810 = vmatpush2.msra.mxu0 0.0
    %3811 = vmatprep.mubr.f32.mxu0 0.0
    %3812 = vmatmul.mubr.f32.gmra.mxu0 %v3722
    %v3813 = vpop.f32.mrf.mxu0
    %v3814 = vadd.f32 %v3745, %v3813
    %v3815 = vpop.f32.mrf.mxu0
    %3816 = vmatprep.mubr.f32.mxu0 0.0
    %3817 = vmatmul.mubr.f32.gmra.mxu0 %v3723
    %v3818 = vpop.f32.mrf.mxu0
    %v3819 = vadd.f32 %v3745, %v3818
    %v3820 = vpop.f32.mrf.mxu0
    %3821 = vdwg.mxu0
    %3822 = vmax.xlane.f32.xlu0 %v3814
    %v3823 = vpop.xlane.xlu0 %3822
    %3824 = vmax.xlane.f32.xlu0 %v3819
    %v3825 = vpop.xlane.xlu0 %3824
    %v3826 = vsub.f32 %v3814, %v3823
    %v3827 = vsub.f32 %v3819, %v3825
    %v3828 = vmul.f32 %v3826, 1.442695
    %v3829 = vpow.pop %v3828
    %v3830 = vmul.f32 %v3827, 1.442695
    %v3831 = vpow.pop %v3830
    %3832 = vadd.xlane.f32.xlu0 %v3829
    %v3833 = vpop.xlane.xlu0 %3832
    %3834 = vadd.xlane.f32.xlu0 %v3831
    %v3835 = vpop.xlane.xlu0 %3834
    %v3836 = vlog2.pop %v3833
    %v3837 = vmul.f32 %v3836, 0.6931472
    %v3838 = vlog2.pop %v3835
    %v3839 = vmul.f32 %v3838, 0.6931472
    %v3840 = vadd.f32 %v3823, %v3837
    %v3841 = vadd.f32 %v3825, %v3839
    %v3842 = vsub.f32 %v3814, %v3840
    %v3843 = vsub.f32 %v3819, %v3841
    %3844 = vst [vmem:[#allocation18] sm:$0xff] %v3842
    %3845 = vst [vmem:[#allocation18 + $0x8] sm:$0xff] %v3843
    // Predicated region
    $region82: #{tpu_custom_call.1} parent=1 // pred_check
      _
    $region83: #{tpu_custom_call.1} parent=1 // pred_check_branch
      %3847 = sbr.rel (0) target = $region85
    $region84: #{tpu_custom_call.1} parent=1 // pred_region
      %s3849 = ssub.s32 256, 256
      %3850 = vsyncadd [#allocation6], %s3849
      %s3851 = sshll.u32 [#allocation18], 4
      %s3852 = int_to_ptr.vmem [resolvable:$true] %s3851
      %3857 = dma.vmem_to_hbm [thread:$0]  %s3852, 256, %s11, [#allocation6], 128, 128, 8
    $region85: #{tpu_custom_call.1} parent=1 // pred_fallthru
      _
    // Predicated region
    $region86: #{tpu_custom_call.1} parent=1 // pred_check
      _
    $region87: #{tpu_custom_call.1} parent=1 // pred_check_branch
      %3859 = sbr.rel (0) target = $region89
    $region88: #{tpu_custom_call.1} parent=1 // pred_region
      %s3861 = ssub.s32 64, 64
      %3862 = vsyncadd [#allocation20], %s3861
      %s3863 = sshll.u32 [#allocation19], 4
      %s3864 = int_to_ptr.vmem [resolvable:$true] %s3863
      %3869 = dma.vmem_to_hbm [thread:$0]  %s3864, 64, %s12, [#allocation20], 32, 32, 2
    $region89: #{tpu_custom_call.1} parent=1 // pred_fallthru
      _
    // Predicated region
    $region90: #{tpu_custom_call.1} parent=1 // pred_check
      _
    $region91: #{tpu_custom_call.1} parent=1 // pred_check_branch
      %3871 = sbr.rel (0) target = $region93
    $region92: #{tpu_custom_call.1} parent=1 // pred_region
      %s3873 = ssub.s32 64, 64
      %3874 = vsyncadd [#allocation20], %s3873
      %s3875 = sshll.u32 [#allocation21], 4
      %s3876 = int_to_ptr.vmem [resolvable:$true] %s3875
      %3881 = dma.vmem_to_hbm [thread:$0]  %s3876, 64, %s13, [#allocation20], 32, 32, 2
    $region93: #{tpu_custom_call.1} parent=1 // pred_fallthru
      _
    // Predicated region
    $region94: #{tpu_custom_call.1} parent=1 // pred_check
      _
    $region95: #{tpu_custom_call.1} parent=1 // pred_check_branch
      %3883 = sbr.rel (0) target = $region97
    $region96: #{tpu_custom_call.1} parent=1 // pred_region
      %3884 = dma.done [#allocation6], 256
    $region97: #{tpu_custom_call.1} parent=1 // pred_fallthru
      _
    // Predicated region
    $region98: #{tpu_custom_call.1} parent=1 // pred_check
      _
    $region99: #{tpu_custom_call.1} parent=1 // pred_check_branch
      %3886 = sbr.rel (0) target = $region101
    $region100: #{tpu_custom_call.1} parent=1 // pred_region
      %3887 = dma.done [#allocation20], 64
    $region101: #{tpu_custom_call.1} parent=1 // pred_fallthru
      _
    // Predicated region
    $region102: #{tpu_custom_call.1} parent=1 // pred_check
      _
    $region103: #{tpu_custom_call.1} parent=1 // pred_check_branch
      %3889 = sbr.rel (0) target = $region105
    $region104: #{tpu_custom_call.1} parent=1 // pred_region
      %3890 = dma.done [#allocation20], 64
    $region105: #{tpu_custom_call.1} parent=1 // pred_fallthru
      _
    %3891 = vsyncpa [#allocation5], 1
    %3892 = vsyncpa [#allocation8], 1
    %3893 = vsyncpa [#allocation11], 1
    %3894 = vsyncpa [#allocation14], 1
    %3895 = vsyncpa [#allocation17], 1
    %3896 = vsyncpa [#allocation6], 1
    %3897 = vsyncpa [#allocation20], 1

</llo_original>
